<compile_context>
chip_gen: v7x
topology: tpu7x:2x2x1
jax: 0.10.0
libtpu: 0.0.40
codegen_flags: <defaults>
</compile_context>

<pallas_src>
import functools
from typing import NamedTuple

import numpy as np

import jax
import jax.numpy as jnp
from jax.experimental import pallas as pl
from jax.experimental.pallas import tpu as pltpu


def _ru(x, m):
    return -(-x // m) * m


# ----------------------------------------------------------------------------
# Static network configuration
# ----------------------------------------------------------------------------
class NetConfig(NamedTuple):
    H: int
    W: int
    C: int
    K: int
    S: int
    F0: int
    F1: int
    OH0: int
    OW0: int
    OH1: int
    OW1: int
    hidden: int
    A: int
    IN: int   # H*W*C                       (conv0 matmul contraction dim)
    N0: int   # OH0*OW0*F0 rounded to 128   (conv0 N  / conv1 K)
    N1: int   # OH1*OW1*F1 rounded to 128   (conv1 N  / fc0  K)
    HP: int   # hidden rounded to 128       (fc0  N  / fc1  K)
    AP: int   # n_actions rounded to 128    (fc1  N, sliced back to A outside)


def make_config(img_shape, n_actions, n_filters=(16, 16), kernel_size=4,
                stride=2, hidden=256):
    assert len(n_filters) == 2, "kernel specialised to the 2-conv default"
    H, W, C = img_shape
    K, S = kernel_size, stride
    F0, F1 = n_filters
    OH0 = (H - K) // S + 1
    OW0 = (W - K) // S + 1
    OH1 = (OH0 - K) // S + 1
    OW1 = (OW0 - K) // S + 1
    assert OH1 >= 1 and OW1 >= 1, "image too small for two valid convs"
    return NetConfig(H=H, W=W, C=C, K=K, S=S, F0=F0, F1=F1,
                     OH0=OH0, OW0=OW0, OH1=OH1, OW1=OW1,
                     hidden=hidden, A=n_actions,
                     IN=H * W * C,
                     N0=_ru(OH0 * OW0 * F0, 128),
                     N1=_ru(OH1 * OW1 * F1, 128),
                     HP=_ru(hidden, 128),
                     AP=_ru(n_actions, 128))


# ----------------------------------------------------------------------------
# Fused forward kernel: 4 lane-dense MXU matmuls (+ f32 tanh on the EUP)
# ----------------------------------------------------------------------------
def _fused_forward_kernel(x_ref, w0_ref, b0_ref, w1_ref, b1_ref,
                          w2_ref, b2_ref, w3_ref, b3_ref, o_ref):
    """conv0+tanh -> conv1+tanh -> fc0+tanh -> fc1, all as MXU matmuls."""
    cdt = w0_ref.dtype                        # bf16 operands (f32 also works)
    f32 = jnp.float32

    x = x_ref[...].astype(cdt)                                      # (tb, IN)
    # conv0 (densified): (tb, IN) @ (IN, N0), f32 accumulate
    h = jnp.tanh(jnp.dot(x, w0_ref[...],
                         preferred_element_type=f32) + b0_ref[...])  # (tb, N0)
    # conv1 (densified, columns already in torch NCHW-flatten order)
    h = jnp.tanh(jnp.dot(h.astype(cdt), w1_ref[...],
                         preferred_element_type=f32) + b1_ref[...])  # (tb, N1)
    # fc0: one single K=N1 dot (no per-position splitting)
    h = jnp.tanh(jnp.dot(h.astype(cdt), w2_ref[...],
                         preferred_element_type=f32) + b2_ref[...])  # (tb, HP)
    # fc1: N padded to 128 lanes -> unmasked stores; sliced to A outside
    out = jnp.dot(h.astype(cdt), w3_ref[...],
                  preferred_element_type=f32) + b3_ref[...]          # (tb, AP)
    o_ref[...] = out.astype(o_ref.dtype)


# ----------------------------------------------------------------------------
# Batch tiling policy (review items 1 & 2)
# ----------------------------------------------------------------------------
def _choose_batch_tile(B):
    """Pick (tb, Bp): batch tile (multiple of 8, <=256) and padded batch.

    Targets: large tiles (amortize ~0.35us/grid-step, fill the MXU M dim),
    <=25% padding waste, and >=2 grid steps whenever the batch allows it so
    the "parallel" batch axis can shard across v7x's two TensorCores.
    """
    B = max(int(B), 1)
    Bp8 = _ru(B, 8)
    if Bp8 < 16:                       # too small to split
        return Bp8, Bp8
    for tb in (256, 128, 64, 32, 16, 8):
        if tb * 2 > Bp8:               # would leave a single grid step
            continue
        Bp = _ru(B, tb)
        if (Bp - B) / Bp <= 0.25:      # cap padding waste
            return tb, Bp
    return Bp8, Bp8


# ----------------------------------------------------------------------------
# Wrapper
# ----------------------------------------------------------------------------
def convolutional_nn_forward(kparams, x, *, cfg: NetConfig):
    """x: (B, d0, d1, C) or (d0, d1, C), channels-last as the module expects."""
    squeeze = (x.ndim == 3)
    if squeeze:
        x = x[None]
    B = x.shape[0]

    # Only host-side prep: free flatten + batch pad (stays under caller's jit).
    xf = x.reshape(B, cfg.IN).astype(jnp.float32)
    tb, Bp = _choose_batch_tile(B)
    if Bp != B:
        xf = jnp.pad(xf, ((0, Bp - B), (0, 0)))

    const2 = lambda i: (0, 0)          # weights: resident in VMEM across steps
    out = pl.pallas_call(
        _fused_forward_kernel,
        out_shape=jax.ShapeDtypeStruct((Bp, cfg.AP), jnp.float32),
        grid=(Bp // tb,),
        in_specs=[
            # activations: tiled over batch (pipelined / double-buffered)
            pl.BlockSpec((tb, cfg.IN), lambda i: (i, 0)),
            # weights & biases: constant block index -> fetched once
            pl.BlockSpec(kparams["w0"].shape, const2),
            pl.BlockSpec(kparams["b0"].shape, const2),
            pl.BlockSpec(kparams["w1"].shape, const2),
            pl.BlockSpec(kparams["b1"].shape, const2),
            pl.BlockSpec(kparams["w2"].shape, const2),
            pl.BlockSpec(kparams["b2"].shape, const2),
            pl.BlockSpec(kparams["w3"].shape, const2),
            pl.BlockSpec(kparams["b3"].shape, const2),
        ],
        out_specs=pl.BlockSpec((tb, cfg.AP), lambda i: (i, 0)),
        compiler_params=pltpu.CompilerParams(
            dimension_semantics=("parallel",),     # shard batch across v7x TCs
            vmem_limit_bytes=32 * 1024 * 1024,     # safe on v5e/v6e/v7x
        ),
    )(xf, kparams["w0"], kparams["b0"], kparams["w1"], kparams["b1"],
      kparams["w2"], kparams["b2"], kparams["w3"], kparams["b3"])

    out = out[:B, :cfg.A]
    if squeeze:
        out = out[0]
    return out


# ----------------------------------------------------------------------------
# Parameters: PyTorch layout -> kernel layout (one-time, on host)
# ----------------------------------------------------------------------------
def init_torch_params(key, cfg: NetConfig):
    ks = jax.random.split(key, 8)

    def u(k, shape, fan_in):
        s = 1.0 / float(fan_in) ** 0.5
        return jax.random.uniform(k, shape, jnp.float32, -s, s)

    flat = cfg.F1 * cfg.OH1 * cfg.OW1
    p = {}
    p["conv0_w"] = u(ks[0], (cfg.F0, cfg.C, cfg.K, cfg.K), cfg.C * cfg.K * cfg.K)
    p["conv0_b"] = u(ks[1], (cfg.F0,), cfg.C * cfg.K * cfg.K)
    p["conv1_w"] = u(ks[2], (cfg.F1, cfg.F0, cfg.K, cfg.K), cfg.F0 * cfg.K * cfg.K)
    p["conv1_b"] = u(ks[3], (cfg.F1,), cfg.F0 * cfg.K * cfg.K)
    p["fc0_w"] = u(ks[4], (cfg.hidden, flat), flat)
    p["fc0_b"] = u(ks[5], (cfg.hidden,), flat)
    p["fc1_w"] = u(ks[6], (cfg.A, cfg.hidden), cfg.hidden)
    p["fc1_b"] = u(ks[7], (cfg.A,), cfg.hidden)
    return p


def prepare_params(tp, cfg: NetConfig, compute_dtype=jnp.bfloat16):
    """Torch-layout params -> kernel-layout dense matmul matrices.

    conv0/conv1 are folded into block-sparse dense matrices (the im2col lives
    in the weight, not the activation) so the kernel's convs are plain
    lane-dense MXU matmuls.  The torch NCHW flatten order that feeds fc0 is
    baked into the conv1 matrix columns, and every lane dim (N0, N1, hidden,
    n_actions) is zero-padded up to a multiple of 128.
    """
    K, S, C, W = cfg.K, cfg.S, cfg.C, cfg.W
    F0, F1 = cfg.F0, cfg.F1
    OH0, OW0, OH1, OW1 = cfg.OH0, cfg.OW0, cfg.OH1, cfg.OW1

    w0 = np.asarray(tp["conv0_w"], np.float32)          # (F0, C, K, K)
    w1 = np.asarray(tp["conv1_w"], np.float32)          # (F1, F0, K, K)

    # conv0 dense: rows = (ih*W + iw)*C + c ; cols = (oh*OW0 + ow)*F0 + f
    W0d = np.zeros((cfg.IN, cfg.N0), np.float32)
    for oh in range(OH0):
        for ow in range(OW0):
            col0 = (oh * OW0 + ow) * F0
            for kh in range(K):
                for kw in range(K):
                    row0 = ((S * oh + kh) * W + (S * ow + kw)) * C
                    W0d[row0:row0 + C, col0:col0 + F0] = w0[:, :, kh, kw].T
    b0d = np.zeros((1, cfg.N0), np.float32)
    b0d[0, :OH0 * OW0 * F0] = np.tile(np.asarray(tp["conv0_b"], np.float32),
                                      OH0 * OW0)

    # conv1 dense: rows = conv0 column order; cols = torch NCHW-flatten order
    # g*OH1*OW1 + a*OW1 + d  (so fc0_w needs no runtime permutation).
    W1d = np.zeros((cfg.N0, cfg.N1), np.float32)
    for a in range(OH1):
        for d in range(OW1):
            cols = a * OW1 + d + np.arange(F1) * (OH1 * OW1)
            for kh in range(K):
                for kw in range(K):
                    row0 = ((S * a + kh) * OW0 + (S * d + kw)) * F0
                    W1d[row0:row0 + F0, cols] = w1[:, :, kh, kw].T
    b1d = np.zeros((1, cfg.N1), np.float32)
    b1d[0, :F1 * OH1 * OW1] = np.repeat(np.asarray(tp["conv1_b"], np.float32),
                                        OH1 * OW1)

    flat = F1 * OH1 * OW1
    W2 = np.zeros((cfg.N1, cfg.HP), np.float32)
    W2[:flat, :cfg.hidden] = np.asarray(tp["fc0_w"], np.float32).T
    b2 = np.zeros((1, cfg.HP), np.float32)
    b2[0, :cfg.hidden] = np.asarray(tp["fc0_b"], np.float32)

    W3 = np.zeros((cfg.HP, cfg.AP), np.float32)
    W3[:cfg.hidden, :cfg.A] = np.asarray(tp["fc1_w"], np.float32).T
    b3 = np.zeros((1, cfg.AP), np.float32)
    b3[0, :cfg.A] = np.asarray(tp["fc1_b"], np.float32)

    return {
        "w0": jnp.asarray(W0d, compute_dtype), "b0": jnp.asarray(b0d),
        "w1": jnp.asarray(W1d, compute_dtype), "b1": jnp.asarray(b1d),
        "w2": jnp.asarray(W2, compute_dtype),  "b2": jnp.asarray(b2),
        "w3": jnp.asarray(W3, compute_dtype),  "b3": jnp.asarray(b3),
    }


# ----------------------------------------------------------------------------
# Pure-JAX reference (mirrors the PyTorch module exactly, for validation)
# ----------------------------------------------------------------------------
def reference_forward(tparams, x, *, cfg: NetConfig):
    if x.ndim == 3:
        return reference_forward(tparams, x[None], cfg=cfg)[0]
    hi = jax.lax.Precision.HIGHEST
    y = jnp.transpose(x, (0, 3, 1, 2))            # 'b w h c -> b c w h'
    for li in range(2):
        w = tparams[f"conv{li}_w"]
        b = tparams[f"conv{li}_b"]
        y = jax.lax.conv_general_dilated(
            y, w, window_strides=(cfg.S, cfg.S), padding="VALID",
            dimension_numbers=("NCHW", "OIHW", "NCHW"), precision=hi)
        y = jnp.tanh(y + b[None, :, None, None])
    y = y.reshape(y.shape[0], -1)                 # nn.Flatten on NCHW
    y = jnp.tanh(jnp.dot(y, tparams["fc0_w"].T, precision=hi) + tparams["fc0_b"])
    y = jnp.dot(y, tparams["fc1_w"].T, precision=hi) + tparams["fc1_b"]
    return y


# ----------------------------------------------------------------------------
if __name__ == "__main__":
    key = jax.random.PRNGKey(0)
    k_par, k_x, k_xb, k_p2, k_x2 = jax.random.split(key, 5)

    # bf16 MXU operands w/ f32 accumulation vs an f32 HIGHEST-precision
    # reference; observed error is typically <1e-2.  (Use
    # prepare_params(..., compute_dtype=jnp.float32) for ~1e-3 parity.)
    TOL = 3e-2

    # ---------------- default module config: (16,16,4), 4 actions ----------
    img_shape = (16, 16, 4)
    n_actions = 4
    cfg = make_config(img_shape, n_actions)

    tparams = init_torch_params(k_par, cfg)      # PyTorch-layout parameters
    kparams = prepare_params(tparams, cfg)       # kernel layout (one-time)

    fwd = jax.jit(functools.partial(convolutional_nn_forward, cfg=cfg))
    ref = jax.jit(functools.partial(reference_forward, cfg=cfg))

    # small batch
    x = jax.random.uniform(k_x, (2,) + img_shape, dtype=jnp.float32)
    out = jax.block_until_ready(fwd(kparams, x))
    assert out.shape == (2, n_actions), out.shape
    r = jax.block_until_ready(ref(tparams, x))
    assert float(jnp.max(jnp.abs(out - r))) < TOL

    # larger batch: exercises the tiled, pipelined, megacore-parallel grid
    xb = jax.random.uniform(k_xb, (64,) + img_shape, dtype=jnp.float32)
    outb = jax.block_until_ready(fwd(kparams, xb))
    assert outb.shape == (64, n_actions), outb.shape
    rb = jax.block_until_ready(ref(tparams, xb))
    assert float(jnp.max(jnp.abs(outb - rb))) < TOL

    # 3-D (single image) path of forward()
    out1 = jax.block_until_ready(fwd(kparams, x[0]))
    assert out1.shape == (n_actions,), out1.shape

    # ---------------- non-square image (review correctness concern) --------
    img2 = (20, 12, 3)
    cfg2 = make_config(img2, 6)
    tp2 = init_torch_params(k_p2, cfg2)
    kp2 = prepare_params(tp2, cfg2)
    fwd2 = jax.jit(functools.partial(convolutional_nn_forward, cfg=cfg2))
    x2 = jax.random.uniform(k_x2, (5,) + img2, dtype=jnp.float32)
    o2 = jax.block_until_ready(fwd2(kp2, x2))
    assert o2.shape == (5, 6), o2.shape
    r2 = jax.block_until_ready(reference_forward(tp2, x2, cfg=cfg2))
    assert float(jnp.max(jnp.abs(o2 - r2))) < TOL

    print("KERNEL_OK")
</pallas_src>

<mosaic_0001>
module attributes {stable_mosaic.version = 11 : i64} {
  func.func @_fused_forward_kernel(%arg0: i32, %arg1: memref<8x1024xf32, #tpu.memory_space<vmem>>, %arg2: memref<1024x896xbf16, #tpu.memory_space<vmem>>, %arg3: memref<1x896xf32, #tpu.memory_space<vmem>>, %arg4: memref<896x128xbf16, #tpu.memory_space<vmem>>, %arg5: memref<1x128xf32, #tpu.memory_space<vmem>>, %arg6: memref<128x256xbf16, #tpu.memory_space<vmem>>, %arg7: memref<1x256xf32, #tpu.memory_space<vmem>>, %arg8: memref<256x128xbf16, #tpu.memory_space<vmem>>, %arg9: memref<1x128xf32, #tpu.memory_space<vmem>>, %arg10: memref<8x128xf32, #tpu.memory_space<vmem>>) attributes {dimension_semantics = [#tpu.dimension_semantics<parallel>], iteration_bounds = array<i64: 1>, scalar_prefetch = 0 : i64, scratch_operands = 0 : i64, tpu.core_type = #tpu.core_type<tc>, window_params = [{transform_indices = @transform_0, window_bounds = array<i64: 8, 1024>}, {pipeline_mode = #tpu.pipeline_mode<synchronous>, transform_indices = @transform_1, window_bounds = array<i64: 1024, 896>}, {pipeline_mode = #tpu.pipeline_mode<synchronous>, transform_indices = @transform_2, window_bounds = array<i64: 1, 896>}, {pipeline_mode = #tpu.pipeline_mode<synchronous>, transform_indices = @transform_3, window_bounds = array<i64: 896, 128>}, {pipeline_mode = #tpu.pipeline_mode<synchronous>, transform_indices = @transform_4, window_bounds = array<i64: 1, 128>}, {pipeline_mode = #tpu.pipeline_mode<synchronous>, transform_indices = @transform_5, window_bounds = array<i64: 128, 256>}, {pipeline_mode = #tpu.pipeline_mode<synchronous>, transform_indices = @transform_6, window_bounds = array<i64: 1, 256>}, {pipeline_mode = #tpu.pipeline_mode<synchronous>, transform_indices = @transform_7, window_bounds = array<i64: 256, 128>}, {pipeline_mode = #tpu.pipeline_mode<synchronous>, transform_indices = @transform_8, window_bounds = array<i64: 1, 128>}, {transform_indices = @transform_9, window_bounds = array<i64: 8, 128>}]} {
    %c0 = arith.constant 0 : index
    %c0_0 = arith.constant 0 : index
    %0 = vector.load %arg1[%c0, %c0_0] : memref<8x1024xf32, #tpu.memory_space<vmem>>, vector<8x1024xf32>
    %1 = arith.truncf %0 : vector<8x1024xf32> to vector<8x1024xbf16>
    %c0_1 = arith.constant 0 : index
    %c0_2 = arith.constant 0 : index
    %2 = vector.load %arg2[%c0_1, %c0_2] : memref<1024x896xbf16, #tpu.memory_space<vmem>>, vector<1024x896xbf16>
    %cst = arith.constant dense<0.000000e+00> : vector<8x896xf32>
    %3 = tpu.matmul %1, %2, %cst {dimension_numbers = #tpu.dot_dimension_numbers<[1], [0], [0], [1], [0, 0, 1, 1], [], []>} : vector<8x1024xbf16>, vector<1024x896xbf16>, vector<8x896xf32> -> vector<8x896xf32>
    %c0_3 = arith.constant 0 : index
    %c0_4 = arith.constant 0 : index
    %4 = vector.load %arg3[%c0_3, %c0_4] : memref<1x896xf32, #tpu.memory_space<vmem>>, vector<1x896xf32>
    %5 = vector.broadcast %4 : vector<1x896xf32> to vector<8x896xf32>
    %6 = arith.addf %3, %5 : vector<8x896xf32>
    %7 = math.tanh %6 : vector<8x896xf32>
    %8 = arith.truncf %7 : vector<8x896xf32> to vector<8x896xbf16>
    %c0_5 = arith.constant 0 : index
    %c0_6 = arith.constant 0 : index
    %9 = vector.load %arg4[%c0_5, %c0_6] : memref<896x128xbf16, #tpu.memory_space<vmem>>, vector<896x128xbf16>
    %cst_7 = arith.constant dense<0.000000e+00> : vector<8x128xf32>
    %10 = tpu.matmul %8, %9, %cst_7 {dimension_numbers = #tpu.dot_dimension_numbers<[1], [0], [0], [1], [0, 0, 1, 1], [], []>} : vector<8x896xbf16>, vector<896x128xbf16>, vector<8x128xf32> -> vector<8x128xf32>
    %c0_8 = arith.constant 0 : index
    %c0_9 = arith.constant 0 : index
    %11 = vector.load %arg5[%c0_8, %c0_9] : memref<1x128xf32, #tpu.memory_space<vmem>>, vector<1x128xf32>
    %12 = vector.broadcast %11 : vector<1x128xf32> to vector<8x128xf32>
    %13 = arith.addf %10, %12 : vector<8x128xf32>
    %14 = math.tanh %13 : vector<8x128xf32>
    %15 = arith.truncf %14 : vector<8x128xf32> to vector<8x128xbf16>
    %c0_10 = arith.constant 0 : index
    %c0_11 = arith.constant 0 : index
    %16 = vector.load %arg6[%c0_10, %c0_11] : memref<128x256xbf16, #tpu.memory_space<vmem>>, vector<128x256xbf16>
    %cst_12 = arith.constant dense<0.000000e+00> : vector<8x256xf32>
    %17 = tpu.matmul %15, %16, %cst_12 {dimension_numbers = #tpu.dot_dimension_numbers<[1], [0], [0], [1], [0, 0, 1, 1], [], []>} : vector<8x128xbf16>, vector<128x256xbf16>, vector<8x256xf32> -> vector<8x256xf32>
    %c0_13 = arith.constant 0 : index
    %c0_14 = arith.constant 0 : index
    %18 = vector.load %arg7[%c0_13, %c0_14] : memref<1x256xf32, #tpu.memory_space<vmem>>, vector<1x256xf32>
    %19 = vector.broadcast %18 : vector<1x256xf32> to vector<8x256xf32>
    %20 = arith.addf %17, %19 : vector<8x256xf32>
    %21 = math.tanh %20 : vector<8x256xf32>
    %22 = arith.truncf %21 : vector<8x256xf32> to vector<8x256xbf16>
    %c0_15 = arith.constant 0 : index
    %c0_16 = arith.constant 0 : index
    %23 = vector.load %arg8[%c0_15, %c0_16] : memref<256x128xbf16, #tpu.memory_space<vmem>>, vector<256x128xbf16>
    %cst_17 = arith.constant dense<0.000000e+00> : vector<8x128xf32>
    %24 = tpu.matmul %22, %23, %cst_17 {dimension_numbers = #tpu.dot_dimension_numbers<[1], [0], [0], [1], [0, 0, 1, 1], [], []>} : vector<8x256xbf16>, vector<256x128xbf16>, vector<8x128xf32> -> vector<8x128xf32>
    %c0_18 = arith.constant 0 : index
    %c0_19 = arith.constant 0 : index
    %25 = vector.load %arg9[%c0_18, %c0_19] : memref<1x128xf32, #tpu.memory_space<vmem>>, vector<1x128xf32>
    %26 = vector.broadcast %25 : vector<1x128xf32> to vector<8x128xf32>
    %27 = arith.addf %24, %26 : vector<8x128xf32>
    %c0_20 = arith.constant 0 : index
    %c0_21 = arith.constant 0 : index
    %28 = vector.load %arg10[%c0_20, %c0_21] : memref<8x128xf32, #tpu.memory_space<vmem>>, vector<8x128xf32>
    tpu.vector_store %arg10[%c0_20, %c0_21], %27 {strides = array<i32>} : memref<8x128xf32, #tpu.memory_space<vmem>>, vector<8x128xf32>,
    return
  }
  func.func @transform_0(%arg0: i32) -> (i32, i32) {
    %c0_i32 = arith.constant 0 : i32
    %c0_i32_0 = arith.constant 0 : i32
    return %arg0, %c0_i32 : i32, i32
  }
  func.func @transform_1(%arg0: i32) -> (i32, i32) {
    %c0_i32 = arith.constant 0 : i32
    %c0_i32_0 = arith.constant 0 : i32
    %c0_i32_1 = arith.constant 0 : i32
    return %c0_i32, %c0_i32_0 : i32, i32
  }
  func.func @transform_2(%arg0: i32) -> (i32, i32) {
    %c0_i32 = arith.constant 0 : i32
    %c0_i32_0 = arith.constant 0 : i32
    %c0_i32_1 = arith.constant 0 : i32
    return %c0_i32, %c0_i32_0 : i32, i32
  }
  func.func @transform_3(%arg0: i32) -> (i32, i32) {
    %c0_i32 = arith.constant 0 : i32
    %c0_i32_0 = arith.constant 0 : i32
    %c0_i32_1 = arith.constant 0 : i32
    return %c0_i32, %c0_i32_0 : i32, i32
  }
  func.func @transform_4(%arg0: i32) -> (i32, i32) {
    %c0_i32 = arith.constant 0 : i32
    %c0_i32_0 = arith.constant 0 : i32
    %c0_i32_1 = arith.constant 0 : i32
    return %c0_i32, %c0_i32_0 : i32, i32
  }
  func.func @transform_5(%arg0: i32) -> (i32, i32) {
    %c0_i32 = arith.constant 0 : i32
    %c0_i32_0 = arith.constant 0 : i32
    %c0_i32_1 = arith.constant 0 : i32
    return %c0_i32, %c0_i32_0 : i32, i32
  }
  func.func @transform_6(%arg0: i32) -> (i32, i32) {
    %c0_i32 = arith.constant 0 : i32
    %c0_i32_0 = arith.constant 0 : i32
    %c0_i32_1 = arith.constant 0 : i32
    return %c0_i32, %c0_i32_0 : i32, i32
  }
  func.func @transform_7(%arg0: i32) -> (i32, i32) {
    %c0_i32 = arith.constant 0 : i32
    %c0_i32_0 = arith.constant 0 : i32
    %c0_i32_1 = arith.constant 0 : i32
    return %c0_i32, %c0_i32_0 : i32, i32
  }
  func.func @transform_8(%arg0: i32) -> (i32, i32) {
    %c0_i32 = arith.constant 0 : i32
    %c0_i32_0 = arith.constant 0 : i32
    %c0_i32_1 = arith.constant 0 : i32
    return %c0_i32, %c0_i32_0 : i32, i32
  }
  func.func @transform_9(%arg0: i32) -> (i32, i32) {
    %c0_i32 = arith.constant 0 : i32
    %c0_i32_0 = arith.constant 0 : i32
    return %arg0, %c0_i32 : i32, i32
  }
}

</mosaic_0001>

<llo_original>
// kernel: convolutional_nn_forward.1
$region0: #{convolutional_nn_forward.1}
  #allocation0 [shape = 'u32[]', space=smem, size = 0x4, offset = 0x4, fixed_abs, tag = 'smem constant byte address 0x4 - core index']
  #allocation1 [shape = 'u32[144,128]{1,0:T(1,128)}', space=vmem, size = 0x12000, scoped, tag = 'internal scratch']
  %s0 = inlined_call_operand.vmem [shape: f32[8,1024], index: 0, kind: input, shape index: {}]
  %s1 = inlined_call_operand.hbm [shape: bf16[1024,896], index: 1, kind: input, shape index: {}]
  %s2 = inlined_call_operand.hbm [shape: f32[1,896], index: 2, kind: input, shape index: {}]
  %s3 = inlined_call_operand.hbm [shape: bf16[896,128], index: 3, kind: input, shape index: {}]
  %s4 = inlined_call_operand.hbm [shape: f32[1,128], index: 4, kind: input, shape index: {}]
  %s5 = inlined_call_operand.hbm [shape: bf16[128,256], index: 5, kind: input, shape index: {}]
  %s6 = inlined_call_operand.hbm [shape: f32[1,256], index: 6, kind: input, shape index: {}]
  %s7 = inlined_call_operand.hbm [shape: bf16[256,128], index: 7, kind: input, shape index: {}]
  %s8 = inlined_call_operand.hbm [shape: f32[1,128], index: 8, kind: input, shape index: {}]
  %s9 = inlined_call_operand.vmem [shape: f32[8,128], index: 9, kind: output, shape index: {}]
  %s10 = sld [smem:[#allocation0]]
  $region78: #{convolutional_nn_forward.1} parent=0
    _
  %s12 = ssub.s32 1, %s10
  %s13 = scalar_select 0, %s12, %s10
  $region1: #{convolutional_nn_forward.1} parent=0
    #allocation2 [shape = 'u8[1835008]{0}', space=vmem, size = 0x1c0000, scoped, tag = 'input window, operand 1, single buffered']
    #allocation3 [shape = 's32[1]{0}', space=sflag, size = 0x4, scoped, tag = 'scoped memory for convolutional_nn_forward.1']
    #allocation4 [shape = 'u8[3584]{0}', space=vmem, size = 0x1000, scoped, tag = 'input window, operand 2, single buffered']
    #allocation5 [shape = 's32[1]{0}', space=sflag, size = 0x4, scoped, tag = 'scoped memory for convolutional_nn_forward.1']
    #allocation6 [shape = 'u8[229376]{0}', space=vmem, size = 0x38000, scoped, tag = 'input window, operand 3, single buffered']
    #allocation7 [shape = 'u8[512]{0}', space=vmem, size = 0x400, scoped, tag = 'input window, operand 4, single buffered']
    #allocation8 [shape = 's32[1]{0}', space=sflag, size = 0x4, scoped, tag = 'scoped memory for convolutional_nn_forward.1']
    #allocation9 [shape = 'u8[65536]{0}', space=vmem, size = 0x10000, scoped, tag = 'input window, operand 5, single buffered']
    #allocation10 [shape = 'u8[1024]{0}', space=vmem, size = 0x400, scoped, tag = 'input window, operand 6, single buffered']
    #allocation11 [shape = 's32[1]{0}', space=sflag, size = 0x4, scoped, tag = 'scoped memory for convolutional_nn_forward.1']
    #allocation12 [shape = 'u8[65536]{0}', space=vmem, size = 0x10000, scoped, tag = 'input window, operand 7, single buffered']
    #allocation13 [shape = 'u8[512]{0}', space=vmem, size = 0x400, scoped, tag = 'input window, operand 8, single buffered']
    #allocation14 [shape = 's32[1]{0}', space=sflag, size = 0x4, scoped, tag = 'scoped memory for convolutional_nn_forward.1']
    %14 = vsyncpa [#allocation3], 0
    %15 = vsyncpa [#allocation5], 0
    %16 = vsyncpa [#allocation8], 0
    %17 = vsyncpa [#allocation11], 0
    %18 = vsyncpa [#allocation14], 0
    // Predicated region
    $region2: #{convolutional_nn_forward.1} parent=1 // pred_check
      _
    $region3: #{convolutional_nn_forward.1} parent=1 // pred_check_branch
      %20 = sbr.rel (0) target = $region5
    $region4: #{convolutional_nn_forward.1} parent=1 // pred_region
      _
    $region5: #{convolutional_nn_forward.1} parent=1 // pred_fallthru
      _
    // Predicated region
    $region6: #{convolutional_nn_forward.1} parent=1 // pred_check
      _
    $region7: #{convolutional_nn_forward.1} parent=1 // pred_check_branch
      %22 = sbr.rel (0) target = $region9
    $region8: #{convolutional_nn_forward.1} parent=1 // pred_region
      %s24 = ssub.s32 57344, 57344
      %25 = vsyncadd [#allocation3], %s24
      %s26 = sshll.u32 [#allocation2], 4
      %s27 = int_to_ptr.vmem [resolvable:$true] %s26
      %32 = dma.hbm_to_vmem [thread:$0]  %s1, 57344, %s27, [#allocation3], 448, 448, 28
    $region9: #{convolutional_nn_forward.1} parent=1 // pred_fallthru
      _
    // Predicated region
    $region10: #{convolutional_nn_forward.1} parent=1 // pred_check
      _
    $region11: #{convolutional_nn_forward.1} parent=1 // pred_check_branch
      %34 = sbr.rel (0) target = $region13
    $region12: #{convolutional_nn_forward.1} parent=1 // pred_region
      %s36 = ssub.s32 112, 112
      %37 = vsyncadd [#allocation5], %s36
      %s39 = sshll.u32 [#allocation4], 4
      %s40 = int_to_ptr.vmem [resolvable:$true] %s39
      %42 = dma.hbm_to_vmem [thread:$0]  %s2, 112, %s40, [#allocation5]
    $region13: #{convolutional_nn_forward.1} parent=1 // pred_fallthru
      _
    // Predicated region
    $region14: #{convolutional_nn_forward.1} parent=1 // pred_check
      _
    $region15: #{convolutional_nn_forward.1} parent=1 // pred_check_branch
      %44 = sbr.rel (0) target = $region17
    $region16: #{convolutional_nn_forward.1} parent=1 // pred_region
      %s46 = ssub.s32 7168, 7168
      %47 = vsyncadd [#allocation5], %s46
      %s48 = sshll.u32 [#allocation6], 4
      %s49 = int_to_ptr.vmem [resolvable:$true] %s48
      %54 = dma.hbm_to_vmem [thread:$0]  %s3, 7168, %s49, [#allocation5], 64, 64, 4
    $region17: #{convolutional_nn_forward.1} parent=1 // pred_fallthru
      _
    // Predicated region
    $region18: #{convolutional_nn_forward.1} parent=1 // pred_check
      _
    $region19: #{convolutional_nn_forward.1} parent=1 // pred_check_branch
      %56 = sbr.rel (0) target = $region21
    $region20: #{convolutional_nn_forward.1} parent=1 // pred_region
      %s58 = ssub.s32 16, 16
      %59 = vsyncadd [#allocation8], %s58
      %s61 = sshll.u32 [#allocation7], 4
      %s62 = int_to_ptr.vmem [resolvable:$true] %s61
      %64 = dma.hbm_to_vmem [thread:$0]  %s4, 16, %s62, [#allocation8]
    $region21: #{convolutional_nn_forward.1} parent=1 // pred_fallthru
      _
    // Predicated region
    $region22: #{convolutional_nn_forward.1} parent=1 // pred_check
      _
    $region23: #{convolutional_nn_forward.1} parent=1 // pred_check_branch
      %66 = sbr.rel (0) target = $region25
    $region24: #{convolutional_nn_forward.1} parent=1 // pred_region
      %s68 = ssub.s32 2048, 2048
      %69 = vsyncadd [#allocation8], %s68
      %s70 = sshll.u32 [#allocation9], 4
      %s71 = int_to_ptr.vmem [resolvable:$true] %s70
      %76 = dma.hbm_to_vmem [thread:$0]  %s5, 2048, %s71, [#allocation8], 128, 128, 8
    $region25: #{convolutional_nn_forward.1} parent=1 // pred_fallthru
      _
    // Predicated region
    $region26: #{convolutional_nn_forward.1} parent=1 // pred_check
      _
    $region27: #{convolutional_nn_forward.1} parent=1 // pred_check_branch
      %78 = sbr.rel (0) target = $region29
    $region28: #{convolutional_nn_forward.1} parent=1 // pred_region
      %s80 = ssub.s32 32, 32
      %81 = vsyncadd [#allocation11], %s80
      %s83 = sshll.u32 [#allocation10], 4
      %s84 = int_to_ptr.vmem [resolvable:$true] %s83
      %86 = dma.hbm_to_vmem [thread:$0]  %s6, 32, %s84, [#allocation11]
    $region29: #{convolutional_nn_forward.1} parent=1 // pred_fallthru
      _
    // Predicated region
    $region30: #{convolutional_nn_forward.1} parent=1 // pred_check
      _
    $region31: #{convolutional_nn_forward.1} parent=1 // pred_check_branch
      %88 = sbr.rel (0) target = $region33
    $region32: #{convolutional_nn_forward.1} parent=1 // pred_region
      %s90 = ssub.s32 2048, 2048
      %91 = vsyncadd [#allocation11], %s90
      %s92 = sshll.u32 [#allocation12], 4
      %s93 = int_to_ptr.vmem [resolvable:$true] %s92
      %98 = dma.hbm_to_vmem [thread:$0]  %s7, 2048, %s93, [#allocation11], 64, 64, 4
    $region33: #{convolutional_nn_forward.1} parent=1 // pred_fallthru
      _
    // Predicated region
    $region34: #{convolutional_nn_forward.1} parent=1 // pred_check
      _
    $region35: #{convolutional_nn_forward.1} parent=1 // pred_check_branch
      %100 = sbr.rel (0) target = $region37
    $region36: #{convolutional_nn_forward.1} parent=1 // pred_region
      %s102 = ssub.s32 16, 16
      %103 = vsyncadd [#allocation14], %s102
      %s105 = sshll.u32 [#allocation13], 4
      %s106 = int_to_ptr.vmem [resolvable:$true] %s105
      %108 = dma.hbm_to_vmem [thread:$0]  %s8, 16, %s106, [#allocation14]
    $region37: #{convolutional_nn_forward.1} parent=1 // pred_fallthru
      _
    // Predicated region
    $region38: #{convolutional_nn_forward.1} parent=1 // pred_check
      _
    $region39: #{convolutional_nn_forward.1} parent=1 // pred_check_branch
      %110 = sbr.rel (0) target = $region41
    $region40: #{convolutional_nn_forward.1} parent=1 // pred_region
      %111 = dma.done [#allocation3], 57344
    $region41: #{convolutional_nn_forward.1} parent=1 // pred_fallthru
      _
    // Predicated region
    $region42: #{convolutional_nn_forward.1} parent=1 // pred_check
      _
    $region43: #{convolutional_nn_forward.1} parent=1 // pred_check_branch
      %113 = sbr.rel (0) target = $region45
    $region44: #{convolutional_nn_forward.1} parent=1 // pred_region
      %114 = dma.done [#allocation5], 112
    $region45: #{convolutional_nn_forward.1} parent=1 // pred_fallthru
      _
    // Predicated region
    $region46: #{convolutional_nn_forward.1} parent=1 // pred_check
      _
    $region47: #{convolutional_nn_forward.1} parent=1 // pred_check_branch
      %116 = sbr.rel (0) target = $region49
    $region48: #{convolutional_nn_forward.1} parent=1 // pred_region
      %117 = dma.done [#allocation5], 7168
    $region49: #{convolutional_nn_forward.1} parent=1 // pred_fallthru
      _
    // Predicated region
    $region50: #{convolutional_nn_forward.1} parent=1 // pred_check
      _
    $region51: #{convolutional_nn_forward.1} parent=1 // pred_check_branch
      %119 = sbr.rel (0) target = $region53
    $region52: #{convolutional_nn_forward.1} parent=1 // pred_region
      %120 = dma.done [#allocation8], 16
    $region53: #{convolutional_nn_forward.1} parent=1 // pred_fallthru
      _
    // Predicated region
    $region54: #{convolutional_nn_forward.1} parent=1 // pred_check
      _
    $region55: #{convolutional_nn_forward.1} parent=1 // pred_check_branch
      %122 = sbr.rel (0) target = $region57
    $region56: #{convolutional_nn_forward.1} parent=1 // pred_region
      %123 = dma.done [#allocation8], 2048
    $region57: #{convolutional_nn_forward.1} parent=1 // pred_fallthru
      _
    // Predicated region
    $region58: #{convolutional_nn_forward.1} parent=1 // pred_check
      _
    $region59: #{convolutional_nn_forward.1} parent=1 // pred_check_branch
      %125 = sbr.rel (0) target = $region61
    $region60: #{convolutional_nn_forward.1} parent=1 // pred_region
      %126 = dma.done [#allocation11], 32
    $region61: #{convolutional_nn_forward.1} parent=1 // pred_fallthru
      _
    // Predicated region
    $region62: #{convolutional_nn_forward.1} parent=1 // pred_check
      _
    $region63: #{convolutional_nn_forward.1} parent=1 // pred_check_branch
      %128 = sbr.rel (0) target = $region65
    $region64: #{convolutional_nn_forward.1} parent=1 // pred_region
      %129 = dma.done [#allocation11], 2048
    $region65: #{convolutional_nn_forward.1} parent=1 // pred_fallthru
      _
    // Predicated region
    $region66: #{convolutional_nn_forward.1} parent=1 // pred_check
      _
    $region67: #{convolutional_nn_forward.1} parent=1 // pred_check_branch
      %131 = sbr.rel (0) target = $region69
    $region68: #{convolutional_nn_forward.1} parent=1 // pred_region
      %132 = dma.done [#allocation14], 16
    $region69: #{convolutional_nn_forward.1} parent=1 // pred_fallthru
      _
    %v134 = vld [vmem:[%s0] sm:$0xff]
    %v135 = vld [vmem:[%s0 + $0x8] sm:$0xff]
    %v136 = vld [vmem:[%s0 + $0x10] sm:$0xff]
    %v137 = vld [vmem:[%s0 + $0x18] sm:$0xff]
    %v138 = vld [vmem:[%s0 + $0x20] sm:$0xff]
    %v139 = vld [vmem:[%s0 + $0x28] sm:$0xff]
    %v140 = vld [vmem:[%s0 + $0x30] sm:$0xff]
    %v141 = vld [vmem:[%s0 + $0x38] sm:$0xff]
    %v142 = vpack.c.bf16 %v134, %v134
    %v143 = vpack.c.bf16 %v135, %v135
    %v144 = vpack.c.bf16 %v136, %v136
    %v145 = vpack.c.bf16 %v137, %v137
    %v146 = vpack.c.bf16 %v138, %v138
    %v147 = vpack.c.bf16 %v139, %v139
    %v148 = vpack.c.bf16 %v140, %v140
    %v149 = vpack.c.bf16 %v141, %v141
    %v150 = vld [vmem:[#allocation2] sm:$0xff]
    %v151 = vld [vmem:[#allocation2 + $0x8] sm:$0xff]
    %v152 = vld [vmem:[#allocation2 + $0x10] sm:$0xff]
    %v153 = vld [vmem:[#allocation2 + $0x18] sm:$0xf]
    %v154 = vld [vmem:[#allocation2 + $0x1c] sm:$0xff]
    %v155 = vld [vmem:[#allocation2 + $0x24] sm:$0xff]
    %v156 = vld [vmem:[#allocation2 + $0x2c] sm:$0xff]
    %v157 = vld [vmem:[#allocation2 + $0x34] sm:$0xf]
    %v158 = vld [vmem:[#allocation2 + $0x38] sm:$0xff]
    %v159 = vld [vmem:[#allocation2 + $0x40] sm:$0xff]
    %v160 = vld [vmem:[#allocation2 + $0x48] sm:$0xff]
    %v161 = vld [vmem:[#allocation2 + $0x50] sm:$0xf]
    %v162 = vld [vmem:[#allocation2 + $0x54] sm:$0xff]
    %v163 = vld [vmem:[#allocation2 + $0x5c] sm:$0xff]
    %v164 = vld [vmem:[#allocation2 + $0x64] sm:$0xff]
    %v165 = vld [vmem:[#allocation2 + $0x6c] sm:$0xf]
    %v166 = vld [vmem:[#allocation2 + $0x70] sm:$0xff]
    %v167 = vld [vmem:[#allocation2 + $0x78] sm:$0xff]
    %v168 = vld [vmem:[#allocation2 + $0x80] sm:$0xff]
    %v169 = vld [vmem:[#allocation2 + $0x88] sm:$0xf]
    %v170 = vld [vmem:[#allocation2 + $0x8c] sm:$0xff]
    %v171 = vld [vmem:[#allocation2 + $0x94] sm:$0xff]
    %v172 = vld [vmem:[#allocation2 + $0x9c] sm:$0xff]
    %v173 = vld [vmem:[#allocation2 + $0xa4] sm:$0xf]
    %v174 = vld [vmem:[#allocation2 + $0xa8] sm:$0xff]
    %v175 = vld [vmem:[#allocation2 + $0xb0] sm:$0xff]
    %v176 = vld [vmem:[#allocation2 + $0xb8] sm:$0xff]
    %v177 = vld [vmem:[#allocation2 + $0xc0] sm:$0xf]
    %v178 = vld [vmem:[#allocation2 + $0xc4] sm:$0xff]
    %v179 = vld [vmem:[#allocation2 + $0xcc] sm:$0xff]
    %v180 = vld [vmem:[#allocation2 + $0xd4] sm:$0xff]
    %v181 = vld [vmem:[#allocation2 + $0xdc] sm:$0xf]
    %v182 = vld [vmem:[#allocation2 + $0xe0] sm:$0xff]
    %v183 = vld [vmem:[#allocation2 + $0xe8] sm:$0xff]
    %v184 = vld [vmem:[#allocation2 + $0xf0] sm:$0xff]
    %v185 = vld [vmem:[#allocation2 + $0xf8] sm:$0xf]
    %v186 = vld [vmem:[#allocation2 + $0xfc] sm:$0xff]
    %v187 = vld [vmem:[#allocation2 + $0x104] sm:$0xff]
    %v188 = vld [vmem:[#allocation2 + $0x10c] sm:$0xff]
    %v189 = vld [vmem:[#allocation2 + $0x114] sm:$0xf]
    %v190 = vld [vmem:[#allocation2 + $0x118] sm:$0xff]
    %v191 = vld [vmem:[#allocation2 + $0x120] sm:$0xff]
    %v192 = vld [vmem:[#allocation2 + $0x128] sm:$0xff]
    %v193 = vld [vmem:[#allocation2 + $0x130] sm:$0xf]
    %v194 = vld [vmem:[#allocation2 + $0x134] sm:$0xff]
    %v195 = vld [vmem:[#allocation2 + $0x13c] sm:$0xff]
    %v196 = vld [vmem:[#allocation2 + $0x144] sm:$0xff]
    %v197 = vld [vmem:[#allocation2 + $0x14c] sm:$0xf]
    %v198 = vld [vmem:[#allocation2 + $0x150] sm:$0xff]
    %v199 = vld [vmem:[#allocation2 + $0x158] sm:$0xff]
    %v200 = vld [vmem:[#allocation2 + $0x160] sm:$0xff]
    %v201 = vld [vmem:[#allocation2 + $0x168] sm:$0xf]
    %v202 = vld [vmem:[#allocation2 + $0x16c] sm:$0xff]
    %v203 = vld [vmem:[#allocation2 + $0x174] sm:$0xff]
    %v204 = vld [vmem:[#allocation2 + $0x17c] sm:$0xff]
    %v205 = vld [vmem:[#allocation2 + $0x184] sm:$0xf]
    %v206 = vld [vmem:[#allocation2 + $0x188] sm:$0xff]
    %v207 = vld [vmem:[#allocation2 + $0x190] sm:$0xff]
    %v208 = vld [vmem:[#allocation2 + $0x198] sm:$0xff]
    %v209 = vld [vmem:[#allocation2 + $0x1a0] sm:$0xf]
    %v210 = vld [vmem:[#allocation2 + $0x1a4] sm:$0xff]
    %v211 = vld [vmem:[#allocation2 + $0x1ac] sm:$0xff]
    %v212 = vld [vmem:[#allocation2 + $0x1b4] sm:$0xff]
    %v213 = vld [vmem:[#allocation2 + $0x1bc] sm:$0xf]
    %v214 = vld [vmem:[#allocation2 + $0x1c0] sm:$0xff]
    %v215 = vld [vmem:[#allocation2 + $0x1c8] sm:$0xff]
    %v216 = vld [vmem:[#allocation2 + $0x1d0] sm:$0xff]
    %v217 = vld [vmem:[#allocation2 + $0x1d8] sm:$0xf]
    %v218 = vld [vmem:[#allocation2 + $0x1dc] sm:$0xff]
    %v219 = vld [vmem:[#allocation2 + $0x1e4] sm:$0xff]
    %v220 = vld [vmem:[#allocation2 + $0x1ec] sm:$0xff]
    %v221 = vld [vmem:[#allocation2 + $0x1f4] sm:$0xf]
    %v222 = vld [vmem:[#allocation2 + $0x1f8] sm:$0xff]
    %v223 = vld [vmem:[#allocation2 + $0x200] sm:$0xff]
    %v224 = vld [vmem:[#allocation2 + $0x208] sm:$0xff]
    %v225 = vld [vmem:[#allocation2 + $0x210] sm:$0xf]
    %v226 = vld [vmem:[#allocation2 + $0x214] sm:$0xff]
    %v227 = vld [vmem:[#allocation2 + $0x21c] sm:$0xff]
    %v228 = vld [vmem:[#allocation2 + $0x224] sm:$0xff]
    %v229 = vld [vmem:[#allocation2 + $0x22c] sm:$0xf]
    %v230 = vld [vmem:[#allocation2 + $0x230] sm:$0xff]
    %v231 = vld [vmem:[#allocation2 + $0x238] sm:$0xff]
    %v232 = vld [vmem:[#allocation2 + $0x240] sm:$0xff]
    %v233 = vld [vmem:[#allocation2 + $0x248] sm:$0xf]
    %v234 = vld [vmem:[#allocation2 + $0x24c] sm:$0xff]
    %v235 = vld [vmem:[#allocation2 + $0x254] sm:$0xff]
    %v236 = vld [vmem:[#allocation2 + $0x25c] sm:$0xff]
    %v237 = vld [vmem:[#allocation2 + $0x264] sm:$0xf]
    %v238 = vld [vmem:[#allocation2 + $0x268] sm:$0xff]
    %v239 = vld [vmem:[#allocation2 + $0x270] sm:$0xff]
    %v240 = vld [vmem:[#allocation2 + $0x278] sm:$0xff]
    %v241 = vld [vmem:[#allocation2 + $0x280] sm:$0xf]
    %v242 = vld [vmem:[#allocation2 + $0x284] sm:$0xff]
    %v243 = vld [vmem:[#allocation2 + $0x28c] sm:$0xff]
    %v244 = vld [vmem:[#allocation2 + $0x294] sm:$0xff]
    %v245 = vld [vmem:[#allocation2 + $0x29c] sm:$0xf]
    %v246 = vld [vmem:[#allocation2 + $0x2a0] sm:$0xff]
    %v247 = vld [vmem:[#allocation2 + $0x2a8] sm:$0xff]
    %v248 = vld [vmem:[#allocation2 + $0x2b0] sm:$0xff]
    %v249 = vld [vmem:[#allocation2 + $0x2b8] sm:$0xf]
    %v250 = vld [vmem:[#allocation2 + $0x2bc] sm:$0xff]
    %v251 = vld [vmem:[#allocation2 + $0x2c4] sm:$0xff]
    %v252 = vld [vmem:[#allocation2 + $0x2cc] sm:$0xff]
    %v253 = vld [vmem:[#allocation2 + $0x2d4] sm:$0xf]
    %v254 = vld [vmem:[#allocation2 + $0x2d8] sm:$0xff]
    %v255 = vld [vmem:[#allocation2 + $0x2e0] sm:$0xff]
    %v256 = vld [vmem:[#allocation2 + $0x2e8] sm:$0xff]
    %v257 = vld [vmem:[#allocation2 + $0x2f0] sm:$0xf]
    %v258 = vld [vmem:[#allocation2 + $0x2f4] sm:$0xff]
    %v259 = vld [vmem:[#allocation2 + $0x2fc] sm:$0xff]
    %v260 = vld [vmem:[#allocation2 + $0x304] sm:$0xff]
    %v261 = vld [vmem:[#allocation2 + $0x30c] sm:$0xf]
    %v262 = vld [vmem:[#allocation2 + $0x310] sm:$0xff]
    %v263 = vld [vmem:[#allocation2 + $0x318] sm:$0xff]
    %v264 = vld [vmem:[#allocation2 + $0x320] sm:$0xff]
    %v265 = vld [vmem:[#allocation2 + $0x328] sm:$0xf]
    %v266 = vld [vmem:[#allocation2 + $0x32c] sm:$0xff]
    %v267 = vld [vmem:[#allocation2 + $0x334] sm:$0xff]
    %v268 = vld [vmem:[#allocation2 + $0x33c] sm:$0xff]
    %v269 = vld [vmem:[#allocation2 + $0x344] sm:$0xf]
    %v270 = vld [vmem:[#allocation2 + $0x348] sm:$0xff]
    %v271 = vld [vmem:[#allocation2 + $0x350] sm:$0xff]
    %v272 = vld [vmem:[#allocation2 + $0x358] sm:$0xff]
    %v273 = vld [vmem:[#allocation2 + $0x360] sm:$0xf]
    %v274 = vld [vmem:[#allocation2 + $0x364] sm:$0xff]
    %v275 = vld [vmem:[#allocation2 + $0x36c] sm:$0xff]
    %v276 = vld [vmem:[#allocation2 + $0x374] sm:$0xff]
    %v277 = vld [vmem:[#allocation2 + $0x37c] sm:$0xf]
    %v278 = vld [vmem:[#allocation2 + $0x380] sm:$0xff]
    %v279 = vld [vmem:[#allocation2 + $0x388] sm:$0xff]
    %v280 = vld [vmem:[#allocation2 + $0x390] sm:$0xff]
    %v281 = vld [vmem:[#allocation2 + $0x398] sm:$0xf]
    %v282 = vld [vmem:[#allocation2 + $0x39c] sm:$0xff]
    %v283 = vld [vmem:[#allocation2 + $0x3a4] sm:$0xff]
    %v284 = vld [vmem:[#allocation2 + $0x3ac] sm:$0xff]
    %v285 = vld [vmem:[#allocation2 + $0x3b4] sm:$0xf]
    %v286 = vld [vmem:[#allocation2 + $0x3b8] sm:$0xff]
    %v287 = vld [vmem:[#allocation2 + $0x3c0] sm:$0xff]
    %v288 = vld [vmem:[#allocation2 + $0x3c8] sm:$0xff]
    %v289 = vld [vmem:[#allocation2 + $0x3d0] sm:$0xf]
    %v290 = vld [vmem:[#allocation2 + $0x3d4] sm:$0xff]
    %v291 = vld [vmem:[#allocation2 + $0x3dc] sm:$0xff]
    %v292 = vld [vmem:[#allocation2 + $0x3e4] sm:$0xff]
    %v293 = vld [vmem:[#allocation2 + $0x3ec] sm:$0xf]
    %v294 = vld [vmem:[#allocation2 + $0x3f0] sm:$0xff]
    %v295 = vld [vmem:[#allocation2 + $0x3f8] sm:$0xff]
    %v296 = vld [vmem:[#allocation2 + $0x400] sm:$0xff]
    %v297 = vld [vmem:[#allocation2 + $0x408] sm:$0xf]
    %v298 = vld [vmem:[#allocation2 + $0x40c] sm:$0xff]
    %v299 = vld [vmem:[#allocation2 + $0x414] sm:$0xff]
    %v300 = vld [vmem:[#allocation2 + $0x41c] sm:$0xff]
    %v301 = vld [vmem:[#allocation2 + $0x424] sm:$0xf]
    %v302 = vld [vmem:[#allocation2 + $0x428] sm:$0xff]
    %v303 = vld [vmem:[#allocation2 + $0x430] sm:$0xff]
    %v304 = vld [vmem:[#allocation2 + $0x438] sm:$0xff]
    %v305 = vld [vmem:[#allocation2 + $0x440] sm:$0xf]
    %v306 = vld [vmem:[#allocation2 + $0x444] sm:$0xff]
    %v307 = vld [vmem:[#allocation2 + $0x44c] sm:$0xff]
    %v308 = vld [vmem:[#allocation2 + $0x454] sm:$0xff]
    %v309 = vld [vmem:[#allocation2 + $0x45c] sm:$0xf]
    %v310 = vld [vmem:[#allocation2 + $0x460] sm:$0xff]
    %v311 = vld [vmem:[#allocation2 + $0x468] sm:$0xff]
    %v312 = vld [vmem:[#allocation2 + $0x470] sm:$0xff]
    %v313 = vld [vmem:[#allocation2 + $0x478] sm:$0xf]
    %v314 = vld [vmem:[#allocation2 + $0x47c] sm:$0xff]
    %v315 = vld [vmem:[#allocation2 + $0x484] sm:$0xff]
    %v316 = vld [vmem:[#allocation2 + $0x48c] sm:$0xff]
    %v317 = vld [vmem:[#allocation2 + $0x494] sm:$0xf]
    %v318 = vld [vmem:[#allocation2 + $0x498] sm:$0xff]
    %v319 = vld [vmem:[#allocation2 + $0x4a0] sm:$0xff]
    %v320 = vld [vmem:[#allocation2 + $0x4a8] sm:$0xff]
    %v321 = vld [vmem:[#allocation2 + $0x4b0] sm:$0xf]
    %v322 = vld [vmem:[#allocation2 + $0x4b4] sm:$0xff]
    %v323 = vld [vmem:[#allocation2 + $0x4bc] sm:$0xff]
    %v324 = vld [vmem:[#allocation2 + $0x4c4] sm:$0xff]
    %v325 = vld [vmem:[#allocation2 + $0x4cc] sm:$0xf]
    %v326 = vld [vmem:[#allocation2 + $0x4d0] sm:$0xff]
    %v327 = vld [vmem:[#allocation2 + $0x4d8] sm:$0xff]
    %v328 = vld [vmem:[#allocation2 + $0x4e0] sm:$0xff]
    %v329 = vld [vmem:[#allocation2 + $0x4e8] sm:$0xf]
    %v330 = vld [vmem:[#allocation2 + $0x4ec] sm:$0xff]
    %v331 = vld [vmem:[#allocation2 + $0x4f4] sm:$0xff]
    %v332 = vld [vmem:[#allocation2 + $0x4fc] sm:$0xff]
    %v333 = vld [vmem:[#allocation2 + $0x504] sm:$0xf]
    %v334 = vld [vmem:[#allocation2 + $0x508] sm:$0xff]
    %v335 = vld [vmem:[#allocation2 + $0x510] sm:$0xff]
    %v336 = vld [vmem:[#allocation2 + $0x518] sm:$0xff]
    %v337 = vld [vmem:[#allocation2 + $0x520] sm:$0xf]
    %v338 = vld [vmem:[#allocation2 + $0x524] sm:$0xff]
    %v339 = vld [vmem:[#allocation2 + $0x52c] sm:$0xff]
    %v340 = vld [vmem:[#allocation2 + $0x534] sm:$0xff]
    %v341 = vld [vmem:[#allocation2 + $0x53c] sm:$0xf]
    %v342 = vld [vmem:[#allocation2 + $0x540] sm:$0xff]
    %v343 = vld [vmem:[#allocation2 + $0x548] sm:$0xff]
    %v344 = vld [vmem:[#allocation2 + $0x550] sm:$0xff]
    %v345 = vld [vmem:[#allocation2 + $0x558] sm:$0xf]
    %v346 = vld [vmem:[#allocation2 + $0x55c] sm:$0xff]
    %v347 = vld [vmem:[#allocation2 + $0x564] sm:$0xff]
    %v348 = vld [vmem:[#allocation2 + $0x56c] sm:$0xff]
    %v349 = vld [vmem:[#allocation2 + $0x574] sm:$0xf]
    %v350 = vld [vmem:[#allocation2 + $0x578] sm:$0xff]
    %v351 = vld [vmem:[#allocation2 + $0x580] sm:$0xff]
    %v352 = vld [vmem:[#allocation2 + $0x588] sm:$0xff]
    %v353 = vld [vmem:[#allocation2 + $0x590] sm:$0xf]
    %v354 = vld [vmem:[#allocation2 + $0x594] sm:$0xff]
    %v355 = vld [vmem:[#allocation2 + $0x59c] sm:$0xff]
    %v356 = vld [vmem:[#allocation2 + $0x5a4] sm:$0xff]
    %v357 = vld [vmem:[#allocation2 + $0x5ac] sm:$0xf]
    %v358 = vld [vmem:[#allocation2 + $0x5b0] sm:$0xff]
    %v359 = vld [vmem:[#allocation2 + $0x5b8] sm:$0xff]
    %v360 = vld [vmem:[#allocation2 + $0x5c0] sm:$0xff]
    %v361 = vld [vmem:[#allocation2 + $0x5c8] sm:$0xf]
    %v362 = vld [vmem:[#allocation2 + $0x5cc] sm:$0xff]
    %v363 = vld [vmem:[#allocation2 + $0x5d4] sm:$0xff]
    %v364 = vld [vmem:[#allocation2 + $0x5dc] sm:$0xff]
    %v365 = vld [vmem:[#allocation2 + $0x5e4] sm:$0xf]
    %v366 = vld [vmem:[#allocation2 + $0x5e8] sm:$0xff]
    %v367 = vld [vmem:[#allocation2 + $0x5f0] sm:$0xff]
    %v368 = vld [vmem:[#allocation2 + $0x5f8] sm:$0xff]
    %v369 = vld [vmem:[#allocation2 + $0x600] sm:$0xf]
    %v370 = vld [vmem:[#allocation2 + $0x604] sm:$0xff]
    %v371 = vld [vmem:[#allocation2 + $0x60c] sm:$0xff]
    %v372 = vld [vmem:[#allocation2 + $0x614] sm:$0xff]
    %v373 = vld [vmem:[#allocation2 + $0x61c] sm:$0xf]
    %v374 = vld [vmem:[#allocation2 + $0x620] sm:$0xff]
    %v375 = vld [vmem:[#allocation2 + $0x628] sm:$0xff]
    %v376 = vld [vmem:[#allocation2 + $0x630] sm:$0xff]
    %v377 = vld [vmem:[#allocation2 + $0x638] sm:$0xf]
    %v378 = vld [vmem:[#allocation2 + $0x63c] sm:$0xff]
    %v379 = vld [vmem:[#allocation2 + $0x644] sm:$0xff]
    %v380 = vld [vmem:[#allocation2 + $0x64c] sm:$0xff]
    %v381 = vld [vmem:[#allocation2 + $0x654] sm:$0xf]
    %v382 = vld [vmem:[#allocation2 + $0x658] sm:$0xff]
    %v383 = vld [vmem:[#allocation2 + $0x660] sm:$0xff]
    %v384 = vld [vmem:[#allocation2 + $0x668] sm:$0xff]
    %v385 = vld [vmem:[#allocation2 + $0x670] sm:$0xf]
    %v386 = vld [vmem:[#allocation2 + $0x674] sm:$0xff]
    %v387 = vld [vmem:[#allocation2 + $0x67c] sm:$0xff]
    %v388 = vld [vmem:[#allocation2 + $0x684] sm:$0xff]
    %v389 = vld [vmem:[#allocation2 + $0x68c] sm:$0xf]
    %v390 = vld [vmem:[#allocation2 + $0x690] sm:$0xff]
    %v391 = vld [vmem:[#allocation2 + $0x698] sm:$0xff]
    %v392 = vld [vmem:[#allocation2 + $0x6a0] sm:$0xff]
    %v393 = vld [vmem:[#allocation2 + $0x6a8] sm:$0xf]
    %v394 = vld [vmem:[#allocation2 + $0x6ac] sm:$0xff]
    %v395 = vld [vmem:[#allocation2 + $0x6b4] sm:$0xff]
    %v396 = vld [vmem:[#allocation2 + $0x6bc] sm:$0xff]
    %v397 = vld [vmem:[#allocation2 + $0x6c4] sm:$0xf]
    %v398 = vld [vmem:[#allocation2 + $0x6c8] sm:$0xff]
    %v399 = vld [vmem:[#allocation2 + $0x6d0] sm:$0xff]
    %v400 = vld [vmem:[#allocation2 + $0x6d8] sm:$0xff]
    %v401 = vld [vmem:[#allocation2 + $0x6e0] sm:$0xf]
    %v402 = vld [vmem:[#allocation2 + $0x6e4] sm:$0xff]
    %v403 = vld [vmem:[#allocation2 + $0x6ec] sm:$0xff]
    %v404 = vld [vmem:[#allocation2 + $0x6f4] sm:$0xff]
    %v405 = vld [vmem:[#allocation2 + $0x6fc] sm:$0xf]
    %v406 = vld [vmem:[#allocation2 + $0x700] sm:$0xff]
    %v407 = vld [vmem:[#allocation2 + $0x708] sm:$0xff]
    %v408 = vld [vmem:[#allocation2 + $0x710] sm:$0xff]
    %v409 = vld [vmem:[#allocation2 + $0x718] sm:$0xf]
    %v410 = vld [vmem:[#allocation2 + $0x71c] sm:$0xff]
    %v411 = vld [vmem:[#allocation2 + $0x724] sm:$0xff]
    %v412 = vld [vmem:[#allocation2 + $0x72c] sm:$0xff]
    %v413 = vld [vmem:[#allocation2 + $0x734] sm:$0xf]
    %v414 = vld [vmem:[#allocation2 + $0x738] sm:$0xff]
    %v415 = vld [vmem:[#allocation2 + $0x740] sm:$0xff]
    %v416 = vld [vmem:[#allocation2 + $0x748] sm:$0xff]
    %v417 = vld [vmem:[#allocation2 + $0x750] sm:$0xf]
    %v418 = vld [vmem:[#allocation2 + $0x754] sm:$0xff]
    %v419 = vld [vmem:[#allocation2 + $0x75c] sm:$0xff]
    %v420 = vld [vmem:[#allocation2 + $0x764] sm:$0xff]
    %v421 = vld [vmem:[#allocation2 + $0x76c] sm:$0xf]
    %v422 = vld [vmem:[#allocation2 + $0x770] sm:$0xff]
    %v423 = vld [vmem:[#allocation2 + $0x778] sm:$0xff]
    %v424 = vld [vmem:[#allocation2 + $0x780] sm:$0xff]
    %v425 = vld [vmem:[#allocation2 + $0x788] sm:$0xf]
    %v426 = vld [vmem:[#allocation2 + $0x78c] sm:$0xff]
    %v427 = vld [vmem:[#allocation2 + $0x794] sm:$0xff]
    %v428 = vld [vmem:[#allocation2 + $0x79c] sm:$0xff]
    %v429 = vld [vmem:[#allocation2 + $0x7a4] sm:$0xf]
    %v430 = vld [vmem:[#allocation2 + $0x7a8] sm:$0xff]
    %v431 = vld [vmem:[#allocation2 + $0x7b0] sm:$0xff]
    %v432 = vld [vmem:[#allocation2 + $0x7b8] sm:$0xff]
    %v433 = vld [vmem:[#allocation2 + $0x7c0] sm:$0xf]
    %v434 = vld [vmem:[#allocation2 + $0x7c4] sm:$0xff]
    %v435 = vld [vmem:[#allocation2 + $0x7cc] sm:$0xff]
    %v436 = vld [vmem:[#allocation2 + $0x7d4] sm:$0xff]
    %v437 = vld [vmem:[#allocation2 + $0x7dc] sm:$0xf]
    %v438 = vld [vmem:[#allocation2 + $0x7e0] sm:$0xff]
    %v439 = vld [vmem:[#allocation2 + $0x7e8] sm:$0xff]
    %v440 = vld [vmem:[#allocation2 + $0x7f0] sm:$0xff]
    %v441 = vld [vmem:[#allocation2 + $0x7f8] sm:$0xf]
    %v442 = vld [vmem:[#allocation2 + $0x7fc] sm:$0xff]
    %v443 = vld [vmem:[#allocation2 + $0x804] sm:$0xff]
    %v444 = vld [vmem:[#allocation2 + $0x80c] sm:$0xff]
    %v445 = vld [vmem:[#allocation2 + $0x814] sm:$0xf]
    %v446 = vld [vmem:[#allocation2 + $0x818] sm:$0xff]
    %v447 = vld [vmem:[#allocation2 + $0x820] sm:$0xff]
    %v448 = vld [vmem:[#allocation2 + $0x828] sm:$0xff]
    %v449 = vld [vmem:[#allocation2 + $0x830] sm:$0xf]
    %v450 = vld [vmem:[#allocation2 + $0x834] sm:$0xff]
    %v451 = vld [vmem:[#allocation2 + $0x83c] sm:$0xff]
    %v452 = vld [vmem:[#allocation2 + $0x844] sm:$0xff]
    %v453 = vld [vmem:[#allocation2 + $0x84c] sm:$0xf]
    %v454 = vld [vmem:[#allocation2 + $0x850] sm:$0xff]
    %v455 = vld [vmem:[#allocation2 + $0x858] sm:$0xff]
    %v456 = vld [vmem:[#allocation2 + $0x860] sm:$0xff]
    %v457 = vld [vmem:[#allocation2 + $0x868] sm:$0xf]
    %v458 = vld [vmem:[#allocation2 + $0x86c] sm:$0xff]
    %v459 = vld [vmem:[#allocation2 + $0x874] sm:$0xff]
    %v460 = vld [vmem:[#allocation2 + $0x87c] sm:$0xff]
    %v461 = vld [vmem:[#allocation2 + $0x884] sm:$0xf]
    %v462 = vld [vmem:[#allocation2 + $0x888] sm:$0xff]
    %v463 = vld [vmem:[#allocation2 + $0x890] sm:$0xff]
    %v464 = vld [vmem:[#allocation2 + $0x898] sm:$0xff]
    %v465 = vld [vmem:[#allocation2 + $0x8a0] sm:$0xf]
    %v466 = vld [vmem:[#allocation2 + $0x8a4] sm:$0xff]
    %v467 = vld [vmem:[#allocation2 + $0x8ac] sm:$0xff]
    %v468 = vld [vmem:[#allocation2 + $0x8b4] sm:$0xff]
    %v469 = vld [vmem:[#allocation2 + $0x8bc] sm:$0xf]
    %v470 = vld [vmem:[#allocation2 + $0x8c0] sm:$0xff]
    %v471 = vld [vmem:[#allocation2 + $0x8c8] sm:$0xff]
    %v472 = vld [vmem:[#allocation2 + $0x8d0] sm:$0xff]
    %v473 = vld [vmem:[#allocation2 + $0x8d8] sm:$0xf]
    %v474 = vld [vmem:[#allocation2 + $0x8dc] sm:$0xff]
    %v475 = vld [vmem:[#allocation2 + $0x8e4] sm:$0xff]
    %v476 = vld [vmem:[#allocation2 + $0x8ec] sm:$0xff]
    %v477 = vld [vmem:[#allocation2 + $0x8f4] sm:$0xf]
    %v478 = vld [vmem:[#allocation2 + $0x8f8] sm:$0xff]
    %v479 = vld [vmem:[#allocation2 + $0x900] sm:$0xff]
    %v480 = vld [vmem:[#allocation2 + $0x908] sm:$0xff]
    %v481 = vld [vmem:[#allocation2 + $0x910] sm:$0xf]
    %v482 = vld [vmem:[#allocation2 + $0x914] sm:$0xff]
    %v483 = vld [vmem:[#allocation2 + $0x91c] sm:$0xff]
    %v484 = vld [vmem:[#allocation2 + $0x924] sm:$0xff]
    %v485 = vld [vmem:[#allocation2 + $0x92c] sm:$0xf]
    %v486 = vld [vmem:[#allocation2 + $0x930] sm:$0xff]
    %v487 = vld [vmem:[#allocation2 + $0x938] sm:$0xff]
    %v488 = vld [vmem:[#allocation2 + $0x940] sm:$0xff]
    %v489 = vld [vmem:[#allocation2 + $0x948] sm:$0xf]
    %v490 = vld [vmem:[#allocation2 + $0x94c] sm:$0xff]
    %v491 = vld [vmem:[#allocation2 + $0x954] sm:$0xff]
    %v492 = vld [vmem:[#allocation2 + $0x95c] sm:$0xff]
    %v493 = vld [vmem:[#allocation2 + $0x964] sm:$0xf]
    %v494 = vld [vmem:[#allocation2 + $0x968] sm:$0xff]
    %v495 = vld [vmem:[#allocation2 + $0x970] sm:$0xff]
    %v496 = vld [vmem:[#allocation2 + $0x978] sm:$0xff]
    %v497 = vld [vmem:[#allocation2 + $0x980] sm:$0xf]
    %v498 = vld [vmem:[#allocation2 + $0x984] sm:$0xff]
    %v499 = vld [vmem:[#allocation2 + $0x98c] sm:$0xff]
    %v500 = vld [vmem:[#allocation2 + $0x994] sm:$0xff]
    %v501 = vld [vmem:[#allocation2 + $0x99c] sm:$0xf]
    %v502 = vld [vmem:[#allocation2 + $0x9a0] sm:$0xff]
    %v503 = vld [vmem:[#allocation2 + $0x9a8] sm:$0xff]
    %v504 = vld [vmem:[#allocation2 + $0x9b0] sm:$0xff]
    %v505 = vld [vmem:[#allocation2 + $0x9b8] sm:$0xf]
    %v506 = vld [vmem:[#allocation2 + $0x9bc] sm:$0xff]
    %v507 = vld [vmem:[#allocation2 + $0x9c4] sm:$0xff]
    %v508 = vld [vmem:[#allocation2 + $0x9cc] sm:$0xff]
    %v509 = vld [vmem:[#allocation2 + $0x9d4] sm:$0xf]
    %v510 = vld [vmem:[#allocation2 + $0x9d8] sm:$0xff]
    %v511 = vld [vmem:[#allocation2 + $0x9e0] sm:$0xff]
    %v512 = vld [vmem:[#allocation2 + $0x9e8] sm:$0xff]
    %v513 = vld [vmem:[#allocation2 + $0x9f0] sm:$0xf]
    %v514 = vld [vmem:[#allocation2 + $0x9f4] sm:$0xff]
    %v515 = vld [vmem:[#allocation2 + $0x9fc] sm:$0xff]
    %v516 = vld [vmem:[#allocation2 + $0xa04] sm:$0xff]
    %v517 = vld [vmem:[#allocation2 + $0xa0c] sm:$0xf]
    %v518 = vld [vmem:[#allocation2 + $0xa10] sm:$0xff]
    %v519 = vld [vmem:[#allocation2 + $0xa18] sm:$0xff]
    %v520 = vld [vmem:[#allocation2 + $0xa20] sm:$0xff]
    %v521 = vld [vmem:[#allocation2 + $0xa28] sm:$0xf]
    %v522 = vld [vmem:[#allocation2 + $0xa2c] sm:$0xff]
    %v523 = vld [vmem:[#allocation2 + $0xa34] sm:$0xff]
    %v524 = vld [vmem:[#allocation2 + $0xa3c] sm:$0xff]
    %v525 = vld [vmem:[#allocation2 + $0xa44] sm:$0xf]
    %v526 = vld [vmem:[#allocation2 + $0xa48] sm:$0xff]
    %v527 = vld [vmem:[#allocation2 + $0xa50] sm:$0xff]
    %v528 = vld [vmem:[#allocation2 + $0xa58] sm:$0xff]
    %v529 = vld [vmem:[#allocation2 + $0xa60] sm:$0xf]
    %v530 = vld [vmem:[#allocation2 + $0xa64] sm:$0xff]
    %v531 = vld [vmem:[#allocation2 + $0xa6c] sm:$0xff]
    %v532 = vld [vmem:[#allocation2 + $0xa74] sm:$0xff]
    %v533 = vld [vmem:[#allocation2 + $0xa7c] sm:$0xf]
    %v534 = vld [vmem:[#allocation2 + $0xa80] sm:$0xff]
    %v535 = vld [vmem:[#allocation2 + $0xa88] sm:$0xff]
    %v536 = vld [vmem:[#allocation2 + $0xa90] sm:$0xff]
    %v537 = vld [vmem:[#allocation2 + $0xa98] sm:$0xf]
    %v538 = vld [vmem:[#allocation2 + $0xa9c] sm:$0xff]
    %v539 = vld [vmem:[#allocation2 + $0xaa4] sm:$0xff]
    %v540 = vld [vmem:[#allocation2 + $0xaac] sm:$0xff]
    %v541 = vld [vmem:[#allocation2 + $0xab4] sm:$0xf]
    %v542 = vld [vmem:[#allocation2 + $0xab8] sm:$0xff]
    %v543 = vld [vmem:[#allocation2 + $0xac0] sm:$0xff]
    %v544 = vld [vmem:[#allocation2 + $0xac8] sm:$0xff]
    %v545 = vld [vmem:[#allocation2 + $0xad0] sm:$0xf]
    %v546 = vld [vmem:[#allocation2 + $0xad4] sm:$0xff]
    %v547 = vld [vmem:[#allocation2 + $0xadc] sm:$0xff]
    %v548 = vld [vmem:[#allocation2 + $0xae4] sm:$0xff]
    %v549 = vld [vmem:[#allocation2 + $0xaec] sm:$0xf]
    %v550 = vld [vmem:[#allocation2 + $0xaf0] sm:$0xff]
    %v551 = vld [vmem:[#allocation2 + $0xaf8] sm:$0xff]
    %v552 = vld [vmem:[#allocation2 + $0xb00] sm:$0xff]
    %v553 = vld [vmem:[#allocation2 + $0xb08] sm:$0xf]
    %v554 = vld [vmem:[#allocation2 + $0xb0c] sm:$0xff]
    %v555 = vld [vmem:[#allocation2 + $0xb14] sm:$0xff]
    %v556 = vld [vmem:[#allocation2 + $0xb1c] sm:$0xff]
    %v557 = vld [vmem:[#allocation2 + $0xb24] sm:$0xf]
    %v558 = vld [vmem:[#allocation2 + $0xb28] sm:$0xff]
    %v559 = vld [vmem:[#allocation2 + $0xb30] sm:$0xff]
    %v560 = vld [vmem:[#allocation2 + $0xb38] sm:$0xff]
    %v561 = vld [vmem:[#allocation2 + $0xb40] sm:$0xf]
    %v562 = vld [vmem:[#allocation2 + $0xb44] sm:$0xff]
    %v563 = vld [vmem:[#allocation2 + $0xb4c] sm:$0xff]
    %v564 = vld [vmem:[#allocation2 + $0xb54] sm:$0xff]
    %v565 = vld [vmem:[#allocation2 + $0xb5c] sm:$0xf]
    %v566 = vld [vmem:[#allocation2 + $0xb60] sm:$0xff]
    %v567 = vld [vmem:[#allocation2 + $0xb68] sm:$0xff]
    %v568 = vld [vmem:[#allocation2 + $0xb70] sm:$0xff]
    %v569 = vld [vmem:[#allocation2 + $0xb78] sm:$0xf]
    %v570 = vld [vmem:[#allocation2 + $0xb7c] sm:$0xff]
    %v571 = vld [vmem:[#allocation2 + $0xb84] sm:$0xff]
    %v572 = vld [vmem:[#allocation2 + $0xb8c] sm:$0xff]
    %v573 = vld [vmem:[#allocation2 + $0xb94] sm:$0xf]
    %v574 = vld [vmem:[#allocation2 + $0xb98] sm:$0xff]
    %v575 = vld [vmem:[#allocation2 + $0xba0] sm:$0xff]
    %v576 = vld [vmem:[#allocation2 + $0xba8] sm:$0xff]
    %v577 = vld [vmem:[#allocation2 + $0xbb0] sm:$0xf]
    %v578 = vld [vmem:[#allocation2 + $0xbb4] sm:$0xff]
    %v579 = vld [vmem:[#allocation2 + $0xbbc] sm:$0xff]
    %v580 = vld [vmem:[#allocation2 + $0xbc4] sm:$0xff]
    %v581 = vld [vmem:[#allocation2 + $0xbcc] sm:$0xf]
    %v582 = vld [vmem:[#allocation2 + $0xbd0] sm:$0xff]
    %v583 = vld [vmem:[#allocation2 + $0xbd8] sm:$0xff]
    %v584 = vld [vmem:[#allocation2 + $0xbe0] sm:$0xff]
    %v585 = vld [vmem:[#allocation2 + $0xbe8] sm:$0xf]
    %v586 = vld [vmem:[#allocation2 + $0xbec] sm:$0xff]
    %v587 = vld [vmem:[#allocation2 + $0xbf4] sm:$0xff]
    %v588 = vld [vmem:[#allocation2 + $0xbfc] sm:$0xff]
    %v589 = vld [vmem:[#allocation2 + $0xc04] sm:$0xf]
    %v590 = vld [vmem:[#allocation2 + $0xc08] sm:$0xff]
    %v591 = vld [vmem:[#allocation2 + $0xc10] sm:$0xff]
    %v592 = vld [vmem:[#allocation2 + $0xc18] sm:$0xff]
    %v593 = vld [vmem:[#allocation2 + $0xc20] sm:$0xf]
    %v594 = vld [vmem:[#allocation2 + $0xc24] sm:$0xff]
    %v595 = vld [vmem:[#allocation2 + $0xc2c] sm:$0xff]
    %v596 = vld [vmem:[#allocation2 + $0xc34] sm:$0xff]
    %v597 = vld [vmem:[#allocation2 + $0xc3c] sm:$0xf]
    %v598 = vld [vmem:[#allocation2 + $0xc40] sm:$0xff]
    %v599 = vld [vmem:[#allocation2 + $0xc48] sm:$0xff]
    %v600 = vld [vmem:[#allocation2 + $0xc50] sm:$0xff]
    %v601 = vld [vmem:[#allocation2 + $0xc58] sm:$0xf]
    %v602 = vld [vmem:[#allocation2 + $0xc5c] sm:$0xff]
    %v603 = vld [vmem:[#allocation2 + $0xc64] sm:$0xff]
    %v604 = vld [vmem:[#allocation2 + $0xc6c] sm:$0xff]
    %v605 = vld [vmem:[#allocation2 + $0xc74] sm:$0xf]
    %v606 = vld [vmem:[#allocation2 + $0xc78] sm:$0xff]
    %v607 = vld [vmem:[#allocation2 + $0xc80] sm:$0xff]
    %v608 = vld [vmem:[#allocation2 + $0xc88] sm:$0xff]
    %v609 = vld [vmem:[#allocation2 + $0xc90] sm:$0xf]
    %v610 = vld [vmem:[#allocation2 + $0xc94] sm:$0xff]
    %v611 = vld [vmem:[#allocation2 + $0xc9c] sm:$0xff]
    %v612 = vld [vmem:[#allocation2 + $0xca4] sm:$0xff]
    %v613 = vld [vmem:[#allocation2 + $0xcac] sm:$0xf]
    %v614 = vld [vmem:[#allocation2 + $0xcb0] sm:$0xff]
    %v615 = vld [vmem:[#allocation2 + $0xcb8] sm:$0xff]
    %v616 = vld [vmem:[#allocation2 + $0xcc0] sm:$0xff]
    %v617 = vld [vmem:[#allocation2 + $0xcc8] sm:$0xf]
    %v618 = vld [vmem:[#allocation2 + $0xccc] sm:$0xff]
    %v619 = vld [vmem:[#allocation2 + $0xcd4] sm:$0xff]
    %v620 = vld [vmem:[#allocation2 + $0xcdc] sm:$0xff]
    %v621 = vld [vmem:[#allocation2 + $0xce4] sm:$0xf]
    %v622 = vld [vmem:[#allocation2 + $0xce8] sm:$0xff]
    %v623 = vld [vmem:[#allocation2 + $0xcf0] sm:$0xff]
    %v624 = vld [vmem:[#allocation2 + $0xcf8] sm:$0xff]
    %v625 = vld [vmem:[#allocation2 + $0xd00] sm:$0xf]
    %v626 = vld [vmem:[#allocation2 + $0xd04] sm:$0xff]
    %v627 = vld [vmem:[#allocation2 + $0xd0c] sm:$0xff]
    %v628 = vld [vmem:[#allocation2 + $0xd14] sm:$0xff]
    %v629 = vld [vmem:[#allocation2 + $0xd1c] sm:$0xf]
    %v630 = vld [vmem:[#allocation2 + $0xd20] sm:$0xff]
    %v631 = vld [vmem:[#allocation2 + $0xd28] sm:$0xff]
    %v632 = vld [vmem:[#allocation2 + $0xd30] sm:$0xff]
    %v633 = vld [vmem:[#allocation2 + $0xd38] sm:$0xf]
    %v634 = vld [vmem:[#allocation2 + $0xd3c] sm:$0xff]
    %v635 = vld [vmem:[#allocation2 + $0xd44] sm:$0xff]
    %v636 = vld [vmem:[#allocation2 + $0xd4c] sm:$0xff]
    %v637 = vld [vmem:[#allocation2 + $0xd54] sm:$0xf]
    %v638 = vld [vmem:[#allocation2 + $0xd58] sm:$0xff]
    %v639 = vld [vmem:[#allocation2 + $0xd60] sm:$0xff]
    %v640 = vld [vmem:[#allocation2 + $0xd68] sm:$0xff]
    %v641 = vld [vmem:[#allocation2 + $0xd70] sm:$0xf]
    %v642 = vld [vmem:[#allocation2 + $0xd74] sm:$0xff]
    %v643 = vld [vmem:[#allocation2 + $0xd7c] sm:$0xff]
    %v644 = vld [vmem:[#allocation2 + $0xd84] sm:$0xff]
    %v645 = vld [vmem:[#allocation2 + $0xd8c] sm:$0xf]
    %v646 = vld [vmem:[#allocation2 + $0xd90] sm:$0xff]
    %v647 = vld [vmem:[#allocation2 + $0xd98] sm:$0xff]
    %v648 = vld [vmem:[#allocation2 + $0xda0] sm:$0xff]
    %v649 = vld [vmem:[#allocation2 + $0xda8] sm:$0xf]
    %v650 = vld [vmem:[#allocation2 + $0xdac] sm:$0xff]
    %v651 = vld [vmem:[#allocation2 + $0xdb4] sm:$0xff]
    %v652 = vld [vmem:[#allocation2 + $0xdbc] sm:$0xff]
    %v653 = vld [vmem:[#allocation2 + $0xdc4] sm:$0xf]
    %v654 = vld [vmem:[#allocation2 + $0xdc8] sm:$0xff]
    %v655 = vld [vmem:[#allocation2 + $0xdd0] sm:$0xff]
    %v656 = vld [vmem:[#allocation2 + $0xdd8] sm:$0xff]
    %v657 = vld [vmem:[#allocation2 + $0xde0] sm:$0xf]
    %v658 = vld [vmem:[#allocation2 + $0xde4] sm:$0xff]
    %v659 = vld [vmem:[#allocation2 + $0xdec] sm:$0xff]
    %v660 = vld [vmem:[#allocation2 + $0xdf4] sm:$0xff]
    %v661 = vld [vmem:[#allocation2 + $0xdfc] sm:$0xf]
    %v662 = vld [vmem:[#allocation4] sm:$0xff]
    %v664 = vlaneseq
    %v665 = vshrl.u32 %v664, 7
    %v666 = vsub.s32 0, %v665
    %v667 = vrot.slane %v662, %v666
    %v668 = vlaneseq
    %v669 = vshrl.u32 %v668, 7
    %v670 = vsub.s32 1, %v669
    %v671 = vrot.slane %v662, %v670
    %v672 = vlaneseq
    %v673 = vshrl.u32 %v672, 7
    %v674 = vsub.s32 2, %v673
    %v675 = vrot.slane %v662, %v674
    %v676 = vlaneseq
    %v677 = vshrl.u32 %v676, 7
    %v678 = vsub.s32 3, %v677
    %v679 = vrot.slane %v662, %v678
    %v680 = vlaneseq
    %v681 = vshrl.u32 %v680, 7
    %v682 = vsub.s32 4, %v681
    %v683 = vrot.slane %v662, %v682
    %v684 = vlaneseq
    %v685 = vshrl.u32 %v684, 7
    %v686 = vsub.s32 5, %v685
    %v687 = vrot.slane %v662, %v686
    %v688 = vlaneseq
    %v689 = vshrl.u32 %v688, 7
    %v690 = vsub.s32 6, %v689
    %v691 = vrot.slane %v662, %v690
    %v1211 = vunpack.c.l.b16 %v150
    %v1212 = vunpack.c.h.b16 %v150
    %v1213 = vunpack.c.l.b16 %v151
    %v1214 = vunpack.c.h.b16 %v151
    %v1215 = vunpack.c.l.b16 %v152
    %v1216 = vunpack.c.h.b16 %v152
    %v1217 = vunpack.c.l.b16 %v153
    %v1218 = vunpack.c.l.b16 %v154
    %v1219 = vunpack.c.h.b16 %v154
    %v1220 = vunpack.c.l.b16 %v155
    %v1221 = vunpack.c.h.b16 %v155
    %v1222 = vunpack.c.l.b16 %v156
    %v1223 = vunpack.c.h.b16 %v156
    %v1224 = vunpack.c.l.b16 %v157
    %v1225 = vunpack.c.l.b16 %v158
    %v1226 = vunpack.c.h.b16 %v158
    %v1227 = vunpack.c.l.b16 %v159
    %v1228 = vunpack.c.h.b16 %v159
    %v1229 = vunpack.c.l.b16 %v160
    %v1230 = vunpack.c.h.b16 %v160
    %v1231 = vunpack.c.l.b16 %v161
    %v1232 = vunpack.c.l.b16 %v162
    %v1233 = vunpack.c.h.b16 %v162
    %v1234 = vunpack.c.l.b16 %v163
    %v1235 = vunpack.c.h.b16 %v163
    %v1236 = vunpack.c.l.b16 %v164
    %v1237 = vunpack.c.h.b16 %v164
    %v1238 = vunpack.c.l.b16 %v165
    %v1239 = vunpack.c.l.b16 %v166
    %v1240 = vunpack.c.h.b16 %v166
    %v1241 = vunpack.c.l.b16 %v167
    %v1242 = vunpack.c.h.b16 %v167
    %v1243 = vunpack.c.l.b16 %v168
    %v1244 = vunpack.c.h.b16 %v168
    %v1245 = vunpack.c.l.b16 %v169
    %v1246 = vunpack.c.l.b16 %v170
    %v1247 = vunpack.c.h.b16 %v170
    %v1248 = vunpack.c.l.b16 %v171
    %v1249 = vunpack.c.h.b16 %v171
    %v1250 = vunpack.c.l.b16 %v172
    %v1251 = vunpack.c.h.b16 %v172
    %v1252 = vunpack.c.l.b16 %v173
    %v1253 = vunpack.c.l.b16 %v174
    %v1254 = vunpack.c.h.b16 %v174
    %v1255 = vunpack.c.l.b16 %v175
    %v1256 = vunpack.c.h.b16 %v175
    %v1257 = vunpack.c.l.b16 %v176
    %v1258 = vunpack.c.h.b16 %v176
    %v1259 = vunpack.c.l.b16 %v177
    %v1260 = vunpack.c.l.b16 %v178
    %v1261 = vunpack.c.h.b16 %v178
    %v1262 = vunpack.c.l.b16 %v179
    %v1263 = vunpack.c.h.b16 %v179
    %v1264 = vunpack.c.l.b16 %v180
    %v1265 = vunpack.c.h.b16 %v180
    %v1266 = vunpack.c.l.b16 %v181
    %v1267 = vunpack.c.l.b16 %v182
    %v1268 = vunpack.c.h.b16 %v182
    %v1269 = vunpack.c.l.b16 %v183
    %v1270 = vunpack.c.h.b16 %v183
    %v1271 = vunpack.c.l.b16 %v184
    %v1272 = vunpack.c.h.b16 %v184
    %v1273 = vunpack.c.l.b16 %v185
    %v1274 = vunpack.c.l.b16 %v186
    %v1275 = vunpack.c.h.b16 %v186
    %v1276 = vunpack.c.l.b16 %v187
    %v1277 = vunpack.c.h.b16 %v187
    %v1278 = vunpack.c.l.b16 %v188
    %v1279 = vunpack.c.h.b16 %v188
    %v1280 = vunpack.c.l.b16 %v189
    %v1281 = vunpack.c.l.b16 %v190
    %v1282 = vunpack.c.h.b16 %v190
    %v1283 = vunpack.c.l.b16 %v191
    %v1284 = vunpack.c.h.b16 %v191
    %v1285 = vunpack.c.l.b16 %v192
    %v1286 = vunpack.c.h.b16 %v192
    %v1287 = vunpack.c.l.b16 %v193
    %v1288 = vunpack.c.l.b16 %v194
    %v1289 = vunpack.c.h.b16 %v194
    %v1290 = vunpack.c.l.b16 %v195
    %v1291 = vunpack.c.h.b16 %v195
    %v1292 = vunpack.c.l.b16 %v196
    %v1293 = vunpack.c.h.b16 %v196
    %v1294 = vunpack.c.l.b16 %v197
    %v1295 = vunpack.c.l.b16 %v198
    %v1296 = vunpack.c.h.b16 %v198
    %v1297 = vunpack.c.l.b16 %v199
    %v1298 = vunpack.c.h.b16 %v199
    %v1299 = vunpack.c.l.b16 %v200
    %v1300 = vunpack.c.h.b16 %v200
    %v1301 = vunpack.c.l.b16 %v201
    %v1302 = vunpack.c.l.b16 %v202
    %v1303 = vunpack.c.h.b16 %v202
    %v1304 = vunpack.c.l.b16 %v203
    %v1305 = vunpack.c.h.b16 %v203
    %v1306 = vunpack.c.l.b16 %v204
    %v1307 = vunpack.c.h.b16 %v204
    %v1308 = vunpack.c.l.b16 %v205
    %v1309 = vunpack.c.l.b16 %v206
    %v1310 = vunpack.c.h.b16 %v206
    %v1311 = vunpack.c.l.b16 %v207
    %v1312 = vunpack.c.h.b16 %v207
    %v1313 = vunpack.c.l.b16 %v208
    %v1314 = vunpack.c.h.b16 %v208
    %v1315 = vunpack.c.l.b16 %v209
    %v1316 = vunpack.c.l.b16 %v210
    %v1317 = vunpack.c.h.b16 %v210
    %v1318 = vunpack.c.l.b16 %v211
    %v1319 = vunpack.c.h.b16 %v211
    %v1320 = vunpack.c.l.b16 %v212
    %v1321 = vunpack.c.h.b16 %v212
    %v1322 = vunpack.c.l.b16 %v213
    %v1323 = vunpack.c.l.b16 %v214
    %v1324 = vunpack.c.h.b16 %v214
    %v1325 = vunpack.c.l.b16 %v215
    %v1326 = vunpack.c.h.b16 %v215
    %v1327 = vunpack.c.l.b16 %v216
    %v1328 = vunpack.c.h.b16 %v216
    %v1329 = vunpack.c.l.b16 %v217
    %v1330 = vunpack.c.l.b16 %v218
    %v1331 = vunpack.c.h.b16 %v218
    %v1332 = vunpack.c.l.b16 %v219
    %v1333 = vunpack.c.h.b16 %v219
    %v1334 = vunpack.c.l.b16 %v220
    %v1335 = vunpack.c.h.b16 %v220
    %v1336 = vunpack.c.l.b16 %v221
    %v1337 = vunpack.c.l.b16 %v222
    %v1338 = vunpack.c.h.b16 %v222
    %v1339 = vunpack.c.l.b16 %v223
    %v1340 = vunpack.c.h.b16 %v223
    %v1341 = vunpack.c.l.b16 %v224
    %v1342 = vunpack.c.h.b16 %v224
    %v1343 = vunpack.c.l.b16 %v225
    %v1344 = vunpack.c.l.b16 %v226
    %v1345 = vunpack.c.h.b16 %v226
    %v1346 = vunpack.c.l.b16 %v227
    %v1347 = vunpack.c.h.b16 %v227
    %v1348 = vunpack.c.l.b16 %v228
    %v1349 = vunpack.c.h.b16 %v228
    %v1350 = vunpack.c.l.b16 %v229
    %v1351 = vunpack.c.l.b16 %v230
    %v1352 = vunpack.c.h.b16 %v230
    %v1353 = vunpack.c.l.b16 %v231
    %v1354 = vunpack.c.h.b16 %v231
    %v1355 = vunpack.c.l.b16 %v232
    %v1356 = vunpack.c.h.b16 %v232
    %v1357 = vunpack.c.l.b16 %v233
    %v1358 = vunpack.c.l.b16 %v234
    %v1359 = vunpack.c.h.b16 %v234
    %v1360 = vunpack.c.l.b16 %v235
    %v1361 = vunpack.c.h.b16 %v235
    %v1362 = vunpack.c.l.b16 %v236
    %v1363 = vunpack.c.h.b16 %v236
    %v1364 = vunpack.c.l.b16 %v237
    %v1365 = vunpack.c.l.b16 %v238
    %v1366 = vunpack.c.h.b16 %v238
    %v1367 = vunpack.c.l.b16 %v239
    %v1368 = vunpack.c.h.b16 %v239
    %v1369 = vunpack.c.l.b16 %v240
    %v1370 = vunpack.c.h.b16 %v240
    %v1371 = vunpack.c.l.b16 %v241
    %v1372 = vunpack.c.l.b16 %v242
    %v1373 = vunpack.c.h.b16 %v242
    %v1374 = vunpack.c.l.b16 %v243
    %v1375 = vunpack.c.h.b16 %v243
    %v1376 = vunpack.c.l.b16 %v244
    %v1377 = vunpack.c.h.b16 %v244
    %v1378 = vunpack.c.l.b16 %v245
    %v1379 = vunpack.c.l.b16 %v246
    %v1380 = vunpack.c.h.b16 %v246
    %v1381 = vunpack.c.l.b16 %v247
    %v1382 = vunpack.c.h.b16 %v247
    %v1383 = vunpack.c.l.b16 %v248
    %v1384 = vunpack.c.h.b16 %v248
    %v1385 = vunpack.c.l.b16 %v249
    %v1386 = vunpack.c.l.b16 %v250
    %v1387 = vunpack.c.h.b16 %v250
    %v1388 = vunpack.c.l.b16 %v251
    %v1389 = vunpack.c.h.b16 %v251
    %v1390 = vunpack.c.l.b16 %v252
    %v1391 = vunpack.c.h.b16 %v252
    %v1392 = vunpack.c.l.b16 %v253
    %v1393 = vunpack.c.l.b16 %v254
    %v1394 = vunpack.c.h.b16 %v254
    %v1395 = vunpack.c.l.b16 %v255
    %v1396 = vunpack.c.h.b16 %v255
    %v1397 = vunpack.c.l.b16 %v256
    %v1398 = vunpack.c.h.b16 %v256
    %v1399 = vunpack.c.l.b16 %v257
    %v1400 = vunpack.c.l.b16 %v258
    %v1401 = vunpack.c.h.b16 %v258
    %v1402 = vunpack.c.l.b16 %v259
    %v1403 = vunpack.c.h.b16 %v259
    %v1404 = vunpack.c.l.b16 %v260
    %v1405 = vunpack.c.h.b16 %v260
    %v1406 = vunpack.c.l.b16 %v261
    %v1407 = vunpack.c.l.b16 %v262
    %v1408 = vunpack.c.h.b16 %v262
    %v1409 = vunpack.c.l.b16 %v263
    %v1410 = vunpack.c.h.b16 %v263
    %v1411 = vunpack.c.l.b16 %v264
    %v1412 = vunpack.c.h.b16 %v264
    %v1413 = vunpack.c.l.b16 %v265
    %v1414 = vunpack.c.l.b16 %v266
    %v1415 = vunpack.c.h.b16 %v266
    %v1416 = vunpack.c.l.b16 %v267
    %v1417 = vunpack.c.h.b16 %v267
    %v1418 = vunpack.c.l.b16 %v268
    %v1419 = vunpack.c.h.b16 %v268
    %v1420 = vunpack.c.l.b16 %v269
    %v1421 = vunpack.c.l.b16 %v270
    %v1422 = vunpack.c.h.b16 %v270
    %v1423 = vunpack.c.l.b16 %v271
    %v1424 = vunpack.c.h.b16 %v271
    %v1425 = vunpack.c.l.b16 %v272
    %v1426 = vunpack.c.h.b16 %v272
    %v1427 = vunpack.c.l.b16 %v273
    %v1428 = vunpack.c.l.b16 %v274
    %v1429 = vunpack.c.h.b16 %v274
    %v1430 = vunpack.c.l.b16 %v275
    %v1431 = vunpack.c.h.b16 %v275
    %v1432 = vunpack.c.l.b16 %v276
    %v1433 = vunpack.c.h.b16 %v276
    %v1434 = vunpack.c.l.b16 %v277
    %v1435 = vunpack.c.l.b16 %v278
    %v1436 = vunpack.c.h.b16 %v278
    %v1437 = vunpack.c.l.b16 %v279
    %v1438 = vunpack.c.h.b16 %v279
    %v1439 = vunpack.c.l.b16 %v280
    %v1440 = vunpack.c.h.b16 %v280
    %v1441 = vunpack.c.l.b16 %v281
    %v1442 = vunpack.c.l.b16 %v282
    %v1443 = vunpack.c.h.b16 %v282
    %v1444 = vunpack.c.l.b16 %v283
    %v1445 = vunpack.c.h.b16 %v283
    %v1446 = vunpack.c.l.b16 %v284
    %v1447 = vunpack.c.h.b16 %v284
    %v1448 = vunpack.c.l.b16 %v285
    %v1449 = vunpack.c.l.b16 %v286
    %v1450 = vunpack.c.h.b16 %v286
    %v1451 = vunpack.c.l.b16 %v287
    %v1452 = vunpack.c.h.b16 %v287
    %v1453 = vunpack.c.l.b16 %v288
    %v1454 = vunpack.c.h.b16 %v288
    %v1455 = vunpack.c.l.b16 %v289
    %v1456 = vunpack.c.l.b16 %v290
    %v1457 = vunpack.c.h.b16 %v290
    %v1458 = vunpack.c.l.b16 %v291
    %v1459 = vunpack.c.h.b16 %v291
    %v1460 = vunpack.c.l.b16 %v292
    %v1461 = vunpack.c.h.b16 %v292
    %v1462 = vunpack.c.l.b16 %v293
    %v1463 = vunpack.c.l.b16 %v294
    %v1464 = vunpack.c.h.b16 %v294
    %v1465 = vunpack.c.l.b16 %v295
    %v1466 = vunpack.c.h.b16 %v295
    %v1467 = vunpack.c.l.b16 %v296
    %v1468 = vunpack.c.h.b16 %v296
    %v1469 = vunpack.c.l.b16 %v297
    %v1470 = vunpack.c.l.b16 %v298
    %v1471 = vunpack.c.h.b16 %v298
    %v1472 = vunpack.c.l.b16 %v299
    %v1473 = vunpack.c.h.b16 %v299
    %v1474 = vunpack.c.l.b16 %v300
    %v1475 = vunpack.c.h.b16 %v300
    %v1476 = vunpack.c.l.b16 %v301
    %v1477 = vunpack.c.l.b16 %v302
    %v1478 = vunpack.c.h.b16 %v302
    %v1479 = vunpack.c.l.b16 %v303
    %v1480 = vunpack.c.h.b16 %v303
    %v1481 = vunpack.c.l.b16 %v304
    %v1482 = vunpack.c.h.b16 %v304
    %v1483 = vunpack.c.l.b16 %v305
    %v1484 = vunpack.c.l.b16 %v306
    %v1485 = vunpack.c.h.b16 %v306
    %v1486 = vunpack.c.l.b16 %v307
    %v1487 = vunpack.c.h.b16 %v307
    %v1488 = vunpack.c.l.b16 %v308
    %v1489 = vunpack.c.h.b16 %v308
    %v1490 = vunpack.c.l.b16 %v309
    %v1491 = vunpack.c.l.b16 %v310
    %v1492 = vunpack.c.h.b16 %v310
    %v1493 = vunpack.c.l.b16 %v311
    %v1494 = vunpack.c.h.b16 %v311
    %v1495 = vunpack.c.l.b16 %v312
    %v1496 = vunpack.c.h.b16 %v312
    %v1497 = vunpack.c.l.b16 %v313
    %v1498 = vunpack.c.l.b16 %v314
    %v1499 = vunpack.c.h.b16 %v314
    %v1500 = vunpack.c.l.b16 %v315
    %v1501 = vunpack.c.h.b16 %v315
    %v1502 = vunpack.c.l.b16 %v316
    %v1503 = vunpack.c.h.b16 %v316
    %v1504 = vunpack.c.l.b16 %v317
    %v1505 = vunpack.c.l.b16 %v318
    %v1506 = vunpack.c.h.b16 %v318
    %v1507 = vunpack.c.l.b16 %v319
    %v1508 = vunpack.c.h.b16 %v319
    %v1509 = vunpack.c.l.b16 %v320
    %v1510 = vunpack.c.h.b16 %v320
    %v1511 = vunpack.c.l.b16 %v321
    %v1512 = vunpack.c.l.b16 %v322
    %v1513 = vunpack.c.h.b16 %v322
    %v1514 = vunpack.c.l.b16 %v323
    %v1515 = vunpack.c.h.b16 %v323
    %v1516 = vunpack.c.l.b16 %v324
    %v1517 = vunpack.c.h.b16 %v324
    %v1518 = vunpack.c.l.b16 %v325
    %v1519 = vunpack.c.l.b16 %v326
    %v1520 = vunpack.c.h.b16 %v326
    %v1521 = vunpack.c.l.b16 %v327
    %v1522 = vunpack.c.h.b16 %v327
    %v1523 = vunpack.c.l.b16 %v328
    %v1524 = vunpack.c.h.b16 %v328
    %v1525 = vunpack.c.l.b16 %v329
    %v1526 = vunpack.c.l.b16 %v330
    %v1527 = vunpack.c.h.b16 %v330
    %v1528 = vunpack.c.l.b16 %v331
    %v1529 = vunpack.c.h.b16 %v331
    %v1530 = vunpack.c.l.b16 %v332
    %v1531 = vunpack.c.h.b16 %v332
    %v1532 = vunpack.c.l.b16 %v333
    %v1533 = vunpack.c.l.b16 %v334
    %v1534 = vunpack.c.h.b16 %v334
    %v1535 = vunpack.c.l.b16 %v335
    %v1536 = vunpack.c.h.b16 %v335
    %v1537 = vunpack.c.l.b16 %v336
    %v1538 = vunpack.c.h.b16 %v336
    %v1539 = vunpack.c.l.b16 %v337
    %v1540 = vunpack.c.l.b16 %v338
    %v1541 = vunpack.c.h.b16 %v338
    %v1542 = vunpack.c.l.b16 %v339
    %v1543 = vunpack.c.h.b16 %v339
    %v1544 = vunpack.c.l.b16 %v340
    %v1545 = vunpack.c.h.b16 %v340
    %v1546 = vunpack.c.l.b16 %v341
    %v1547 = vunpack.c.l.b16 %v342
    %v1548 = vunpack.c.h.b16 %v342
    %v1549 = vunpack.c.l.b16 %v343
    %v1550 = vunpack.c.h.b16 %v343
    %v1551 = vunpack.c.l.b16 %v344
    %v1552 = vunpack.c.h.b16 %v344
    %v1553 = vunpack.c.l.b16 %v345
    %v1554 = vunpack.c.l.b16 %v346
    %v1555 = vunpack.c.h.b16 %v346
    %v1556 = vunpack.c.l.b16 %v347
    %v1557 = vunpack.c.h.b16 %v347
    %v1558 = vunpack.c.l.b16 %v348
    %v1559 = vunpack.c.h.b16 %v348
    %v1560 = vunpack.c.l.b16 %v349
    %v1561 = vunpack.c.l.b16 %v350
    %v1562 = vunpack.c.h.b16 %v350
    %v1563 = vunpack.c.l.b16 %v351
    %v1564 = vunpack.c.h.b16 %v351
    %v1565 = vunpack.c.l.b16 %v352
    %v1566 = vunpack.c.h.b16 %v352
    %v1567 = vunpack.c.l.b16 %v353
    %v1568 = vunpack.c.l.b16 %v354
    %v1569 = vunpack.c.h.b16 %v354
    %v1570 = vunpack.c.l.b16 %v355
    %v1571 = vunpack.c.h.b16 %v355
    %v1572 = vunpack.c.l.b16 %v356
    %v1573 = vunpack.c.h.b16 %v356
    %v1574 = vunpack.c.l.b16 %v357
    %v1575 = vunpack.c.l.b16 %v358
    %v1576 = vunpack.c.h.b16 %v358
    %v1577 = vunpack.c.l.b16 %v359
    %v1578 = vunpack.c.h.b16 %v359
    %v1579 = vunpack.c.l.b16 %v360
    %v1580 = vunpack.c.h.b16 %v360
    %v1581 = vunpack.c.l.b16 %v361
    %v1582 = vunpack.c.l.b16 %v362
    %v1583 = vunpack.c.h.b16 %v362
    %v1584 = vunpack.c.l.b16 %v363
    %v1585 = vunpack.c.h.b16 %v363
    %v1586 = vunpack.c.l.b16 %v364
    %v1587 = vunpack.c.h.b16 %v364
    %v1588 = vunpack.c.l.b16 %v365
    %v1589 = vunpack.c.l.b16 %v366
    %v1590 = vunpack.c.h.b16 %v366
    %v1591 = vunpack.c.l.b16 %v367
    %v1592 = vunpack.c.h.b16 %v367
    %v1593 = vunpack.c.l.b16 %v368
    %v1594 = vunpack.c.h.b16 %v368
    %v1595 = vunpack.c.l.b16 %v369
    %v1596 = vunpack.c.l.b16 %v370
    %v1597 = vunpack.c.h.b16 %v370
    %v1598 = vunpack.c.l.b16 %v371
    %v1599 = vunpack.c.h.b16 %v371
    %v1600 = vunpack.c.l.b16 %v372
    %v1601 = vunpack.c.h.b16 %v372
    %v1602 = vunpack.c.l.b16 %v373
    %v1603 = vunpack.c.l.b16 %v374
    %v1604 = vunpack.c.h.b16 %v374
    %v1605 = vunpack.c.l.b16 %v375
    %v1606 = vunpack.c.h.b16 %v375
    %v1607 = vunpack.c.l.b16 %v376
    %v1608 = vunpack.c.h.b16 %v376
    %v1609 = vunpack.c.l.b16 %v377
    %v1610 = vunpack.c.l.b16 %v378
    %v1611 = vunpack.c.h.b16 %v378
    %v1612 = vunpack.c.l.b16 %v379
    %v1613 = vunpack.c.h.b16 %v379
    %v1614 = vunpack.c.l.b16 %v380
    %v1615 = vunpack.c.h.b16 %v380
    %v1616 = vunpack.c.l.b16 %v381
    %v1617 = vunpack.c.l.b16 %v382
    %v1618 = vunpack.c.h.b16 %v382
    %v1619 = vunpack.c.l.b16 %v383
    %v1620 = vunpack.c.h.b16 %v383
    %v1621 = vunpack.c.l.b16 %v384
    %v1622 = vunpack.c.h.b16 %v384
    %v1623 = vunpack.c.l.b16 %v385
    %v1624 = vunpack.c.l.b16 %v386
    %v1625 = vunpack.c.h.b16 %v386
    %v1626 = vunpack.c.l.b16 %v387
    %v1627 = vunpack.c.h.b16 %v387
    %v1628 = vunpack.c.l.b16 %v388
    %v1629 = vunpack.c.h.b16 %v388
    %v1630 = vunpack.c.l.b16 %v389
    %v1631 = vunpack.c.l.b16 %v390
    %v1632 = vunpack.c.h.b16 %v390
    %v1633 = vunpack.c.l.b16 %v391
    %v1634 = vunpack.c.h.b16 %v391
    %v1635 = vunpack.c.l.b16 %v392
    %v1636 = vunpack.c.h.b16 %v392
    %v1637 = vunpack.c.l.b16 %v393
    %v1638 = vunpack.c.l.b16 %v394
    %v1639 = vunpack.c.h.b16 %v394
    %v1640 = vunpack.c.l.b16 %v395
    %v1641 = vunpack.c.h.b16 %v395
    %v1642 = vunpack.c.l.b16 %v396
    %v1643 = vunpack.c.h.b16 %v396
    %v1644 = vunpack.c.l.b16 %v397
    %v1645 = vunpack.c.l.b16 %v398
    %v1646 = vunpack.c.h.b16 %v398
    %v1647 = vunpack.c.l.b16 %v399
    %v1648 = vunpack.c.h.b16 %v399
    %v1649 = vunpack.c.l.b16 %v400
    %v1650 = vunpack.c.h.b16 %v400
    %v1651 = vunpack.c.l.b16 %v401
    %v1652 = vunpack.c.l.b16 %v402
    %v1653 = vunpack.c.h.b16 %v402
    %v1654 = vunpack.c.l.b16 %v403
    %v1655 = vunpack.c.h.b16 %v403
    %v1656 = vunpack.c.l.b16 %v404
    %v1657 = vunpack.c.h.b16 %v404
    %v1658 = vunpack.c.l.b16 %v405
    %v1659 = vunpack.c.l.b16 %v406
    %v1660 = vunpack.c.h.b16 %v406
    %v1661 = vunpack.c.l.b16 %v407
    %v1662 = vunpack.c.h.b16 %v407
    %v1663 = vunpack.c.l.b16 %v408
    %v1664 = vunpack.c.h.b16 %v408
    %v1665 = vunpack.c.l.b16 %v409
    %v1666 = vunpack.c.l.b16 %v410
    %v1667 = vunpack.c.h.b16 %v410
    %v1668 = vunpack.c.l.b16 %v411
    %v1669 = vunpack.c.h.b16 %v411
    %v1670 = vunpack.c.l.b16 %v412
    %v1671 = vunpack.c.h.b16 %v412
    %v1672 = vunpack.c.l.b16 %v413
    %v1673 = vunpack.c.l.b16 %v414
    %v1674 = vunpack.c.h.b16 %v414
    %v1675 = vunpack.c.l.b16 %v415
    %v1676 = vunpack.c.h.b16 %v415
    %v1677 = vunpack.c.l.b16 %v416
    %v1678 = vunpack.c.h.b16 %v416
    %v1679 = vunpack.c.l.b16 %v417
    %v1680 = vunpack.c.l.b16 %v418
    %v1681 = vunpack.c.h.b16 %v418
    %v1682 = vunpack.c.l.b16 %v419
    %v1683 = vunpack.c.h.b16 %v419
    %v1684 = vunpack.c.l.b16 %v420
    %v1685 = vunpack.c.h.b16 %v420
    %v1686 = vunpack.c.l.b16 %v421
    %v1687 = vunpack.c.l.b16 %v422
    %v1688 = vunpack.c.h.b16 %v422
    %v1689 = vunpack.c.l.b16 %v423
    %v1690 = vunpack.c.h.b16 %v423
    %v1691 = vunpack.c.l.b16 %v424
    %v1692 = vunpack.c.h.b16 %v424
    %v1693 = vunpack.c.l.b16 %v425
    %v1694 = vunpack.c.l.b16 %v426
    %v1695 = vunpack.c.h.b16 %v426
    %v1696 = vunpack.c.l.b16 %v427
    %v1697 = vunpack.c.h.b16 %v427
    %v1698 = vunpack.c.l.b16 %v428
    %v1699 = vunpack.c.h.b16 %v428
    %v1700 = vunpack.c.l.b16 %v429
    %v1701 = vunpack.c.l.b16 %v430
    %v1702 = vunpack.c.h.b16 %v430
    %v1703 = vunpack.c.l.b16 %v431
    %v1704 = vunpack.c.h.b16 %v431
    %v1705 = vunpack.c.l.b16 %v432
    %v1706 = vunpack.c.h.b16 %v432
    %v1707 = vunpack.c.l.b16 %v433
    %v1708 = vunpack.c.l.b16 %v434
    %v1709 = vunpack.c.h.b16 %v434
    %v1710 = vunpack.c.l.b16 %v435
    %v1711 = vunpack.c.h.b16 %v435
    %v1712 = vunpack.c.l.b16 %v436
    %v1713 = vunpack.c.h.b16 %v436
    %v1714 = vunpack.c.l.b16 %v437
    %v1715 = vunpack.c.l.b16 %v438
    %v1716 = vunpack.c.h.b16 %v438
    %v1717 = vunpack.c.l.b16 %v439
    %v1718 = vunpack.c.h.b16 %v439
    %v1719 = vunpack.c.l.b16 %v440
    %v1720 = vunpack.c.h.b16 %v440
    %v1721 = vunpack.c.l.b16 %v441
    %v1722 = vunpack.c.l.b16 %v442
    %v1723 = vunpack.c.h.b16 %v442
    %v1724 = vunpack.c.l.b16 %v443
    %v1725 = vunpack.c.h.b16 %v443
    %v1726 = vunpack.c.l.b16 %v444
    %v1727 = vunpack.c.h.b16 %v444
    %v1728 = vunpack.c.l.b16 %v445
    %v1729 = vunpack.c.l.b16 %v446
    %v1730 = vunpack.c.h.b16 %v446
    %v1731 = vunpack.c.l.b16 %v447
    %v1732 = vunpack.c.h.b16 %v447
    %v1733 = vunpack.c.l.b16 %v448
    %v1734 = vunpack.c.h.b16 %v448
    %v1735 = vunpack.c.l.b16 %v449
    %v1736 = vunpack.c.l.b16 %v450
    %v1737 = vunpack.c.h.b16 %v450
    %v1738 = vunpack.c.l.b16 %v451
    %v1739 = vunpack.c.h.b16 %v451
    %v1740 = vunpack.c.l.b16 %v452
    %v1741 = vunpack.c.h.b16 %v452
    %v1742 = vunpack.c.l.b16 %v453
    %v1743 = vunpack.c.l.b16 %v454
    %v1744 = vunpack.c.h.b16 %v454
    %v1745 = vunpack.c.l.b16 %v455
    %v1746 = vunpack.c.h.b16 %v455
    %v1747 = vunpack.c.l.b16 %v456
    %v1748 = vunpack.c.h.b16 %v456
    %v1749 = vunpack.c.l.b16 %v457
    %v1750 = vunpack.c.l.b16 %v458
    %v1751 = vunpack.c.h.b16 %v458
    %v1752 = vunpack.c.l.b16 %v459
    %v1753 = vunpack.c.h.b16 %v459
    %v1754 = vunpack.c.l.b16 %v460
    %v1755 = vunpack.c.h.b16 %v460
    %v1756 = vunpack.c.l.b16 %v461
    %v1757 = vunpack.c.l.b16 %v462
    %v1758 = vunpack.c.h.b16 %v462
    %v1759 = vunpack.c.l.b16 %v463
    %v1760 = vunpack.c.h.b16 %v463
    %v1761 = vunpack.c.l.b16 %v464
    %v1762 = vunpack.c.h.b16 %v464
    %v1763 = vunpack.c.l.b16 %v465
    %v1764 = vunpack.c.l.b16 %v466
    %v1765 = vunpack.c.h.b16 %v466
    %v1766 = vunpack.c.l.b16 %v467
    %v1767 = vunpack.c.h.b16 %v467
    %v1768 = vunpack.c.l.b16 %v468
    %v1769 = vunpack.c.h.b16 %v468
    %v1770 = vunpack.c.l.b16 %v469
    %v1771 = vunpack.c.l.b16 %v470
    %v1772 = vunpack.c.h.b16 %v470
    %v1773 = vunpack.c.l.b16 %v471
    %v1774 = vunpack.c.h.b16 %v471
    %v1775 = vunpack.c.l.b16 %v472
    %v1776 = vunpack.c.h.b16 %v472
    %v1777 = vunpack.c.l.b16 %v473
    %v1778 = vunpack.c.l.b16 %v474
    %v1779 = vunpack.c.h.b16 %v474
    %v1780 = vunpack.c.l.b16 %v475
    %v1781 = vunpack.c.h.b16 %v475
    %v1782 = vunpack.c.l.b16 %v476
    %v1783 = vunpack.c.h.b16 %v476
    %v1784 = vunpack.c.l.b16 %v477
    %v1785 = vunpack.c.l.b16 %v478
    %v1786 = vunpack.c.h.b16 %v478
    %v1787 = vunpack.c.l.b16 %v479
    %v1788 = vunpack.c.h.b16 %v479
    %v1789 = vunpack.c.l.b16 %v480
    %v1790 = vunpack.c.h.b16 %v480
    %v1791 = vunpack.c.l.b16 %v481
    %v1792 = vunpack.c.l.b16 %v482
    %v1793 = vunpack.c.h.b16 %v482
    %v1794 = vunpack.c.l.b16 %v483
    %v1795 = vunpack.c.h.b16 %v483
    %v1796 = vunpack.c.l.b16 %v484
    %v1797 = vunpack.c.h.b16 %v484
    %v1798 = vunpack.c.l.b16 %v485
    %v1799 = vunpack.c.l.b16 %v486
    %v1800 = vunpack.c.h.b16 %v486
    %v1801 = vunpack.c.l.b16 %v487
    %v1802 = vunpack.c.h.b16 %v487
    %v1803 = vunpack.c.l.b16 %v488
    %v1804 = vunpack.c.h.b16 %v488
    %v1805 = vunpack.c.l.b16 %v489
    %v1806 = vunpack.c.l.b16 %v490
    %v1807 = vunpack.c.h.b16 %v490
    %v1808 = vunpack.c.l.b16 %v491
    %v1809 = vunpack.c.h.b16 %v491
    %v1810 = vunpack.c.l.b16 %v492
    %v1811 = vunpack.c.h.b16 %v492
    %v1812 = vunpack.c.l.b16 %v493
    %v1813 = vunpack.c.l.b16 %v494
    %v1814 = vunpack.c.h.b16 %v494
    %v1815 = vunpack.c.l.b16 %v495
    %v1816 = vunpack.c.h.b16 %v495
    %v1817 = vunpack.c.l.b16 %v496
    %v1818 = vunpack.c.h.b16 %v496
    %v1819 = vunpack.c.l.b16 %v497
    %v1820 = vunpack.c.l.b16 %v498
    %v1821 = vunpack.c.h.b16 %v498
    %v1822 = vunpack.c.l.b16 %v499
    %v1823 = vunpack.c.h.b16 %v499
    %v1824 = vunpack.c.l.b16 %v500
    %v1825 = vunpack.c.h.b16 %v500
    %v1826 = vunpack.c.l.b16 %v501
    %v1827 = vunpack.c.l.b16 %v502
    %v1828 = vunpack.c.h.b16 %v502
    %v1829 = vunpack.c.l.b16 %v503
    %v1830 = vunpack.c.h.b16 %v503
    %v1831 = vunpack.c.l.b16 %v504
    %v1832 = vunpack.c.h.b16 %v504
    %v1833 = vunpack.c.l.b16 %v505
    %v1834 = vunpack.c.l.b16 %v506
    %v1835 = vunpack.c.h.b16 %v506
    %v1836 = vunpack.c.l.b16 %v507
    %v1837 = vunpack.c.h.b16 %v507
    %v1838 = vunpack.c.l.b16 %v508
    %v1839 = vunpack.c.h.b16 %v508
    %v1840 = vunpack.c.l.b16 %v509
    %v1841 = vunpack.c.l.b16 %v510
    %v1842 = vunpack.c.h.b16 %v510
    %v1843 = vunpack.c.l.b16 %v511
    %v1844 = vunpack.c.h.b16 %v511
    %v1845 = vunpack.c.l.b16 %v512
    %v1846 = vunpack.c.h.b16 %v512
    %v1847 = vunpack.c.l.b16 %v513
    %v1848 = vunpack.c.l.b16 %v514
    %v1849 = vunpack.c.h.b16 %v514
    %v1850 = vunpack.c.l.b16 %v515
    %v1851 = vunpack.c.h.b16 %v515
    %v1852 = vunpack.c.l.b16 %v516
    %v1853 = vunpack.c.h.b16 %v516
    %v1854 = vunpack.c.l.b16 %v517
    %v1855 = vunpack.c.l.b16 %v518
    %v1856 = vunpack.c.h.b16 %v518
    %v1857 = vunpack.c.l.b16 %v519
    %v1858 = vunpack.c.h.b16 %v519
    %v1859 = vunpack.c.l.b16 %v520
    %v1860 = vunpack.c.h.b16 %v520
    %v1861 = vunpack.c.l.b16 %v521
    %v1862 = vunpack.c.l.b16 %v522
    %v1863 = vunpack.c.h.b16 %v522
    %v1864 = vunpack.c.l.b16 %v523
    %v1865 = vunpack.c.h.b16 %v523
    %v1866 = vunpack.c.l.b16 %v524
    %v1867 = vunpack.c.h.b16 %v524
    %v1868 = vunpack.c.l.b16 %v525
    %v1869 = vunpack.c.l.b16 %v526
    %v1870 = vunpack.c.h.b16 %v526
    %v1871 = vunpack.c.l.b16 %v527
    %v1872 = vunpack.c.h.b16 %v527
    %v1873 = vunpack.c.l.b16 %v528
    %v1874 = vunpack.c.h.b16 %v528
    %v1875 = vunpack.c.l.b16 %v529
    %v1876 = vunpack.c.l.b16 %v530
    %v1877 = vunpack.c.h.b16 %v530
    %v1878 = vunpack.c.l.b16 %v531
    %v1879 = vunpack.c.h.b16 %v531
    %v1880 = vunpack.c.l.b16 %v532
    %v1881 = vunpack.c.h.b16 %v532
    %v1882 = vunpack.c.l.b16 %v533
    %v1883 = vunpack.c.l.b16 %v534
    %v1884 = vunpack.c.h.b16 %v534
    %v1885 = vunpack.c.l.b16 %v535
    %v1886 = vunpack.c.h.b16 %v535
    %v1887 = vunpack.c.l.b16 %v536
    %v1888 = vunpack.c.h.b16 %v536
    %v1889 = vunpack.c.l.b16 %v537
    %v1890 = vunpack.c.l.b16 %v538
    %v1891 = vunpack.c.h.b16 %v538
    %v1892 = vunpack.c.l.b16 %v539
    %v1893 = vunpack.c.h.b16 %v539
    %v1894 = vunpack.c.l.b16 %v540
    %v1895 = vunpack.c.h.b16 %v540
    %v1896 = vunpack.c.l.b16 %v541
    %v1897 = vunpack.c.l.b16 %v542
    %v1898 = vunpack.c.h.b16 %v542
    %v1899 = vunpack.c.l.b16 %v543
    %v1900 = vunpack.c.h.b16 %v543
    %v1901 = vunpack.c.l.b16 %v544
    %v1902 = vunpack.c.h.b16 %v544
    %v1903 = vunpack.c.l.b16 %v545
    %v1904 = vunpack.c.l.b16 %v546
    %v1905 = vunpack.c.h.b16 %v546
    %v1906 = vunpack.c.l.b16 %v547
    %v1907 = vunpack.c.h.b16 %v547
    %v1908 = vunpack.c.l.b16 %v548
    %v1909 = vunpack.c.h.b16 %v548
    %v1910 = vunpack.c.l.b16 %v549
    %v1911 = vunpack.c.l.b16 %v550
    %v1912 = vunpack.c.h.b16 %v550
    %v1913 = vunpack.c.l.b16 %v551
    %v1914 = vunpack.c.h.b16 %v551
    %v1915 = vunpack.c.l.b16 %v552
    %v1916 = vunpack.c.h.b16 %v552
    %v1917 = vunpack.c.l.b16 %v553
    %v1918 = vunpack.c.l.b16 %v554
    %v1919 = vunpack.c.h.b16 %v554
    %v1920 = vunpack.c.l.b16 %v555
    %v1921 = vunpack.c.h.b16 %v555
    %v1922 = vunpack.c.l.b16 %v556
    %v1923 = vunpack.c.h.b16 %v556
    %v1924 = vunpack.c.l.b16 %v557
    %v1925 = vunpack.c.l.b16 %v558
    %v1926 = vunpack.c.h.b16 %v558
    %v1927 = vunpack.c.l.b16 %v559
    %v1928 = vunpack.c.h.b16 %v559
    %v1929 = vunpack.c.l.b16 %v560
    %v1930 = vunpack.c.h.b16 %v560
    %v1931 = vunpack.c.l.b16 %v561
    %v1932 = vunpack.c.l.b16 %v562
    %v1933 = vunpack.c.h.b16 %v562
    %v1934 = vunpack.c.l.b16 %v563
    %v1935 = vunpack.c.h.b16 %v563
    %v1936 = vunpack.c.l.b16 %v564
    %v1937 = vunpack.c.h.b16 %v564
    %v1938 = vunpack.c.l.b16 %v565
    %v1939 = vunpack.c.l.b16 %v566
    %v1940 = vunpack.c.h.b16 %v566
    %v1941 = vunpack.c.l.b16 %v567
    %v1942 = vunpack.c.h.b16 %v567
    %v1943 = vunpack.c.l.b16 %v568
    %v1944 = vunpack.c.h.b16 %v568
    %v1945 = vunpack.c.l.b16 %v569
    %v1946 = vunpack.c.l.b16 %v570
    %v1947 = vunpack.c.h.b16 %v570
    %v1948 = vunpack.c.l.b16 %v571
    %v1949 = vunpack.c.h.b16 %v571
    %v1950 = vunpack.c.l.b16 %v572
    %v1951 = vunpack.c.h.b16 %v572
    %v1952 = vunpack.c.l.b16 %v573
    %v1953 = vunpack.c.l.b16 %v574
    %v1954 = vunpack.c.h.b16 %v574
    %v1955 = vunpack.c.l.b16 %v575
    %v1956 = vunpack.c.h.b16 %v575
    %v1957 = vunpack.c.l.b16 %v576
    %v1958 = vunpack.c.h.b16 %v576
    %v1959 = vunpack.c.l.b16 %v577
    %v1960 = vunpack.c.l.b16 %v578
    %v1961 = vunpack.c.h.b16 %v578
    %v1962 = vunpack.c.l.b16 %v579
    %v1963 = vunpack.c.h.b16 %v579
    %v1964 = vunpack.c.l.b16 %v580
    %v1965 = vunpack.c.h.b16 %v580
    %v1966 = vunpack.c.l.b16 %v581
    %v1967 = vunpack.c.l.b16 %v582
    %v1968 = vunpack.c.h.b16 %v582
    %v1969 = vunpack.c.l.b16 %v583
    %v1970 = vunpack.c.h.b16 %v583
    %v1971 = vunpack.c.l.b16 %v584
    %v1972 = vunpack.c.h.b16 %v584
    %v1973 = vunpack.c.l.b16 %v585
    %v1974 = vunpack.c.l.b16 %v586
    %v1975 = vunpack.c.h.b16 %v586
    %v1976 = vunpack.c.l.b16 %v587
    %v1977 = vunpack.c.h.b16 %v587
    %v1978 = vunpack.c.l.b16 %v588
    %v1979 = vunpack.c.h.b16 %v588
    %v1980 = vunpack.c.l.b16 %v589
    %v1981 = vunpack.c.l.b16 %v590
    %v1982 = vunpack.c.h.b16 %v590
    %v1983 = vunpack.c.l.b16 %v591
    %v1984 = vunpack.c.h.b16 %v591
    %v1985 = vunpack.c.l.b16 %v592
    %v1986 = vunpack.c.h.b16 %v592
    %v1987 = vunpack.c.l.b16 %v593
    %v1988 = vunpack.c.l.b16 %v594
    %v1989 = vunpack.c.h.b16 %v594
    %v1990 = vunpack.c.l.b16 %v595
    %v1991 = vunpack.c.h.b16 %v595
    %v1992 = vunpack.c.l.b16 %v596
    %v1993 = vunpack.c.h.b16 %v596
    %v1994 = vunpack.c.l.b16 %v597
    %v1995 = vunpack.c.l.b16 %v598
    %v1996 = vunpack.c.h.b16 %v598
    %v1997 = vunpack.c.l.b16 %v599
    %v1998 = vunpack.c.h.b16 %v599
    %v1999 = vunpack.c.l.b16 %v600
    %v2000 = vunpack.c.h.b16 %v600
    %v2001 = vunpack.c.l.b16 %v601
    %v2002 = vunpack.c.l.b16 %v602
    %v2003 = vunpack.c.h.b16 %v602
    %v2004 = vunpack.c.l.b16 %v603
    %v2005 = vunpack.c.h.b16 %v603
    %v2006 = vunpack.c.l.b16 %v604
    %v2007 = vunpack.c.h.b16 %v604
    %v2008 = vunpack.c.l.b16 %v605
    %v2009 = vunpack.c.l.b16 %v606
    %v2010 = vunpack.c.h.b16 %v606
    %v2011 = vunpack.c.l.b16 %v607
    %v2012 = vunpack.c.h.b16 %v607
    %v2013 = vunpack.c.l.b16 %v608
    %v2014 = vunpack.c.h.b16 %v608
    %v2015 = vunpack.c.l.b16 %v609
    %v2016 = vunpack.c.l.b16 %v610
    %v2017 = vunpack.c.h.b16 %v610
    %v2018 = vunpack.c.l.b16 %v611
    %v2019 = vunpack.c.h.b16 %v611
    %v2020 = vunpack.c.l.b16 %v612
    %v2021 = vunpack.c.h.b16 %v612
    %v2022 = vunpack.c.l.b16 %v613
    %v2023 = vunpack.c.l.b16 %v614
    %v2024 = vunpack.c.h.b16 %v614
    %v2025 = vunpack.c.l.b16 %v615
    %v2026 = vunpack.c.h.b16 %v615
    %v2027 = vunpack.c.l.b16 %v616
    %v2028 = vunpack.c.h.b16 %v616
    %v2029 = vunpack.c.l.b16 %v617
    %v2030 = vunpack.c.l.b16 %v618
    %v2031 = vunpack.c.h.b16 %v618
    %v2032 = vunpack.c.l.b16 %v619
    %v2033 = vunpack.c.h.b16 %v619
    %v2034 = vunpack.c.l.b16 %v620
    %v2035 = vunpack.c.h.b16 %v620
    %v2036 = vunpack.c.l.b16 %v621
    %v2037 = vunpack.c.l.b16 %v622
    %v2038 = vunpack.c.h.b16 %v622
    %v2039 = vunpack.c.l.b16 %v623
    %v2040 = vunpack.c.h.b16 %v623
    %v2041 = vunpack.c.l.b16 %v624
    %v2042 = vunpack.c.h.b16 %v624
    %v2043 = vunpack.c.l.b16 %v625
    %v2044 = vunpack.c.l.b16 %v626
    %v2045 = vunpack.c.h.b16 %v626
    %v2046 = vunpack.c.l.b16 %v627
    %v2047 = vunpack.c.h.b16 %v627
    %v2048 = vunpack.c.l.b16 %v628
    %v2049 = vunpack.c.h.b16 %v628
    %v2050 = vunpack.c.l.b16 %v629
    %v2051 = vunpack.c.l.b16 %v630
    %v2052 = vunpack.c.h.b16 %v630
    %v2053 = vunpack.c.l.b16 %v631
    %v2054 = vunpack.c.h.b16 %v631
    %v2055 = vunpack.c.l.b16 %v632
    %v2056 = vunpack.c.h.b16 %v632
    %v2057 = vunpack.c.l.b16 %v633
    %v2058 = vunpack.c.l.b16 %v634
    %v2059 = vunpack.c.h.b16 %v634
    %v2060 = vunpack.c.l.b16 %v635
    %v2061 = vunpack.c.h.b16 %v635
    %v2062 = vunpack.c.l.b16 %v636
    %v2063 = vunpack.c.h.b16 %v636
    %v2064 = vunpack.c.l.b16 %v637
    %v2065 = vunpack.c.l.b16 %v638
    %v2066 = vunpack.c.h.b16 %v638
    %v2067 = vunpack.c.l.b16 %v639
    %v2068 = vunpack.c.h.b16 %v639
    %v2069 = vunpack.c.l.b16 %v640
    %v2070 = vunpack.c.h.b16 %v640
    %v2071 = vunpack.c.l.b16 %v641
    %v2072 = vunpack.c.l.b16 %v642
    %v2073 = vunpack.c.h.b16 %v642
    %v2074 = vunpack.c.l.b16 %v643
    %v2075 = vunpack.c.h.b16 %v643
    %v2076 = vunpack.c.l.b16 %v644
    %v2077 = vunpack.c.h.b16 %v644
    %v2078 = vunpack.c.l.b16 %v645
    %v2079 = vunpack.c.l.b16 %v646
    %v2080 = vunpack.c.h.b16 %v646
    %v2081 = vunpack.c.l.b16 %v647
    %v2082 = vunpack.c.h.b16 %v647
    %v2083 = vunpack.c.l.b16 %v648
    %v2084 = vunpack.c.h.b16 %v648
    %v2085 = vunpack.c.l.b16 %v649
    %v2086 = vunpack.c.l.b16 %v650
    %v2087 = vunpack.c.h.b16 %v650
    %v2088 = vunpack.c.l.b16 %v651
    %v2089 = vunpack.c.h.b16 %v651
    %v2090 = vunpack.c.l.b16 %v652
    %v2091 = vunpack.c.h.b16 %v652
    %v2092 = vunpack.c.l.b16 %v653
    %v2093 = vunpack.c.l.b16 %v654
    %v2094 = vunpack.c.h.b16 %v654
    %v2095 = vunpack.c.l.b16 %v655
    %v2096 = vunpack.c.h.b16 %v655
    %v2097 = vunpack.c.l.b16 %v656
    %v2098 = vunpack.c.h.b16 %v656
    %v2099 = vunpack.c.l.b16 %v657
    %v2100 = vunpack.c.l.b16 %v658
    %v2101 = vunpack.c.h.b16 %v658
    %v2102 = vunpack.c.l.b16 %v659
    %v2103 = vunpack.c.h.b16 %v659
    %v2104 = vunpack.c.l.b16 %v660
    %v2105 = vunpack.c.h.b16 %v660
    %v2106 = vunpack.c.l.b16 %v661
    %v2107 = vpack.c.b16 %v1218, %v1211
    %v2108 = vpack.c.b16 %v1219, %v1212
    %v2109 = vpack.c.b16 %v1220, %v1213
    %v2110 = vpack.c.b16 %v1221, %v1214
    %v2111 = vpack.c.b16 %v1222, %v1215
    %v2112 = vpack.c.b16 %v1223, %v1216
    %v2113 = vpack.c.b16 %v1224, %v1217
    %v2114 = vpack.c.b16 %v1232, %v1225
    %v2115 = vpack.c.b16 %v1233, %v1226
    %v2116 = vpack.c.b16 %v1234, %v1227
    %v2117 = vpack.c.b16 %v1235, %v1228
    %v2118 = vpack.c.b16 %v1236, %v1229
    %v2119 = vpack.c.b16 %v1237, %v1230
    %v2120 = vpack.c.b16 %v1238, %v1231
    %v2121 = vpack.c.b16 %v1246, %v1239
    %v2122 = vpack.c.b16 %v1247, %v1240
    %v2123 = vpack.c.b16 %v1248, %v1241
    %v2124 = vpack.c.b16 %v1249, %v1242
    %v2125 = vpack.c.b16 %v1250, %v1243
    %v2126 = vpack.c.b16 %v1251, %v1244
    %v2127 = vpack.c.b16 %v1252, %v1245
    %v2128 = vpack.c.b16 %v1260, %v1253
    %v2129 = vpack.c.b16 %v1261, %v1254
    %v2130 = vpack.c.b16 %v1262, %v1255
    %v2131 = vpack.c.b16 %v1263, %v1256
    %v2132 = vpack.c.b16 %v1264, %v1257
    %v2133 = vpack.c.b16 %v1265, %v1258
    %v2134 = vpack.c.b16 %v1266, %v1259
    %v2135 = vpack.c.b16 %v1274, %v1267
    %v2136 = vpack.c.b16 %v1275, %v1268
    %v2137 = vpack.c.b16 %v1276, %v1269
    %v2138 = vpack.c.b16 %v1277, %v1270
    %v2139 = vpack.c.b16 %v1278, %v1271
    %v2140 = vpack.c.b16 %v1279, %v1272
    %v2141 = vpack.c.b16 %v1280, %v1273
    %v2142 = vpack.c.b16 %v1288, %v1281
    %v2143 = vpack.c.b16 %v1289, %v1282
    %v2144 = vpack.c.b16 %v1290, %v1283
    %v2145 = vpack.c.b16 %v1291, %v1284
    %v2146 = vpack.c.b16 %v1292, %v1285
    %v2147 = vpack.c.b16 %v1293, %v1286
    %v2148 = vpack.c.b16 %v1294, %v1287
    %v2149 = vpack.c.b16 %v1302, %v1295
    %v2150 = vpack.c.b16 %v1303, %v1296
    %v2151 = vpack.c.b16 %v1304, %v1297
    %v2152 = vpack.c.b16 %v1305, %v1298
    %v2153 = vpack.c.b16 %v1306, %v1299
    %v2154 = vpack.c.b16 %v1307, %v1300
    %v2155 = vpack.c.b16 %v1308, %v1301
    %v2156 = vpack.c.b16 %v1316, %v1309
    %v2157 = vpack.c.b16 %v1317, %v1310
    %v2158 = vpack.c.b16 %v1318, %v1311
    %v2159 = vpack.c.b16 %v1319, %v1312
    %v2160 = vpack.c.b16 %v1320, %v1313
    %v2161 = vpack.c.b16 %v1321, %v1314
    %v2162 = vpack.c.b16 %v1322, %v1315
    %v2163 = vpack.c.b16 %v1330, %v1323
    %v2164 = vpack.c.b16 %v1331, %v1324
    %v2165 = vpack.c.b16 %v1332, %v1325
    %v2166 = vpack.c.b16 %v1333, %v1326
    %v2167 = vpack.c.b16 %v1334, %v1327
    %v2168 = vpack.c.b16 %v1335, %v1328
    %v2169 = vpack.c.b16 %v1336, %v1329
    %v2170 = vpack.c.b16 %v1344, %v1337
    %v2171 = vpack.c.b16 %v1345, %v1338
    %v2172 = vpack.c.b16 %v1346, %v1339
    %v2173 = vpack.c.b16 %v1347, %v1340
    %v2174 = vpack.c.b16 %v1348, %v1341
    %v2175 = vpack.c.b16 %v1349, %v1342
    %v2176 = vpack.c.b16 %v1350, %v1343
    %v2177 = vpack.c.b16 %v1358, %v1351
    %v2178 = vpack.c.b16 %v1359, %v1352
    %v2179 = vpack.c.b16 %v1360, %v1353
    %v2180 = vpack.c.b16 %v1361, %v1354
    %v2181 = vpack.c.b16 %v1362, %v1355
    %v2182 = vpack.c.b16 %v1363, %v1356
    %v2183 = vpack.c.b16 %v1364, %v1357
    %v2184 = vpack.c.b16 %v1372, %v1365
    %v2185 = vpack.c.b16 %v1373, %v1366
    %v2186 = vpack.c.b16 %v1374, %v1367
    %v2187 = vpack.c.b16 %v1375, %v1368
    %v2188 = vpack.c.b16 %v1376, %v1369
    %v2189 = vpack.c.b16 %v1377, %v1370
    %v2190 = vpack.c.b16 %v1378, %v1371
    %v2191 = vpack.c.b16 %v1386, %v1379
    %v2192 = vpack.c.b16 %v1387, %v1380
    %v2193 = vpack.c.b16 %v1388, %v1381
    %v2194 = vpack.c.b16 %v1389, %v1382
    %v2195 = vpack.c.b16 %v1390, %v1383
    %v2196 = vpack.c.b16 %v1391, %v1384
    %v2197 = vpack.c.b16 %v1392, %v1385
    %v2198 = vpack.c.b16 %v1400, %v1393
    %v2199 = vpack.c.b16 %v1401, %v1394
    %v2200 = vpack.c.b16 %v1402, %v1395
    %v2201 = vpack.c.b16 %v1403, %v1396
    %v2202 = vpack.c.b16 %v1404, %v1397
    %v2203 = vpack.c.b16 %v1405, %v1398
    %v2204 = vpack.c.b16 %v1406, %v1399
    %v2205 = vpack.c.b16 %v1414, %v1407
    %v2206 = vpack.c.b16 %v1415, %v1408
    %v2207 = vpack.c.b16 %v1416, %v1409
    %v2208 = vpack.c.b16 %v1417, %v1410
    %v2209 = vpack.c.b16 %v1418, %v1411
    %v2210 = vpack.c.b16 %v1419, %v1412
    %v2211 = vpack.c.b16 %v1420, %v1413
    %v2212 = vpack.c.b16 %v1428, %v1421
    %v2213 = vpack.c.b16 %v1429, %v1422
    %v2214 = vpack.c.b16 %v1430, %v1423
    %v2215 = vpack.c.b16 %v1431, %v1424
    %v2216 = vpack.c.b16 %v1432, %v1425
    %v2217 = vpack.c.b16 %v1433, %v1426
    %v2218 = vpack.c.b16 %v1434, %v1427
    %v2219 = vpack.c.b16 %v1442, %v1435
    %v2220 = vpack.c.b16 %v1443, %v1436
    %v2221 = vpack.c.b16 %v1444, %v1437
    %v2222 = vpack.c.b16 %v1445, %v1438
    %v2223 = vpack.c.b16 %v1446, %v1439
    %v2224 = vpack.c.b16 %v1447, %v1440
    %v2225 = vpack.c.b16 %v1448, %v1441
    %v2226 = vpack.c.b16 %v1456, %v1449
    %v2227 = vpack.c.b16 %v1457, %v1450
    %v2228 = vpack.c.b16 %v1458, %v1451
    %v2229 = vpack.c.b16 %v1459, %v1452
    %v2230 = vpack.c.b16 %v1460, %v1453
    %v2231 = vpack.c.b16 %v1461, %v1454
    %v2232 = vpack.c.b16 %v1462, %v1455
    %v2233 = vpack.c.b16 %v1470, %v1463
    %v2234 = vpack.c.b16 %v1471, %v1464
    %v2235 = vpack.c.b16 %v1472, %v1465
    %v2236 = vpack.c.b16 %v1473, %v1466
    %v2237 = vpack.c.b16 %v1474, %v1467
    %v2238 = vpack.c.b16 %v1475, %v1468
    %v2239 = vpack.c.b16 %v1476, %v1469
    %v2240 = vpack.c.b16 %v1484, %v1477
    %v2241 = vpack.c.b16 %v1485, %v1478
    %v2242 = vpack.c.b16 %v1486, %v1479
    %v2243 = vpack.c.b16 %v1487, %v1480
    %v2244 = vpack.c.b16 %v1488, %v1481
    %v2245 = vpack.c.b16 %v1489, %v1482
    %v2246 = vpack.c.b16 %v1490, %v1483
    %v2247 = vpack.c.b16 %v1498, %v1491
    %v2248 = vpack.c.b16 %v1499, %v1492
    %v2249 = vpack.c.b16 %v1500, %v1493
    %v2250 = vpack.c.b16 %v1501, %v1494
    %v2251 = vpack.c.b16 %v1502, %v1495
    %v2252 = vpack.c.b16 %v1503, %v1496
    %v2253 = vpack.c.b16 %v1504, %v1497
    %v2254 = vpack.c.b16 %v1512, %v1505
    %v2255 = vpack.c.b16 %v1513, %v1506
    %v2256 = vpack.c.b16 %v1514, %v1507
    %v2257 = vpack.c.b16 %v1515, %v1508
    %v2258 = vpack.c.b16 %v1516, %v1509
    %v2259 = vpack.c.b16 %v1517, %v1510
    %v2260 = vpack.c.b16 %v1518, %v1511
    %v2261 = vpack.c.b16 %v1526, %v1519
    %v2262 = vpack.c.b16 %v1527, %v1520
    %v2263 = vpack.c.b16 %v1528, %v1521
    %v2264 = vpack.c.b16 %v1529, %v1522
    %v2265 = vpack.c.b16 %v1530, %v1523
    %v2266 = vpack.c.b16 %v1531, %v1524
    %v2267 = vpack.c.b16 %v1532, %v1525
    %v2268 = vpack.c.b16 %v1540, %v1533
    %v2269 = vpack.c.b16 %v1541, %v1534
    %v2270 = vpack.c.b16 %v1542, %v1535
    %v2271 = vpack.c.b16 %v1543, %v1536
    %v2272 = vpack.c.b16 %v1544, %v1537
    %v2273 = vpack.c.b16 %v1545, %v1538
    %v2274 = vpack.c.b16 %v1546, %v1539
    %v2275 = vpack.c.b16 %v1554, %v1547
    %v2276 = vpack.c.b16 %v1555, %v1548
    %v2277 = vpack.c.b16 %v1556, %v1549
    %v2278 = vpack.c.b16 %v1557, %v1550
    %v2279 = vpack.c.b16 %v1558, %v1551
    %v2280 = vpack.c.b16 %v1559, %v1552
    %v2281 = vpack.c.b16 %v1560, %v1553
    %v2282 = vpack.c.b16 %v1568, %v1561
    %v2283 = vpack.c.b16 %v1569, %v1562
    %v2284 = vpack.c.b16 %v1570, %v1563
    %v2285 = vpack.c.b16 %v1571, %v1564
    %v2286 = vpack.c.b16 %v1572, %v1565
    %v2287 = vpack.c.b16 %v1573, %v1566
    %v2288 = vpack.c.b16 %v1574, %v1567
    %v2289 = vpack.c.b16 %v1582, %v1575
    %v2290 = vpack.c.b16 %v1583, %v1576
    %v2291 = vpack.c.b16 %v1584, %v1577
    %v2292 = vpack.c.b16 %v1585, %v1578
    %v2293 = vpack.c.b16 %v1586, %v1579
    %v2294 = vpack.c.b16 %v1587, %v1580
    %v2295 = vpack.c.b16 %v1588, %v1581
    %v2296 = vpack.c.b16 %v1596, %v1589
    %v2297 = vpack.c.b16 %v1597, %v1590
    %v2298 = vpack.c.b16 %v1598, %v1591
    %v2299 = vpack.c.b16 %v1599, %v1592
    %v2300 = vpack.c.b16 %v1600, %v1593
    %v2301 = vpack.c.b16 %v1601, %v1594
    %v2302 = vpack.c.b16 %v1602, %v1595
    %v2303 = vpack.c.b16 %v1610, %v1603
    %v2304 = vpack.c.b16 %v1611, %v1604
    %v2305 = vpack.c.b16 %v1612, %v1605
    %v2306 = vpack.c.b16 %v1613, %v1606
    %v2307 = vpack.c.b16 %v1614, %v1607
    %v2308 = vpack.c.b16 %v1615, %v1608
    %v2309 = vpack.c.b16 %v1616, %v1609
    %v2310 = vpack.c.b16 %v1624, %v1617
    %v2311 = vpack.c.b16 %v1625, %v1618
    %v2312 = vpack.c.b16 %v1626, %v1619
    %v2313 = vpack.c.b16 %v1627, %v1620
    %v2314 = vpack.c.b16 %v1628, %v1621
    %v2315 = vpack.c.b16 %v1629, %v1622
    %v2316 = vpack.c.b16 %v1630, %v1623
    %v2317 = vpack.c.b16 %v1638, %v1631
    %v2318 = vpack.c.b16 %v1639, %v1632
    %v2319 = vpack.c.b16 %v1640, %v1633
    %v2320 = vpack.c.b16 %v1641, %v1634
    %v2321 = vpack.c.b16 %v1642, %v1635
    %v2322 = vpack.c.b16 %v1643, %v1636
    %v2323 = vpack.c.b16 %v1644, %v1637
    %v2324 = vpack.c.b16 %v1652, %v1645
    %v2325 = vpack.c.b16 %v1653, %v1646
    %v2326 = vpack.c.b16 %v1654, %v1647
    %v2327 = vpack.c.b16 %v1655, %v1648
    %v2328 = vpack.c.b16 %v1656, %v1649
    %v2329 = vpack.c.b16 %v1657, %v1650
    %v2330 = vpack.c.b16 %v1658, %v1651
    %v2331 = vpack.c.b16 %v1666, %v1659
    %v2332 = vpack.c.b16 %v1667, %v1660
    %v2333 = vpack.c.b16 %v1668, %v1661
    %v2334 = vpack.c.b16 %v1669, %v1662
    %v2335 = vpack.c.b16 %v1670, %v1663
    %v2336 = vpack.c.b16 %v1671, %v1664
    %v2337 = vpack.c.b16 %v1672, %v1665
    %v2338 = vpack.c.b16 %v1680, %v1673
    %v2339 = vpack.c.b16 %v1681, %v1674
    %v2340 = vpack.c.b16 %v1682, %v1675
    %v2341 = vpack.c.b16 %v1683, %v1676
    %v2342 = vpack.c.b16 %v1684, %v1677
    %v2343 = vpack.c.b16 %v1685, %v1678
    %v2344 = vpack.c.b16 %v1686, %v1679
    %v2345 = vpack.c.b16 %v1694, %v1687
    %v2346 = vpack.c.b16 %v1695, %v1688
    %v2347 = vpack.c.b16 %v1696, %v1689
    %v2348 = vpack.c.b16 %v1697, %v1690
    %v2349 = vpack.c.b16 %v1698, %v1691
    %v2350 = vpack.c.b16 %v1699, %v1692
    %v2351 = vpack.c.b16 %v1700, %v1693
    %v2352 = vpack.c.b16 %v1708, %v1701
    %v2353 = vpack.c.b16 %v1709, %v1702
    %v2354 = vpack.c.b16 %v1710, %v1703
    %v2355 = vpack.c.b16 %v1711, %v1704
    %v2356 = vpack.c.b16 %v1712, %v1705
    %v2357 = vpack.c.b16 %v1713, %v1706
    %v2358 = vpack.c.b16 %v1714, %v1707
    %v2359 = vpack.c.b16 %v1722, %v1715
    %v2360 = vpack.c.b16 %v1723, %v1716
    %v2361 = vpack.c.b16 %v1724, %v1717
    %v2362 = vpack.c.b16 %v1725, %v1718
    %v2363 = vpack.c.b16 %v1726, %v1719
    %v2364 = vpack.c.b16 %v1727, %v1720
    %v2365 = vpack.c.b16 %v1728, %v1721
    %v2366 = vpack.c.b16 %v1736, %v1729
    %v2367 = vpack.c.b16 %v1737, %v1730
    %v2368 = vpack.c.b16 %v1738, %v1731
    %v2369 = vpack.c.b16 %v1739, %v1732
    %v2370 = vpack.c.b16 %v1740, %v1733
    %v2371 = vpack.c.b16 %v1741, %v1734
    %v2372 = vpack.c.b16 %v1742, %v1735
    %v2373 = vpack.c.b16 %v1750, %v1743
    %v2374 = vpack.c.b16 %v1751, %v1744
    %v2375 = vpack.c.b16 %v1752, %v1745
    %v2376 = vpack.c.b16 %v1753, %v1746
    %v2377 = vpack.c.b16 %v1754, %v1747
    %v2378 = vpack.c.b16 %v1755, %v1748
    %v2379 = vpack.c.b16 %v1756, %v1749
    %v2380 = vpack.c.b16 %v1764, %v1757
    %v2381 = vpack.c.b16 %v1765, %v1758
    %v2382 = vpack.c.b16 %v1766, %v1759
    %v2383 = vpack.c.b16 %v1767, %v1760
    %v2384 = vpack.c.b16 %v1768, %v1761
    %v2385 = vpack.c.b16 %v1769, %v1762
    %v2386 = vpack.c.b16 %v1770, %v1763
    %v2387 = vpack.c.b16 %v1778, %v1771
    %v2388 = vpack.c.b16 %v1779, %v1772
    %v2389 = vpack.c.b16 %v1780, %v1773
    %v2390 = vpack.c.b16 %v1781, %v1774
    %v2391 = vpack.c.b16 %v1782, %v1775
    %v2392 = vpack.c.b16 %v1783, %v1776
    %v2393 = vpack.c.b16 %v1784, %v1777
    %v2394 = vpack.c.b16 %v1792, %v1785
    %v2395 = vpack.c.b16 %v1793, %v1786
    %v2396 = vpack.c.b16 %v1794, %v1787
    %v2397 = vpack.c.b16 %v1795, %v1788
    %v2398 = vpack.c.b16 %v1796, %v1789
    %v2399 = vpack.c.b16 %v1797, %v1790
    %v2400 = vpack.c.b16 %v1798, %v1791
    %v2401 = vpack.c.b16 %v1806, %v1799
    %v2402 = vpack.c.b16 %v1807, %v1800
    %v2403 = vpack.c.b16 %v1808, %v1801
    %v2404 = vpack.c.b16 %v1809, %v1802
    %v2405 = vpack.c.b16 %v1810, %v1803
    %v2406 = vpack.c.b16 %v1811, %v1804
    %v2407 = vpack.c.b16 %v1812, %v1805
    %v2408 = vpack.c.b16 %v1820, %v1813
    %v2409 = vpack.c.b16 %v1821, %v1814
    %v2410 = vpack.c.b16 %v1822, %v1815
    %v2411 = vpack.c.b16 %v1823, %v1816
    %v2412 = vpack.c.b16 %v1824, %v1817
    %v2413 = vpack.c.b16 %v1825, %v1818
    %v2414 = vpack.c.b16 %v1826, %v1819
    %v2415 = vpack.c.b16 %v1834, %v1827
    %v2416 = vpack.c.b16 %v1835, %v1828
    %v2417 = vpack.c.b16 %v1836, %v1829
    %v2418 = vpack.c.b16 %v1837, %v1830
    %v2419 = vpack.c.b16 %v1838, %v1831
    %v2420 = vpack.c.b16 %v1839, %v1832
    %v2421 = vpack.c.b16 %v1840, %v1833
    %v2422 = vpack.c.b16 %v1848, %v1841
    %v2423 = vpack.c.b16 %v1849, %v1842
    %v2424 = vpack.c.b16 %v1850, %v1843
    %v2425 = vpack.c.b16 %v1851, %v1844
    %v2426 = vpack.c.b16 %v1852, %v1845
    %v2427 = vpack.c.b16 %v1853, %v1846
    %v2428 = vpack.c.b16 %v1854, %v1847
    %v2429 = vpack.c.b16 %v1862, %v1855
    %v2430 = vpack.c.b16 %v1863, %v1856
    %v2431 = vpack.c.b16 %v1864, %v1857
    %v2432 = vpack.c.b16 %v1865, %v1858
    %v2433 = vpack.c.b16 %v1866, %v1859
    %v2434 = vpack.c.b16 %v1867, %v1860
    %v2435 = vpack.c.b16 %v1868, %v1861
    %v2436 = vpack.c.b16 %v1876, %v1869
    %v2437 = vpack.c.b16 %v1877, %v1870
    %v2438 = vpack.c.b16 %v1878, %v1871
    %v2439 = vpack.c.b16 %v1879, %v1872
    %v2440 = vpack.c.b16 %v1880, %v1873
    %v2441 = vpack.c.b16 %v1881, %v1874
    %v2442 = vpack.c.b16 %v1882, %v1875
    %v2443 = vpack.c.b16 %v1890, %v1883
    %v2444 = vpack.c.b16 %v1891, %v1884
    %v2445 = vpack.c.b16 %v1892, %v1885
    %v2446 = vpack.c.b16 %v1893, %v1886
    %v2447 = vpack.c.b16 %v1894, %v1887
    %v2448 = vpack.c.b16 %v1895, %v1888
    %v2449 = vpack.c.b16 %v1896, %v1889
    %v2450 = vpack.c.b16 %v1904, %v1897
    %v2451 = vpack.c.b16 %v1905, %v1898
    %v2452 = vpack.c.b16 %v1906, %v1899
    %v2453 = vpack.c.b16 %v1907, %v1900
    %v2454 = vpack.c.b16 %v1908, %v1901
    %v2455 = vpack.c.b16 %v1909, %v1902
    %v2456 = vpack.c.b16 %v1910, %v1903
    %v2457 = vpack.c.b16 %v1918, %v1911
    %v2458 = vpack.c.b16 %v1919, %v1912
    %v2459 = vpack.c.b16 %v1920, %v1913
    %v2460 = vpack.c.b16 %v1921, %v1914
    %v2461 = vpack.c.b16 %v1922, %v1915
    %v2462 = vpack.c.b16 %v1923, %v1916
    %v2463 = vpack.c.b16 %v1924, %v1917
    %v2464 = vpack.c.b16 %v1932, %v1925
    %v2465 = vpack.c.b16 %v1933, %v1926
    %v2466 = vpack.c.b16 %v1934, %v1927
    %v2467 = vpack.c.b16 %v1935, %v1928
    %v2468 = vpack.c.b16 %v1936, %v1929
    %v2469 = vpack.c.b16 %v1937, %v1930
    %v2470 = vpack.c.b16 %v1938, %v1931
    %v2471 = vpack.c.b16 %v1946, %v1939
    %v2472 = vpack.c.b16 %v1947, %v1940
    %v2473 = vpack.c.b16 %v1948, %v1941
    %v2474 = vpack.c.b16 %v1949, %v1942
    %v2475 = vpack.c.b16 %v1950, %v1943
    %v2476 = vpack.c.b16 %v1951, %v1944
    %v2477 = vpack.c.b16 %v1952, %v1945
    %v2478 = vpack.c.b16 %v1960, %v1953
    %v2479 = vpack.c.b16 %v1961, %v1954
    %v2480 = vpack.c.b16 %v1962, %v1955
    %v2481 = vpack.c.b16 %v1963, %v1956
    %v2482 = vpack.c.b16 %v1964, %v1957
    %v2483 = vpack.c.b16 %v1965, %v1958
    %v2484 = vpack.c.b16 %v1966, %v1959
    %v2485 = vpack.c.b16 %v1974, %v1967
    %v2486 = vpack.c.b16 %v1975, %v1968
    %v2487 = vpack.c.b16 %v1976, %v1969
    %v2488 = vpack.c.b16 %v1977, %v1970
    %v2489 = vpack.c.b16 %v1978, %v1971
    %v2490 = vpack.c.b16 %v1979, %v1972
    %v2491 = vpack.c.b16 %v1980, %v1973
    %v2492 = vpack.c.b16 %v1988, %v1981
    %v2493 = vpack.c.b16 %v1989, %v1982
    %v2494 = vpack.c.b16 %v1990, %v1983
    %v2495 = vpack.c.b16 %v1991, %v1984
    %v2496 = vpack.c.b16 %v1992, %v1985
    %v2497 = vpack.c.b16 %v1993, %v1986
    %v2498 = vpack.c.b16 %v1994, %v1987
    %v2499 = vpack.c.b16 %v2002, %v1995
    %v2500 = vpack.c.b16 %v2003, %v1996
    %v2501 = vpack.c.b16 %v2004, %v1997
    %v2502 = vpack.c.b16 %v2005, %v1998
    %v2503 = vpack.c.b16 %v2006, %v1999
    %v2504 = vpack.c.b16 %v2007, %v2000
    %v2505 = vpack.c.b16 %v2008, %v2001
    %v2506 = vpack.c.b16 %v2016, %v2009
    %v2507 = vpack.c.b16 %v2017, %v2010
    %v2508 = vpack.c.b16 %v2018, %v2011
    %v2509 = vpack.c.b16 %v2019, %v2012
    %v2510 = vpack.c.b16 %v2020, %v2013
    %v2511 = vpack.c.b16 %v2021, %v2014
    %v2512 = vpack.c.b16 %v2022, %v2015
    %v2513 = vpack.c.b16 %v2030, %v2023
    %v2514 = vpack.c.b16 %v2031, %v2024
    %v2515 = vpack.c.b16 %v2032, %v2025
    %v2516 = vpack.c.b16 %v2033, %v2026
    %v2517 = vpack.c.b16 %v2034, %v2027
    %v2518 = vpack.c.b16 %v2035, %v2028
    %v2519 = vpack.c.b16 %v2036, %v2029
    %v2520 = vpack.c.b16 %v2044, %v2037
    %v2521 = vpack.c.b16 %v2045, %v2038
    %v2522 = vpack.c.b16 %v2046, %v2039
    %v2523 = vpack.c.b16 %v2047, %v2040
    %v2524 = vpack.c.b16 %v2048, %v2041
    %v2525 = vpack.c.b16 %v2049, %v2042
    %v2526 = vpack.c.b16 %v2050, %v2043
    %v2527 = vpack.c.b16 %v2058, %v2051
    %v2528 = vpack.c.b16 %v2059, %v2052
    %v2529 = vpack.c.b16 %v2060, %v2053
    %v2530 = vpack.c.b16 %v2061, %v2054
    %v2531 = vpack.c.b16 %v2062, %v2055
    %v2532 = vpack.c.b16 %v2063, %v2056
    %v2533 = vpack.c.b16 %v2064, %v2057
    %v2534 = vpack.c.b16 %v2072, %v2065
    %v2535 = vpack.c.b16 %v2073, %v2066
    %v2536 = vpack.c.b16 %v2074, %v2067
    %v2537 = vpack.c.b16 %v2075, %v2068
    %v2538 = vpack.c.b16 %v2076, %v2069
    %v2539 = vpack.c.b16 %v2077, %v2070
    %v2540 = vpack.c.b16 %v2078, %v2071
    %v2541 = vpack.c.b16 %v2086, %v2079
    %v2542 = vpack.c.b16 %v2087, %v2080
    %v2543 = vpack.c.b16 %v2088, %v2081
    %v2544 = vpack.c.b16 %v2089, %v2082
    %v2545 = vpack.c.b16 %v2090, %v2083
    %v2546 = vpack.c.b16 %v2091, %v2084
    %v2547 = vpack.c.b16 %v2092, %v2085
    %v2548 = vpack.c.b16 %v2100, %v2093
    %v2549 = vpack.c.b16 %v2101, %v2094
    %v2550 = vpack.c.b16 %v2102, %v2095
    %v2551 = vpack.c.b16 %v2103, %v2096
    %v2552 = vpack.c.b16 %v2104, %v2097
    %v2553 = vpack.c.b16 %v2105, %v2098
    %v2554 = vpack.c.b16 %v2106, %v2099
    %3003 = vmatprep.subr.bf16.mxu0 %v2108
    %3004 = vmatpush1.bf16.msra.mxu0 %v2107
    %3005 = vmatprep.subr.bf16.mxu0 %v2115
    %3006 = vmatpush1.bf16.msra.mxu0 %v2114
    %3007 = vmatprep.subr.bf16.mxu0 %v2122
    %3008 = vmatpush1.bf16.msra.mxu0 %v2121
    %3009 = vmatprep.subr.bf16.mxu0 %v2129
    %3010 = vmatpush1.bf16.msra.mxu0 %v2128
    %3011 = vmatprep.subr.bf16.mxu0 %v2136
    %3012 = vmatpush1.bf16.msra.mxu0 %v2135
    %3013 = vmatprep.subr.bf16.mxu0 %v2143
    %3014 = vmatpush1.bf16.msra.mxu0 %v2142
    %3015 = vmatprep.subr.bf16.mxu0 %v2150
    %3016 = vmatpush1.bf16.msra.mxu0 %v2149
    %3017 = vmatprep.subr.bf16.mxu0 %v2157
    %3018 = vmatpush1.bf16.msra.mxu0 %v2156
    %3019 = vmatprep.subr.bf16.mxu0 %v2164
    %3020 = vmatpush1.bf16.msra.mxu0 %v2163
    %3021 = vmatprep.subr.bf16.mxu0 %v2171
    %3022 = vmatpush1.bf16.msra.mxu0 %v2170
    %3023 = vmatprep.subr.bf16.mxu0 %v2178
    %3024 = vmatpush1.bf16.msra.mxu0 %v2177
    %3025 = vmatprep.subr.bf16.mxu0 %v2185
    %3026 = vmatpush1.bf16.msra.mxu0 %v2184
    %3027 = vmatprep.subr.bf16.mxu0 %v2192
    %3028 = vmatpush1.bf16.msra.mxu0 %v2191
    %3029 = vmatprep.subr.bf16.mxu0 %v2199
    %3030 = vmatpush1.bf16.msra.mxu0 %v2198
    %3031 = vmatprep.subr.bf16.mxu0 %v2206
    %3032 = vmatpush1.bf16.msra.mxu0 %v2205
    %3033 = vmatprep.subr.bf16.mxu0 %v2213
    %3034 = vmatpush1.bf16.msra.mxu0 %v2212
    %3035 = vmatprep.mubr.bf16.mxu0 %v143
    %3036 = vmatmul.mubr.bf16.gmra.mrb[0].mxu0 %v142
    %v3037 = vpop.f32.mrb[0].mxu0
    %v3038 = vadd.f32 %v667, %v3037
    %v3039 = vpop.f32.mrb[0].mxu0
    %v3040 = vadd.f32 %v671, %v3039
    %v3041 = vpop.f32.mrb[0].mxu0
    %v3042 = vpop.f32.mrb[0].mxu0
    %3043 = vdwg.mxu0
    %3044 = vmatprep.subr.bf16.mxu0 %v2220
    %3045 = vmatpush1.bf16.msra.mxu0 %v2219
    %3046 = vmatprep.subr.bf16.mxu0 %v2227
    %3047 = vmatpush1.bf16.msra.mxu0 %v2226
    %3048 = vmatprep.subr.bf16.mxu0 %v2234
    %3049 = vmatpush1.bf16.msra.mxu0 %v2233
    %3050 = vmatprep.subr.bf16.mxu0 %v2241
    %3051 = vmatpush1.bf16.msra.mxu0 %v2240
    %3052 = vmatprep.subr.bf16.mxu0 %v2248
    %3053 = vmatpush1.bf16.msra.mxu0 %v2247
    %3054 = vmatprep.subr.bf16.mxu0 %v2255
    %3055 = vmatpush1.bf16.msra.mxu0 %v2254
    %3056 = vmatprep.subr.bf16.mxu0 %v2262
    %3057 = vmatpush1.bf16.msra.mxu0 %v2261
    %3058 = vmatprep.subr.bf16.mxu0 %v2269
    %3059 = vmatpush1.bf16.msra.mxu0 %v2268
    %3060 = vmatprep.subr.bf16.mxu0 %v2276
    %3061 = vmatpush1.bf16.msra.mxu0 %v2275
    %3062 = vmatprep.subr.bf16.mxu0 %v2283
    %3063 = vmatpush1.bf16.msra.mxu0 %v2282
    %3064 = vmatprep.subr.bf16.mxu0 %v2290
    %3065 = vmatpush1.bf16.msra.mxu0 %v2289
    %3066 = vmatprep.subr.bf16.mxu0 %v2297
    %3067 = vmatpush1.bf16.msra.mxu0 %v2296
    %3068 = vmatprep.subr.bf16.mxu0 %v2304
    %3069 = vmatpush1.bf16.msra.mxu0 %v2303
    %3070 = vmatprep.subr.bf16.mxu0 %v2311
    %3071 = vmatpush1.bf16.msra.mxu0 %v2310
    %3072 = vmatprep.subr.bf16.mxu0 %v2318
    %3073 = vmatpush1.bf16.msra.mxu0 %v2317
    %3074 = vmatprep.subr.bf16.mxu0 %v2325
    %3075 = vmatpush1.bf16.msra.mxu0 %v2324
    %3076 = vmatprep.mubr.bf16.mxu0 %v145
    %3077 = vmatmul.mubr.bf16.gmra.mrb[0].mxu0 %v144
    %v3078 = vpop.f32.mrb[0].mxu0
    %v3079 = vadd.f32 %v3038, %v3078
    %v3080 = vpop.f32.mrb[0].mxu0
    %v3081 = vadd.f32 %v3040, %v3080
    %v3082 = vpop.f32.mrb[0].mxu0
    %v3083 = vpop.f32.mrb[0].mxu0
    %3084 = vdwg.mxu0
    %3085 = vmatprep.subr.bf16.mxu0 %v2332
    %3086 = vmatpush1.bf16.msra.mxu0 %v2331
    %3087 = vmatprep.subr.bf16.mxu0 %v2339
    %3088 = vmatpush1.bf16.msra.mxu0 %v2338
    %3089 = vmatprep.subr.bf16.mxu0 %v2346
    %3090 = vmatpush1.bf16.msra.mxu0 %v2345
    %3091 = vmatprep.subr.bf16.mxu0 %v2353
    %3092 = vmatpush1.bf16.msra.mxu0 %v2352
    %3093 = vmatprep.subr.bf16.mxu0 %v2360
    %3094 = vmatpush1.bf16.msra.mxu0 %v2359
    %3095 = vmatprep.subr.bf16.mxu0 %v2367
    %3096 = vmatpush1.bf16.msra.mxu0 %v2366
    %3097 = vmatprep.subr.bf16.mxu0 %v2374
    %3098 = vmatpush1.bf16.msra.mxu0 %v2373
    %3099 = vmatprep.subr.bf16.mxu0 %v2381
    %3100 = vmatpush1.bf16.msra.mxu0 %v2380
    %3101 = vmatprep.subr.bf16.mxu0 %v2388
    %3102 = vmatpush1.bf16.msra.mxu0 %v2387
    %3103 = vmatprep.subr.bf16.mxu0 %v2395
    %3104 = vmatpush1.bf16.msra.mxu0 %v2394
    %3105 = vmatprep.subr.bf16.mxu0 %v2402
    %3106 = vmatpush1.bf16.msra.mxu0 %v2401
    %3107 = vmatprep.subr.bf16.mxu0 %v2409
    %3108 = vmatpush1.bf16.msra.mxu0 %v2408
    %3109 = vmatprep.subr.bf16.mxu0 %v2416
    %3110 = vmatpush1.bf16.msra.mxu0 %v2415
    %3111 = vmatprep.subr.bf16.mxu0 %v2423
    %3112 = vmatpush1.bf16.msra.mxu0 %v2422
    %3113 = vmatprep.subr.bf16.mxu0 %v2430
    %3114 = vmatpush1.bf16.msra.mxu0 %v2429
    %3115 = vmatprep.subr.bf16.mxu0 %v2437
    %3116 = vmatpush1.bf16.msra.mxu0 %v2436
    %3117 = vmatprep.mubr.bf16.mxu0 %v147
    %3118 = vmatmul.mubr.bf16.gmra.mrb[0].mxu0 %v146
    %v3119 = vpop.f32.mrb[0].mxu0
    %v3120 = vadd.f32 %v3079, %v3119
    %v3121 = vpop.f32.mrb[0].mxu0
    %v3122 = vadd.f32 %v3081, %v3121
    %v3123 = vpop.f32.mrb[0].mxu0
    %v3124 = vpop.f32.mrb[0].mxu0
    %3125 = vdwg.mxu0
    %3126 = vmatprep.subr.bf16.mxu0 %v2444
    %3127 = vmatpush1.bf16.msra.mxu0 %v2443
    %3128 = vmatprep.subr.bf16.mxu0 %v2451
    %3129 = vmatpush1.bf16.msra.mxu0 %v2450
    %3130 = vmatprep.subr.bf16.mxu0 %v2458
    %3131 = vmatpush1.bf16.msra.mxu0 %v2457
    %3132 = vmatprep.subr.bf16.mxu0 %v2465
    %3133 = vmatpush1.bf16.msra.mxu0 %v2464
    %3134 = vmatprep.subr.bf16.mxu0 %v2472
    %3135 = vmatpush1.bf16.msra.mxu0 %v2471
    %3136 = vmatprep.subr.bf16.mxu0 %v2479
    %3137 = vmatpush1.bf16.msra.mxu0 %v2478
    %3138 = vmatprep.subr.bf16.mxu0 %v2486
    %3139 = vmatpush1.bf16.msra.mxu0 %v2485
    %3140 = vmatprep.subr.bf16.mxu0 %v2493
    %3141 = vmatpush1.bf16.msra.mxu0 %v2492
    %3142 = vmatprep.subr.bf16.mxu0 %v2500
    %3143 = vmatpush1.bf16.msra.mxu0 %v2499
    %3144 = vmatprep.subr.bf16.mxu0 %v2507
    %3145 = vmatpush1.bf16.msra.mxu0 %v2506
    %3146 = vmatprep.subr.bf16.mxu0 %v2514
    %3147 = vmatpush1.bf16.msra.mxu0 %v2513
    %3148 = vmatprep.subr.bf16.mxu0 %v2521
    %3149 = vmatpush1.bf16.msra.mxu0 %v2520
    %3150 = vmatprep.subr.bf16.mxu0 %v2528
    %3151 = vmatpush1.bf16.msra.mxu0 %v2527
    %3152 = vmatprep.subr.bf16.mxu0 %v2535
    %3153 = vmatpush1.bf16.msra.mxu0 %v2534
    %3154 = vmatprep.subr.bf16.mxu0 %v2542
    %3155 = vmatpush1.bf16.msra.mxu0 %v2541
    %3156 = vmatprep.subr.bf16.mxu0 %v2549
    %3157 = vmatpush1.bf16.msra.mxu0 %v2548
    %3158 = vmatprep.mubr.bf16.mxu0 %v149
    %3159 = vmatmul.mubr.bf16.gmra.mrb[0].mxu0 %v148
    %v3160 = vpop.f32.mrb[0].mxu0
    %v3161 = vadd.f32 %v3120, %v3160
    %v3162 = vpop.f32.mrb[0].mxu0
    %v3163 = vadd.f32 %v3122, %v3162
    %v3164 = vpop.f32.mrb[0].mxu0
    %v3165 = vpop.f32.mrb[0].mxu0
    %3166 = vdwg.mxu0
    %3167 = vmatprep.subr.bf16.mxu0 %v2110
    %3168 = vmatpush1.bf16.msra.mxu0 %v2109
    %3169 = vmatprep.subr.bf16.mxu0 %v2117
    %3170 = vmatpush1.bf16.msra.mxu0 %v2116
    %3171 = vmatprep.subr.bf16.mxu0 %v2124
    %3172 = vmatpush1.bf16.msra.mxu0 %v2123
    %3173 = vmatprep.subr.bf16.mxu0 %v2131
    %3174 = vmatpush1.bf16.msra.mxu0 %v2130
    %3175 = vmatprep.subr.bf16.mxu0 %v2138
    %3176 = vmatpush1.bf16.msra.mxu0 %v2137
    %3177 = vmatprep.subr.bf16.mxu0 %v2145
    %3178 = vmatpush1.bf16.msra.mxu0 %v2144
    %3179 = vmatprep.subr.bf16.mxu0 %v2152
    %3180 = vmatpush1.bf16.msra.mxu0 %v2151
    %3181 = vmatprep.subr.bf16.mxu0 %v2159
    %3182 = vmatpush1.bf16.msra.mxu0 %v2158
    %3183 = vmatprep.subr.bf16.mxu0 %v2166
    %3184 = vmatpush1.bf16.msra.mxu0 %v2165
    %3185 = vmatprep.subr.bf16.mxu0 %v2173
    %3186 = vmatpush1.bf16.msra.mxu0 %v2172
    %3187 = vmatprep.subr.bf16.mxu0 %v2180
    %3188 = vmatpush1.bf16.msra.mxu0 %v2179
    %3189 = vmatprep.subr.bf16.mxu0 %v2187
    %3190 = vmatpush1.bf16.msra.mxu0 %v2186
    %3191 = vmatprep.subr.bf16.mxu0 %v2194
    %3192 = vmatpush1.bf16.msra.mxu0 %v2193
    %3193 = vmatprep.subr.bf16.mxu0 %v2201
    %3194 = vmatpush1.bf16.msra.mxu0 %v2200
    %3195 = vmatprep.subr.bf16.mxu0 %v2208
    %3196 = vmatpush1.bf16.msra.mxu0 %v2207
    %3197 = vmatprep.subr.bf16.mxu0 %v2215
    %3198 = vmatpush1.bf16.msra.mxu0 %v2214
    %3199 = vmatprep.mubr.bf16.mxu0 %v143
    %3200 = vmatmul.mubr.bf16.gmra.mrb[0].mxu0 %v142
    %v3201 = vpop.f32.mrb[0].mxu0
    %v3202 = vadd.f32 %v675, %v3201
    %v3203 = vpop.f32.mrb[0].mxu0
    %v3204 = vadd.f32 %v679, %v3203
    %v3205 = vpop.f32.mrb[0].mxu0
    %v3206 = vpop.f32.mrb[0].mxu0
    %3207 = vdwg.mxu0
    %3208 = vmatprep.subr.bf16.mxu0 %v2222
    %3209 = vmatpush1.bf16.msra.mxu0 %v2221
    %3210 = vmatprep.subr.bf16.mxu0 %v2229
    %3211 = vmatpush1.bf16.msra.mxu0 %v2228
    %3212 = vmatprep.subr.bf16.mxu0 %v2236
    %3213 = vmatpush1.bf16.msra.mxu0 %v2235
    %3214 = vmatprep.subr.bf16.mxu0 %v2243
    %3215 = vmatpush1.bf16.msra.mxu0 %v2242
    %3216 = vmatprep.subr.bf16.mxu0 %v2250
    %3217 = vmatpush1.bf16.msra.mxu0 %v2249
    %3218 = vmatprep.subr.bf16.mxu0 %v2257
    %3219 = vmatpush1.bf16.msra.mxu0 %v2256
    %3220 = vmatprep.subr.bf16.mxu0 %v2264
    %3221 = vmatpush1.bf16.msra.mxu0 %v2263
    %3222 = vmatprep.subr.bf16.mxu0 %v2271
    %3223 = vmatpush1.bf16.msra.mxu0 %v2270
    %3224 = vmatprep.subr.bf16.mxu0 %v2278
    %3225 = vmatpush1.bf16.msra.mxu0 %v2277
    %3226 = vmatprep.subr.bf16.mxu0 %v2285
    %3227 = vmatpush1.bf16.msra.mxu0 %v2284
    %3228 = vmatprep.subr.bf16.mxu0 %v2292
    %3229 = vmatpush1.bf16.msra.mxu0 %v2291
    %3230 = vmatprep.subr.bf16.mxu0 %v2299
    %3231 = vmatpush1.bf16.msra.mxu0 %v2298
    %3232 = vmatprep.subr.bf16.mxu0 %v2306
    %3233 = vmatpush1.bf16.msra.mxu0 %v2305
    %3234 = vmatprep.subr.bf16.mxu0 %v2313
    %3235 = vmatpush1.bf16.msra.mxu0 %v2312
    %3236 = vmatprep.subr.bf16.mxu0 %v2320
    %3237 = vmatpush1.bf16.msra.mxu0 %v2319
    %3238 = vmatprep.subr.bf16.mxu0 %v2327
    %3239 = vmatpush1.bf16.msra.mxu0 %v2326
    %3240 = vmatprep.mubr.bf16.mxu0 %v145
    %3241 = vmatmul.mubr.bf16.gmra.mrb[0].mxu0 %v144
    %v3242 = vpop.f32.mrb[0].mxu0
    %v3243 = vadd.f32 %v3202, %v3242
    %v3244 = vpop.f32.mrb[0].mxu0
    %v3245 = vadd.f32 %v3204, %v3244
    %v3246 = vpop.f32.mrb[0].mxu0
    %v3247 = vpop.f32.mrb[0].mxu0
    %3248 = vdwg.mxu0
    %3249 = vmatprep.subr.bf16.mxu0 %v2334
    %3250 = vmatpush1.bf16.msra.mxu0 %v2333
    %3251 = vmatprep.subr.bf16.mxu0 %v2341
    %3252 = vmatpush1.bf16.msra.mxu0 %v2340
    %3253 = vmatprep.subr.bf16.mxu0 %v2348
    %3254 = vmatpush1.bf16.msra.mxu0 %v2347
    %3255 = vmatprep.subr.bf16.mxu0 %v2355
    %3256 = vmatpush1.bf16.msra.mxu0 %v2354
    %3257 = vmatprep.subr.bf16.mxu0 %v2362
    %3258 = vmatpush1.bf16.msra.mxu0 %v2361
    %3259 = vmatprep.subr.bf16.mxu0 %v2369
    %3260 = vmatpush1.bf16.msra.mxu0 %v2368
    %3261 = vmatprep.subr.bf16.mxu0 %v2376
    %3262 = vmatpush1.bf16.msra.mxu0 %v2375
    %3263 = vmatprep.subr.bf16.mxu0 %v2383
    %3264 = vmatpush1.bf16.msra.mxu0 %v2382
    %3265 = vmatprep.subr.bf16.mxu0 %v2390
    %3266 = vmatpush1.bf16.msra.mxu0 %v2389
    %3267 = vmatprep.subr.bf16.mxu0 %v2397
    %3268 = vmatpush1.bf16.msra.mxu0 %v2396
    %3269 = vmatprep.subr.bf16.mxu0 %v2404
    %3270 = vmatpush1.bf16.msra.mxu0 %v2403
    %3271 = vmatprep.subr.bf16.mxu0 %v2411
    %3272 = vmatpush1.bf16.msra.mxu0 %v2410
    %3273 = vmatprep.subr.bf16.mxu0 %v2418
    %3274 = vmatpush1.bf16.msra.mxu0 %v2417
    %3275 = vmatprep.subr.bf16.mxu0 %v2425
    %3276 = vmatpush1.bf16.msra.mxu0 %v2424
    %3277 = vmatprep.subr.bf16.mxu0 %v2432
    %3278 = vmatpush1.bf16.msra.mxu0 %v2431
    %3279 = vmatprep.subr.bf16.mxu0 %v2439
    %3280 = vmatpush1.bf16.msra.mxu0 %v2438
    %3281 = vmatprep.mubr.bf16.mxu0 %v147
    %3282 = vmatmul.mubr.bf16.gmra.mrb[0].mxu0 %v146
    %v3283 = vpop.f32.mrb[0].mxu0
    %v3284 = vadd.f32 %v3243, %v3283
    %v3285 = vpop.f32.mrb[0].mxu0
    %v3286 = vadd.f32 %v3245, %v3285
    %v3287 = vpop.f32.mrb[0].mxu0
    %v3288 = vpop.f32.mrb[0].mxu0
    %3289 = vdwg.mxu0
    %3290 = vmatprep.subr.bf16.mxu0 %v2446
    %3291 = vmatpush1.bf16.msra.mxu0 %v2445
    %3292 = vmatprep.subr.bf16.mxu0 %v2453
    %3293 = vmatpush1.bf16.msra.mxu0 %v2452
    %3294 = vmatprep.subr.bf16.mxu0 %v2460
    %3295 = vmatpush1.bf16.msra.mxu0 %v2459
    %3296 = vmatprep.subr.bf16.mxu0 %v2467
    %3297 = vmatpush1.bf16.msra.mxu0 %v2466
    %3298 = vmatprep.subr.bf16.mxu0 %v2474
    %3299 = vmatpush1.bf16.msra.mxu0 %v2473
    %3300 = vmatprep.subr.bf16.mxu0 %v2481
    %3301 = vmatpush1.bf16.msra.mxu0 %v2480
    %3302 = vmatprep.subr.bf16.mxu0 %v2488
    %3303 = vmatpush1.bf16.msra.mxu0 %v2487
    %3304 = vmatprep.subr.bf16.mxu0 %v2495
    %3305 = vmatpush1.bf16.msra.mxu0 %v2494
    %3306 = vmatprep.subr.bf16.mxu0 %v2502
    %3307 = vmatpush1.bf16.msra.mxu0 %v2501
    %3308 = vmatprep.subr.bf16.mxu0 %v2509
    %3309 = vmatpush1.bf16.msra.mxu0 %v2508
    %3310 = vmatprep.subr.bf16.mxu0 %v2516
    %3311 = vmatpush1.bf16.msra.mxu0 %v2515
    %3312 = vmatprep.subr.bf16.mxu0 %v2523
    %3313 = vmatpush1.bf16.msra.mxu0 %v2522
    %3314 = vmatprep.subr.bf16.mxu0 %v2530
    %3315 = vmatpush1.bf16.msra.mxu0 %v2529
    %3316 = vmatprep.subr.bf16.mxu0 %v2537
    %3317 = vmatpush1.bf16.msra.mxu0 %v2536
    %3318 = vmatprep.subr.bf16.mxu0 %v2544
    %3319 = vmatpush1.bf16.msra.mxu0 %v2543
    %3320 = vmatprep.subr.bf16.mxu0 %v2551
    %3321 = vmatpush1.bf16.msra.mxu0 %v2550
    %3322 = vmatprep.mubr.bf16.mxu0 %v149
    %3323 = vmatmul.mubr.bf16.gmra.mrb[0].mxu0 %v148
    %v3324 = vpop.f32.mrb[0].mxu0
    %v3325 = vadd.f32 %v3284, %v3324
    %v3326 = vpop.f32.mrb[0].mxu0
    %v3327 = vadd.f32 %v3286, %v3326
    %v3328 = vpop.f32.mrb[0].mxu0
    %v3329 = vpop.f32.mrb[0].mxu0
    %3330 = vdwg.mxu0
    %3331 = vmatprep.subr.bf16.mxu0 %v2112
    %3332 = vmatpush1.bf16.msra.mxu0 %v2111
    %3333 = vmatprep.subr.bf16.mxu0 %v2119
    %3334 = vmatpush1.bf16.msra.mxu0 %v2118
    %3335 = vmatprep.subr.bf16.mxu0 %v2126
    %3336 = vmatpush1.bf16.msra.mxu0 %v2125
    %3337 = vmatprep.subr.bf16.mxu0 %v2133
    %3338 = vmatpush1.bf16.msra.mxu0 %v2132
    %3339 = vmatprep.subr.bf16.mxu0 %v2140
    %3340 = vmatpush1.bf16.msra.mxu0 %v2139
    %3341 = vmatprep.subr.bf16.mxu0 %v2147
    %3342 = vmatpush1.bf16.msra.mxu0 %v2146
    %3343 = vmatprep.subr.bf16.mxu0 %v2154
    %3344 = vmatpush1.bf16.msra.mxu0 %v2153
    %3345 = vmatprep.subr.bf16.mxu0 %v2161
    %3346 = vmatpush1.bf16.msra.mxu0 %v2160
    %3347 = vmatprep.subr.bf16.mxu0 %v2168
    %3348 = vmatpush1.bf16.msra.mxu0 %v2167
    %3349 = vmatprep.subr.bf16.mxu0 %v2175
    %3350 = vmatpush1.bf16.msra.mxu0 %v2174
    %3351 = vmatprep.subr.bf16.mxu0 %v2182
    %3352 = vmatpush1.bf16.msra.mxu0 %v2181
    %3353 = vmatprep.subr.bf16.mxu0 %v2189
    %3354 = vmatpush1.bf16.msra.mxu0 %v2188
    %3355 = vmatprep.subr.bf16.mxu0 %v2196
    %3356 = vmatpush1.bf16.msra.mxu0 %v2195
    %3357 = vmatprep.subr.bf16.mxu0 %v2203
    %3358 = vmatpush1.bf16.msra.mxu0 %v2202
    %3359 = vmatprep.subr.bf16.mxu0 %v2210
    %3360 = vmatpush1.bf16.msra.mxu0 %v2209
    %3361 = vmatprep.subr.bf16.mxu0 %v2217
    %3362 = vmatpush1.bf16.msra.mxu0 %v2216
    %3363 = vmatprep.mubr.bf16.mxu0 %v143
    %3364 = vmatmul.mubr.bf16.gmra.mrb[0].mxu0 %v142
    %v3365 = vpop.f32.mrb[0].mxu0
    %v3366 = vadd.f32 %v683, %v3365
    %v3367 = vpop.f32.mrb[0].mxu0
    %v3368 = vadd.f32 %v687, %v3367
    %v3369 = vpop.f32.mrb[0].mxu0
    %v3370 = vpop.f32.mrb[0].mxu0
    %3371 = vdwg.mxu0
    %3372 = vmatprep.subr.bf16.mxu0 %v2224
    %3373 = vmatpush1.bf16.msra.mxu0 %v2223
    %3374 = vmatprep.subr.bf16.mxu0 %v2231
    %3375 = vmatpush1.bf16.msra.mxu0 %v2230
    %3376 = vmatprep.subr.bf16.mxu0 %v2238
    %3377 = vmatpush1.bf16.msra.mxu0 %v2237
    %3378 = vmatprep.subr.bf16.mxu0 %v2245
    %3379 = vmatpush1.bf16.msra.mxu0 %v2244
    %3380 = vmatprep.subr.bf16.mxu0 %v2252
    %3381 = vmatpush1.bf16.msra.mxu0 %v2251
    %3382 = vmatprep.subr.bf16.mxu0 %v2259
    %3383 = vmatpush1.bf16.msra.mxu0 %v2258
    %3384 = vmatprep.subr.bf16.mxu0 %v2266
    %3385 = vmatpush1.bf16.msra.mxu0 %v2265
    %3386 = vmatprep.subr.bf16.mxu0 %v2273
    %3387 = vmatpush1.bf16.msra.mxu0 %v2272
    %3388 = vmatprep.subr.bf16.mxu0 %v2280
    %3389 = vmatpush1.bf16.msra.mxu0 %v2279
    %3390 = vmatprep.subr.bf16.mxu0 %v2287
    %3391 = vmatpush1.bf16.msra.mxu0 %v2286
    %3392 = vmatprep.subr.bf16.mxu0 %v2294
    %3393 = vmatpush1.bf16.msra.mxu0 %v2293
    %3394 = vmatprep.subr.bf16.mxu0 %v2301
    %3395 = vmatpush1.bf16.msra.mxu0 %v2300
    %3396 = vmatprep.subr.bf16.mxu0 %v2308
    %3397 = vmatpush1.bf16.msra.mxu0 %v2307
    %3398 = vmatprep.subr.bf16.mxu0 %v2315
    %3399 = vmatpush1.bf16.msra.mxu0 %v2314
    %3400 = vmatprep.subr.bf16.mxu0 %v2322
    %3401 = vmatpush1.bf16.msra.mxu0 %v2321
    %3402 = vmatprep.subr.bf16.mxu0 %v2329
    %3403 = vmatpush1.bf16.msra.mxu0 %v2328
    %3404 = vmatprep.mubr.bf16.mxu0 %v145
    %3405 = vmatmul.mubr.bf16.gmra.mrb[0].mxu0 %v144
    %v3406 = vpop.f32.mrb[0].mxu0
    %v3407 = vadd.f32 %v3366, %v3406
    %v3408 = vpop.f32.mrb[0].mxu0
    %v3409 = vadd.f32 %v3368, %v3408
    %v3410 = vpop.f32.mrb[0].mxu0
    %v3411 = vpop.f32.mrb[0].mxu0
    %3412 = vdwg.mxu0
    %3413 = vmatprep.subr.bf16.mxu0 %v2336
    %3414 = vmatpush1.bf16.msra.mxu0 %v2335
    %3415 = vmatprep.subr.bf16.mxu0 %v2343
    %3416 = vmatpush1.bf16.msra.mxu0 %v2342
    %3417 = vmatprep.subr.bf16.mxu0 %v2350
    %3418 = vmatpush1.bf16.msra.mxu0 %v2349
    %3419 = vmatprep.subr.bf16.mxu0 %v2357
    %3420 = vmatpush1.bf16.msra.mxu0 %v2356
    %3421 = vmatprep.subr.bf16.mxu0 %v2364
    %3422 = vmatpush1.bf16.msra.mxu0 %v2363
    %3423 = vmatprep.subr.bf16.mxu0 %v2371
    %3424 = vmatpush1.bf16.msra.mxu0 %v2370
    %3425 = vmatprep.subr.bf16.mxu0 %v2378
    %3426 = vmatpush1.bf16.msra.mxu0 %v2377
    %3427 = vmatprep.subr.bf16.mxu0 %v2385
    %3428 = vmatpush1.bf16.msra.mxu0 %v2384
    %3429 = vmatprep.subr.bf16.mxu0 %v2392
    %3430 = vmatpush1.bf16.msra.mxu0 %v2391
    %3431 = vmatprep.subr.bf16.mxu0 %v2399
    %3432 = vmatpush1.bf16.msra.mxu0 %v2398
    %3433 = vmatprep.subr.bf16.mxu0 %v2406
    %3434 = vmatpush1.bf16.msra.mxu0 %v2405
    %3435 = vmatprep.subr.bf16.mxu0 %v2413
    %3436 = vmatpush1.bf16.msra.mxu0 %v2412
    %3437 = vmatprep.subr.bf16.mxu0 %v2420
    %3438 = vmatpush1.bf16.msra.mxu0 %v2419
    %3439 = vmatprep.subr.bf16.mxu0 %v2427
    %3440 = vmatpush1.bf16.msra.mxu0 %v2426
    %3441 = vmatprep.subr.bf16.mxu0 %v2434
    %3442 = vmatpush1.bf16.msra.mxu0 %v2433
    %3443 = vmatprep.subr.bf16.mxu0 %v2441
    %3444 = vmatpush1.bf16.msra.mxu0 %v2440
    %3445 = vmatprep.mubr.bf16.mxu0 %v147
    %3446 = vmatmul.mubr.bf16.gmra.mrb[0].mxu0 %v146
    %v3447 = vpop.f32.mrb[0].mxu0
    %v3448 = vadd.f32 %v3407, %v3447
    %v3449 = vpop.f32.mrb[0].mxu0
    %v3450 = vadd.f32 %v3409, %v3449
    %v3451 = vpop.f32.mrb[0].mxu0
    %v3452 = vpop.f32.mrb[0].mxu0
    %3453 = vdwg.mxu0
    %3454 = vmatprep.subr.bf16.mxu0 %v2448
    %3455 = vmatpush1.bf16.msra.mxu0 %v2447
    %3456 = vmatprep.subr.bf16.mxu0 %v2455
    %3457 = vmatpush1.bf16.msra.mxu0 %v2454
    %3458 = vmatprep.subr.bf16.mxu0 %v2462
    %3459 = vmatpush1.bf16.msra.mxu0 %v2461
    %3460 = vmatprep.subr.bf16.mxu0 %v2469
    %3461 = vmatpush1.bf16.msra.mxu0 %v2468
    %3462 = vmatprep.subr.bf16.mxu0 %v2476
    %3463 = vmatpush1.bf16.msra.mxu0 %v2475
    %3464 = vmatprep.subr.bf16.mxu0 %v2483
    %3465 = vmatpush1.bf16.msra.mxu0 %v2482
    %3466 = vmatprep.subr.bf16.mxu0 %v2490
    %3467 = vmatpush1.bf16.msra.mxu0 %v2489
    %3468 = vmatprep.subr.bf16.mxu0 %v2497
    %3469 = vmatpush1.bf16.msra.mxu0 %v2496
    %3470 = vmatprep.subr.bf16.mxu0 %v2504
    %3471 = vmatpush1.bf16.msra.mxu0 %v2503
    %3472 = vmatprep.subr.bf16.mxu0 %v2511
    %3473 = vmatpush1.bf16.msra.mxu0 %v2510
    %3474 = vmatprep.subr.bf16.mxu0 %v2518
    %3475 = vmatpush1.bf16.msra.mxu0 %v2517
    %3476 = vmatprep.subr.bf16.mxu0 %v2525
    %3477 = vmatpush1.bf16.msra.mxu0 %v2524
    %3478 = vmatprep.subr.bf16.mxu0 %v2532
    %3479 = vmatpush1.bf16.msra.mxu0 %v2531
    %3480 = vmatprep.subr.bf16.mxu0 %v2539
    %3481 = vmatpush1.bf16.msra.mxu0 %v2538
    %3482 = vmatprep.subr.bf16.mxu0 %v2546
    %3483 = vmatpush1.bf16.msra.mxu0 %v2545
    %3484 = vmatprep.subr.bf16.mxu0 %v2553
    %3485 = vmatpush1.bf16.msra.mxu0 %v2552
    %3486 = vmatprep.mubr.bf16.mxu0 %v149
    %3487 = vmatmul.mubr.bf16.gmra.mrb[0].mxu0 %v148
    %v3488 = vpop.f32.mrb[0].mxu0
    %v3489 = vadd.f32 %v3448, %v3488
    %v3490 = vpop.f32.mrb[0].mxu0
    %v3491 = vadd.f32 %v3450, %v3490
    %v3492 = vpop.f32.mrb[0].mxu0
    %v3493 = vpop.f32.mrb[0].mxu0
    %3494 = vdwg.mxu0
    %3495 = vmatprep.subr.bf16.mxu0 0
    %3496 = vmatpush1.bf16.msra.mxu0 %v2113
    %3497 = vmatprep.subr.bf16.mxu0 0
    %3498 = vmatpush1.bf16.msra.mxu0 %v2120
    %3499 = vmatprep.subr.bf16.mxu0 0
    %3500 = vmatpush1.bf16.msra.mxu0 %v2127
    %3501 = vmatprep.subr.bf16.mxu0 0
    %3502 = vmatpush1.bf16.msra.mxu0 %v2134
    %3503 = vmatprep.subr.bf16.mxu0 0
    %3504 = vmatpush1.bf16.msra.mxu0 %v2141
    %3505 = vmatprep.subr.bf16.mxu0 0
    %3506 = vmatpush1.bf16.msra.mxu0 %v2148
    %3507 = vmatprep.subr.bf16.mxu0 0
    %3508 = vmatpush1.bf16.msra.mxu0 %v2155
    %3509 = vmatprep.subr.bf16.mxu0 0
    %3510 = vmatpush1.bf16.msra.mxu0 %v2162
    %3511 = vmatprep.subr.bf16.mxu0 0
    %3512 = vmatpush1.bf16.msra.mxu0 %v2169
    %3513 = vmatprep.subr.bf16.mxu0 0
    %3514 = vmatpush1.bf16.msra.mxu0 %v2176
    %3515 = vmatprep.subr.bf16.mxu0 0
    %3516 = vmatpush1.bf16.msra.mxu0 %v2183
    %3517 = vmatprep.subr.bf16.mxu0 0
    %3518 = vmatpush1.bf16.msra.mxu0 %v2190
    %3519 = vmatprep.subr.bf16.mxu0 0
    %3520 = vmatpush1.bf16.msra.mxu0 %v2197
    %3521 = vmatprep.subr.bf16.mxu0 0
    %3522 = vmatpush1.bf16.msra.mxu0 %v2204
    %3523 = vmatprep.subr.bf16.mxu0 0
    %3524 = vmatpush1.bf16.msra.mxu0 %v2211
    %3525 = vmatprep.subr.bf16.mxu0 0
    %3526 = vmatpush1.bf16.msra.mxu0 %v2218
    %3527 = vmatprep.mubr.bf16.mxu0 %v143
    %3528 = vmatmul.mubr.bf16.gmra.mrb[0].mxu0 %v142
    %v3529 = vpop.f32.mrb[0].mxu0
    %v3530 = vadd.f32 %v691, %v3529
    %v3531 = vpop.f32.mrb[0].mxu0
    %v3532 = vpop.f32.mrb[0].mxu0
    %v3533 = vpop.f32.mrb[0].mxu0
    %3534 = vdwg.mxu0
    %3535 = vmatprep.subr.bf16.mxu0 0
    %3536 = vmatpush1.bf16.msra.mxu0 %v2225
    %3537 = vmatprep.subr.bf16.mxu0 0
    %3538 = vmatpush1.bf16.msra.mxu0 %v2232
    %3539 = vmatprep.subr.bf16.mxu0 0
    %3540 = vmatpush1.bf16.msra.mxu0 %v2239
    %3541 = vmatprep.subr.bf16.mxu0 0
    %3542 = vmatpush1.bf16.msra.mxu0 %v2246
    %3543 = vmatprep.subr.bf16.mxu0 0
    %3544 = vmatpush1.bf16.msra.mxu0 %v2253
    %3545 = vmatprep.subr.bf16.mxu0 0
    %3546 = vmatpush1.bf16.msra.mxu0 %v2260
    %3547 = vmatprep.subr.bf16.mxu0 0
    %3548 = vmatpush1.bf16.msra.mxu0 %v2267
    %3549 = vmatprep.subr.bf16.mxu0 0
    %3550 = vmatpush1.bf16.msra.mxu0 %v2274
    %3551 = vmatprep.subr.bf16.mxu0 0
    %3552 = vmatpush1.bf16.msra.mxu0 %v2281
    %3553 = vmatprep.subr.bf16.mxu0 0
    %3554 = vmatpush1.bf16.msra.mxu0 %v2288
    %3555 = vmatprep.subr.bf16.mxu0 0
    %3556 = vmatpush1.bf16.msra.mxu0 %v2295
    %3557 = vmatprep.subr.bf16.mxu0 0
    %3558 = vmatpush1.bf16.msra.mxu0 %v2302
    %3559 = vmatprep.subr.bf16.mxu0 0
    %3560 = vmatpush1.bf16.msra.mxu0 %v2309
    %3561 = vmatprep.subr.bf16.mxu0 0
    %3562 = vmatpush1.bf16.msra.mxu0 %v2316
    %3563 = vmatprep.subr.bf16.mxu0 0
    %3564 = vmatpush1.bf16.msra.mxu0 %v2323
    %3565 = vmatprep.subr.bf16.mxu0 0
    %3566 = vmatpush1.bf16.msra.mxu0 %v2330
    %3567 = vmatprep.mubr.bf16.mxu0 %v145
    %3568 = vmatmul.mubr.bf16.gmra.mrb[0].mxu0 %v144
    %v3569 = vpop.f32.mrb[0].mxu0
    %v3570 = vadd.f32 %v3530, %v3569
    %v3571 = vpop.f32.mrb[0].mxu0
    %v3572 = vpop.f32.mrb[0].mxu0
    %v3573 = vpop.f32.mrb[0].mxu0
    %3574 = vdwg.mxu0
    %3575 = vmatprep.subr.bf16.mxu0 0
    %3576 = vmatpush1.bf16.msra.mxu0 %v2337
    %3577 = vmatprep.subr.bf16.mxu0 0
    %3578 = vmatpush1.bf16.msra.mxu0 %v2344
    %3579 = vmatprep.subr.bf16.mxu0 0
    %3580 = vmatpush1.bf16.msra.mxu0 %v2351
    %3581 = vmatprep.subr.bf16.mxu0 0
    %3582 = vmatpush1.bf16.msra.mxu0 %v2358
    %3583 = vmatprep.subr.bf16.mxu0 0
    %3584 = vmatpush1.bf16.msra.mxu0 %v2365
    %3585 = vmatprep.subr.bf16.mxu0 0
    %3586 = vmatpush1.bf16.msra.mxu0 %v2372
    %3587 = vmatprep.subr.bf16.mxu0 0
    %3588 = vmatpush1.bf16.msra.mxu0 %v2379
    %3589 = vmatprep.subr.bf16.mxu0 0
    %3590 = vmatpush1.bf16.msra.mxu0 %v2386
    %3591 = vmatprep.subr.bf16.mxu0 0
    %3592 = vmatpush1.bf16.msra.mxu0 %v2393
    %3593 = vmatprep.subr.bf16.mxu0 0
    %3594 = vmatpush1.bf16.msra.mxu0 %v2400
    %3595 = vmatprep.subr.bf16.mxu0 0
    %3596 = vmatpush1.bf16.msra.mxu0 %v2407
    %3597 = vmatprep.subr.bf16.mxu0 0
    %3598 = vmatpush1.bf16.msra.mxu0 %v2414
    %3599 = vmatprep.subr.bf16.mxu0 0
    %3600 = vmatpush1.bf16.msra.mxu0 %v2421
    %3601 = vmatprep.subr.bf16.mxu0 0
    %3602 = vmatpush1.bf16.msra.mxu0 %v2428
    %3603 = vmatprep.subr.bf16.mxu0 0
    %3604 = vmatpush1.bf16.msra.mxu0 %v2435
    %3605 = vmatprep.subr.bf16.mxu0 0
    %3606 = vmatpush1.bf16.msra.mxu0 %v2442
    %3607 = vmatprep.mubr.bf16.mxu0 %v147
    %3608 = vmatmul.mubr.bf16.gmra.mrb[0].mxu0 %v146
    %v3609 = vpop.f32.mrb[0].mxu0
    %v3610 = vadd.f32 %v3570, %v3609
    %v3611 = vpop.f32.mrb[0].mxu0
    %v3612 = vpop.f32.mrb[0].mxu0
    %v3613 = vpop.f32.mrb[0].mxu0
    %3614 = vdwg.mxu0
    %3615 = vmatprep.subr.bf16.mxu0 0
    %3616 = vmatpush1.bf16.msra.mxu0 %v2449
    %3617 = vmatprep.subr.bf16.mxu0 0
    %3618 = vmatpush1.bf16.msra.mxu0 %v2456
    %3619 = vmatprep.subr.bf16.mxu0 0
    %3620 = vmatpush1.bf16.msra.mxu0 %v2463
    %3621 = vmatprep.subr.bf16.mxu0 0
    %3622 = vmatpush1.bf16.msra.mxu0 %v2470
    %3623 = vmatprep.subr.bf16.mxu0 0
    %3624 = vmatpush1.bf16.msra.mxu0 %v2477
    %3625 = vmatprep.subr.bf16.mxu0 0
    %3626 = vmatpush1.bf16.msra.mxu0 %v2484
    %3627 = vmatprep.subr.bf16.mxu0 0
    %3628 = vmatpush1.bf16.msra.mxu0 %v2491
    %3629 = vmatprep.subr.bf16.mxu0 0
    %3630 = vmatpush1.bf16.msra.mxu0 %v2498
    %3631 = vmatprep.subr.bf16.mxu0 0
    %3632 = vmatpush1.bf16.msra.mxu0 %v2505
    %3633 = vmatprep.subr.bf16.mxu0 0
    %3634 = vmatpush1.bf16.msra.mxu0 %v2512
    %3635 = vmatprep.subr.bf16.mxu0 0
    %3636 = vmatpush1.bf16.msra.mxu0 %v2519
    %3637 = vmatprep.subr.bf16.mxu0 0
    %3638 = vmatpush1.bf16.msra.mxu0 %v2526
    %3639 = vmatprep.subr.bf16.mxu0 0
    %3640 = vmatpush1.bf16.msra.mxu0 %v2533
    %3641 = vmatprep.subr.bf16.mxu0 0
    %3642 = vmatpush1.bf16.msra.mxu0 %v2540
    %3643 = vmatprep.subr.bf16.mxu0 0
    %3644 = vmatpush1.bf16.msra.mxu0 %v2547
    %3645 = vmatprep.subr.bf16.mxu0 0
    %3646 = vmatpush1.bf16.msra.mxu0 %v2554
    %3647 = vmatprep.mubr.bf16.mxu0 %v149
    %3648 = vmatmul.mubr.bf16.gmra.mrb[0].mxu0 %v148
    %v3649 = vpop.f32.mrb[0].mxu0
    %v3650 = vadd.f32 %v3610, %v3649
    %v3651 = vpop.f32.mrb[0].mxu0
    %v3652 = vpop.f32.mrb[0].mxu0
    %v3653 = vpop.f32.mrb[0].mxu0
    %3654 = vdwg.mxu0
    %v3655 = vtanh.pop %v3161
    %v3656 = vtanh.pop %v3163
    %v3657 = vtanh.pop %v3325
    %v3658 = vtanh.pop %v3327
    %v3659 = vtanh.pop %v3489
    %v3660 = vtanh.pop %v3491
    %v3661 = vtanh.pop %v3650
    %v3662 = vpack.c.bf16 %v3655, %v3655
    %v3663 = vpack.c.bf16 %v3656, %v3656
    %v3664 = vpack.c.bf16 %v3657, %v3657
    %v3665 = vpack.c.bf16 %v3658, %v3658
    %v3666 = vpack.c.bf16 %v3659, %v3659
    %v3667 = vpack.c.bf16 %v3660, %v3660
    %v3668 = vpack.c.bf16 %v3661, %v3661
    %v3669 = vld [vmem:[#allocation6] sm:$0xf]
    %v3670 = vld [vmem:[#allocation6 + $0x4] sm:$0xf]
    %v3671 = vld [vmem:[#allocation6 + $0x8] sm:$0xf]
    %v3672 = vld [vmem:[#allocation6 + $0xc] sm:$0xf]
    %v3673 = vld [vmem:[#allocation6 + $0x10] sm:$0xf]
    %v3674 = vld [vmem:[#allocation6 + $0x14] sm:$0xf]
    %v3675 = vld [vmem:[#allocation6 + $0x18] sm:$0xf]
    %v3676 = vld [vmem:[#allocation6 + $0x1c] sm:$0xf]
    %v3677 = vld [vmem:[#allocation6 + $0x20] sm:$0xf]
    %v3678 = vld [vmem:[#allocation6 + $0x24] sm:$0xf]
    %v3679 = vld [vmem:[#allocation6 + $0x28] sm:$0xf]
    %v3680 = vld [vmem:[#allocation6 + $0x2c] sm:$0xf]
    %v3681 = vld [vmem:[#allocation6 + $0x30] sm:$0xf]
    %v3682 = vld [vmem:[#allocation6 + $0x34] sm:$0xf]
    %v3683 = vld [vmem:[#allocation6 + $0x38] sm:$0xf]
    %v3684 = vld [vmem:[#allocation6 + $0x3c] sm:$0xf]
    %v3685 = vld [vmem:[#allocation6 + $0x40] sm:$0xf]
    %v3686 = vld [vmem:[#allocation6 + $0x44] sm:$0xf]
    %v3687 = vld [vmem:[#allocation6 + $0x48] sm:$0xf]
    %v3688 = vld [vmem:[#allocation6 + $0x4c] sm:$0xf]
    %v3689 = vld [vmem:[#allocation6 + $0x50] sm:$0xf]
    %v3690 = vld [vmem:[#allocation6 + $0x54] sm:$0xf]
    %v3691 = vld [vmem:[#allocation6 + $0x58] sm:$0xf]
    %v3692 = vld [vmem:[#allocation6 + $0x5c] sm:$0xf]
    %v3693 = vld [vmem:[#allocation6 + $0x60] sm:$0xf]
    %v3694 = vld [vmem:[#allocation6 + $0x64] sm:$0xf]
    %v3695 = vld [vmem:[#allocation6 + $0x68] sm:$0xf]
    %v3696 = vld [vmem:[#allocation6 + $0x6c] sm:$0xf]
    %v3697 = vld [vmem:[#allocation6 + $0x70] sm:$0xf]
    %v3698 = vld [vmem:[#allocation6 + $0x74] sm:$0xf]
    %v3699 = vld [vmem:[#allocation6 + $0x78] sm:$0xf]
    %v3700 = vld [vmem:[#allocation6 + $0x7c] sm:$0xf]
    %v3701 = vld [vmem:[#allocation6 + $0x80] sm:$0xf]
    %v3702 = vld [vmem:[#allocation6 + $0x84] sm:$0xf]
    %v3703 = vld [vmem:[#allocation6 + $0x88] sm:$0xf]
    %v3704 = vld [vmem:[#allocation6 + $0x8c] sm:$0xf]
    %v3705 = vld [vmem:[#allocation6 + $0x90] sm:$0xf]
    %v3706 = vld [vmem:[#allocation6 + $0x94] sm:$0xf]
    %v3707 = vld [vmem:[#allocation6 + $0x98] sm:$0xf]
    %v3708 = vld [vmem:[#allocation6 + $0x9c] sm:$0xf]
    %v3709 = vld [vmem:[#allocation6 + $0xa0] sm:$0xf]
    %v3710 = vld [vmem:[#allocation6 + $0xa4] sm:$0xf]
    %v3711 = vld [vmem:[#allocation6 + $0xa8] sm:$0xf]
    %v3712 = vld [vmem:[#allocation6 + $0xac] sm:$0xf]
    %v3713 = vld [vmem:[#allocation6 + $0xb0] sm:$0xf]
    %v3714 = vld [vmem:[#allocation6 + $0xb4] sm:$0xf]
    %v3715 = vld [vmem:[#allocation6 + $0xb8] sm:$0xf]
    %v3716 = vld [vmem:[#allocation6 + $0xbc] sm:$0xf]
    %v3717 = vld [vmem:[#allocation6 + $0xc0] sm:$0xf]
    %v3718 = vld [vmem:[#allocation6 + $0xc4] sm:$0xf]
    %v3719 = vld [vmem:[#allocation6 + $0xc8] sm:$0xf]
    %v3720 = vld [vmem:[#allocation6 + $0xcc] sm:$0xf]
    %v3721 = vld [vmem:[#allocation6 + $0xd0] sm:$0xf]
    %v3722 = vld [vmem:[#allocation6 + $0xd4] sm:$0xf]
    %v3723 = vld [vmem:[#allocation6 + $0xd8] sm:$0xf]
    %v3724 = vld [vmem:[#allocation6 + $0xdc] sm:$0xf]
    %v3725 = vld [vmem:[#allocation6 + $0xe0] sm:$0xf]
    %v3726 = vld [vmem:[#allocation6 + $0xe4] sm:$0xf]
    %v3727 = vld [vmem:[#allocation6 + $0xe8] sm:$0xf]
    %v3728 = vld [vmem:[#allocation6 + $0xec] sm:$0xf]
    %v3729 = vld [vmem:[#allocation6 + $0xf0] sm:$0xf]
    %v3730 = vld [vmem:[#allocation6 + $0xf4] sm:$0xf]
    %v3731 = vld [vmem:[#allocation6 + $0xf8] sm:$0xf]
    %v3732 = vld [vmem:[#allocation6 + $0xfc] sm:$0xf]
    %v3733 = vld [vmem:[#allocation6 + $0x100] sm:$0xf]
    %v3734 = vld [vmem:[#allocation6 + $0x104] sm:$0xf]
    %v3735 = vld [vmem:[#allocation6 + $0x108] sm:$0xf]
    %v3736 = vld [vmem:[#allocation6 + $0x10c] sm:$0xf]
    %v3737 = vld [vmem:[#allocation6 + $0x110] sm:$0xf]
    %v3738 = vld [vmem:[#allocation6 + $0x114] sm:$0xf]
    %v3739 = vld [vmem:[#allocation6 + $0x118] sm:$0xf]
    %v3740 = vld [vmem:[#allocation6 + $0x11c] sm:$0xf]
    %v3741 = vld [vmem:[#allocation6 + $0x120] sm:$0xf]
    %v3742 = vld [vmem:[#allocation6 + $0x124] sm:$0xf]
    %v3743 = vld [vmem:[#allocation6 + $0x128] sm:$0xf]
    %v3744 = vld [vmem:[#allocation6 + $0x12c] sm:$0xf]
    %v3745 = vld [vmem:[#allocation6 + $0x130] sm:$0xf]
    %v3746 = vld [vmem:[#allocation6 + $0x134] sm:$0xf]
    %v3747 = vld [vmem:[#allocation6 + $0x138] sm:$0xf]
    %v3748 = vld [vmem:[#allocation6 + $0x13c] sm:$0xf]
    %v3749 = vld [vmem:[#allocation6 + $0x140] sm:$0xf]
    %v3750 = vld [vmem:[#allocation6 + $0x144] sm:$0xf]
    %v3751 = vld [vmem:[#allocation6 + $0x148] sm:$0xf]
    %v3752 = vld [vmem:[#allocation6 + $0x14c] sm:$0xf]
    %v3753 = vld [vmem:[#allocation6 + $0x150] sm:$0xf]
    %v3754 = vld [vmem:[#allocation6 + $0x154] sm:$0xf]
    %v3755 = vld [vmem:[#allocation6 + $0x158] sm:$0xf]
    %v3756 = vld [vmem:[#allocation6 + $0x15c] sm:$0xf]
    %v3757 = vld [vmem:[#allocation6 + $0x160] sm:$0xf]
    %v3758 = vld [vmem:[#allocation6 + $0x164] sm:$0xf]
    %v3759 = vld [vmem:[#allocation6 + $0x168] sm:$0xf]
    %v3760 = vld [vmem:[#allocation6 + $0x16c] sm:$0xf]
    %v3761 = vld [vmem:[#allocation6 + $0x170] sm:$0xf]
    %v3762 = vld [vmem:[#allocation6 + $0x174] sm:$0xf]
    %v3763 = vld [vmem:[#allocation6 + $0x178] sm:$0xf]
    %v3764 = vld [vmem:[#allocation6 + $0x17c] sm:$0xf]
    %v3765 = vld [vmem:[#allocation6 + $0x180] sm:$0xf]
    %v3766 = vld [vmem:[#allocation6 + $0x184] sm:$0xf]
    %v3767 = vld [vmem:[#allocation6 + $0x188] sm:$0xf]
    %v3768 = vld [vmem:[#allocation6 + $0x18c] sm:$0xf]
    %v3769 = vld [vmem:[#allocation6 + $0x190] sm:$0xf]
    %v3770 = vld [vmem:[#allocation6 + $0x194] sm:$0xf]
    %v3771 = vld [vmem:[#allocation6 + $0x198] sm:$0xf]
    %v3772 = vld [vmem:[#allocation6 + $0x19c] sm:$0xf]
    %v3773 = vld [vmem:[#allocation6 + $0x1a0] sm:$0xf]
    %v3774 = vld [vmem:[#allocation6 + $0x1a4] sm:$0xf]
    %v3775 = vld [vmem:[#allocation6 + $0x1a8] sm:$0xf]
    %v3776 = vld [vmem:[#allocation6 + $0x1ac] sm:$0xf]
    %v3777 = vld [vmem:[#allocation6 + $0x1b0] sm:$0xf]
    %v3778 = vld [vmem:[#allocation6 + $0x1b4] sm:$0xf]
    %v3779 = vld [vmem:[#allocation6 + $0x1b8] sm:$0xf]
    %v3780 = vld [vmem:[#allocation6 + $0x1bc] sm:$0xf]
    %v3781 = vld [vmem:[#allocation7] sm:$0x1]
    %v3783 = vlaneseq
    %v3784 = vshrl.u32 %v3783, 7
    %v3785 = vsub.s32 0, %v3784
    %v3786 = vrot.slane %v3781, %v3785
    %v3900 = vunpack.c.l.b16 %v3669
    %v3901 = vunpack.c.l.b16 %v3670
    %v3902 = vunpack.c.l.b16 %v3671
    %v3903 = vunpack.c.l.b16 %v3672
    %v3904 = vunpack.c.l.b16 %v3673
    %v3905 = vunpack.c.l.b16 %v3674
    %v3906 = vunpack.c.l.b16 %v3675
    %v3907 = vunpack.c.l.b16 %v3676
    %v3908 = vunpack.c.l.b16 %v3677
    %v3909 = vunpack.c.l.b16 %v3678
    %v3910 = vunpack.c.l.b16 %v3679
    %v3911 = vunpack.c.l.b16 %v3680
    %v3912 = vunpack.c.l.b16 %v3681
    %v3913 = vunpack.c.l.b16 %v3682
    %v3914 = vunpack.c.l.b16 %v3683
    %v3915 = vunpack.c.l.b16 %v3684
    %v3916 = vunpack.c.l.b16 %v3685
    %v3917 = vunpack.c.l.b16 %v3686
    %v3918 = vunpack.c.l.b16 %v3687
    %v3919 = vunpack.c.l.b16 %v3688
    %v3920 = vunpack.c.l.b16 %v3689
    %v3921 = vunpack.c.l.b16 %v3690
    %v3922 = vunpack.c.l.b16 %v3691
    %v3923 = vunpack.c.l.b16 %v3692
    %v3924 = vunpack.c.l.b16 %v3693
    %v3925 = vunpack.c.l.b16 %v3694
    %v3926 = vunpack.c.l.b16 %v3695
    %v3927 = vunpack.c.l.b16 %v3696
    %v3928 = vunpack.c.l.b16 %v3697
    %v3929 = vunpack.c.l.b16 %v3698
    %v3930 = vunpack.c.l.b16 %v3699
    %v3931 = vunpack.c.l.b16 %v3700
    %v3932 = vunpack.c.l.b16 %v3701
    %v3933 = vunpack.c.l.b16 %v3702
    %v3934 = vunpack.c.l.b16 %v3703
    %v3935 = vunpack.c.l.b16 %v3704
    %v3936 = vunpack.c.l.b16 %v3705
    %v3937 = vunpack.c.l.b16 %v3706
    %v3938 = vunpack.c.l.b16 %v3707
    %v3939 = vunpack.c.l.b16 %v3708
    %v3940 = vunpack.c.l.b16 %v3709
    %v3941 = vunpack.c.l.b16 %v3710
    %v3942 = vunpack.c.l.b16 %v3711
    %v3943 = vunpack.c.l.b16 %v3712
    %v3944 = vunpack.c.l.b16 %v3713
    %v3945 = vunpack.c.l.b16 %v3714
    %v3946 = vunpack.c.l.b16 %v3715
    %v3947 = vunpack.c.l.b16 %v3716
    %v3948 = vunpack.c.l.b16 %v3717
    %v3949 = vunpack.c.l.b16 %v3718
    %v3950 = vunpack.c.l.b16 %v3719
    %v3951 = vunpack.c.l.b16 %v3720
    %v3952 = vunpack.c.l.b16 %v3721
    %v3953 = vunpack.c.l.b16 %v3722
    %v3954 = vunpack.c.l.b16 %v3723
    %v3955 = vunpack.c.l.b16 %v3724
    %v3956 = vunpack.c.l.b16 %v3725
    %v3957 = vunpack.c.l.b16 %v3726
    %v3958 = vunpack.c.l.b16 %v3727
    %v3959 = vunpack.c.l.b16 %v3728
    %v3960 = vunpack.c.l.b16 %v3729
    %v3961 = vunpack.c.l.b16 %v3730
    %v3962 = vunpack.c.l.b16 %v3731
    %v3963 = vunpack.c.l.b16 %v3732
    %v3964 = vunpack.c.l.b16 %v3733
    %v3965 = vunpack.c.l.b16 %v3734
    %v3966 = vunpack.c.l.b16 %v3735
    %v3967 = vunpack.c.l.b16 %v3736
    %v3968 = vunpack.c.l.b16 %v3737
    %v3969 = vunpack.c.l.b16 %v3738
    %v3970 = vunpack.c.l.b16 %v3739
    %v3971 = vunpack.c.l.b16 %v3740
    %v3972 = vunpack.c.l.b16 %v3741
    %v3973 = vunpack.c.l.b16 %v3742
    %v3974 = vunpack.c.l.b16 %v3743
    %v3975 = vunpack.c.l.b16 %v3744
    %v3976 = vunpack.c.l.b16 %v3745
    %v3977 = vunpack.c.l.b16 %v3746
    %v3978 = vunpack.c.l.b16 %v3747
    %v3979 = vunpack.c.l.b16 %v3748
    %v3980 = vunpack.c.l.b16 %v3749
    %v3981 = vunpack.c.l.b16 %v3750
    %v3982 = vunpack.c.l.b16 %v3751
    %v3983 = vunpack.c.l.b16 %v3752
    %v3984 = vunpack.c.l.b16 %v3753
    %v3985 = vunpack.c.l.b16 %v3754
    %v3986 = vunpack.c.l.b16 %v3755
    %v3987 = vunpack.c.l.b16 %v3756
    %v3988 = vunpack.c.l.b16 %v3757
    %v3989 = vunpack.c.l.b16 %v3758
    %v3990 = vunpack.c.l.b16 %v3759
    %v3991 = vunpack.c.l.b16 %v3760
    %v3992 = vunpack.c.l.b16 %v3761
    %v3993 = vunpack.c.l.b16 %v3762
    %v3994 = vunpack.c.l.b16 %v3763
    %v3995 = vunpack.c.l.b16 %v3764
    %v3996 = vunpack.c.l.b16 %v3765
    %v3997 = vunpack.c.l.b16 %v3766
    %v3998 = vunpack.c.l.b16 %v3767
    %v3999 = vunpack.c.l.b16 %v3768
    %v4000 = vunpack.c.l.b16 %v3769
    %v4001 = vunpack.c.l.b16 %v3770
    %v4002 = vunpack.c.l.b16 %v3771
    %v4003 = vunpack.c.l.b16 %v3772
    %v4004 = vunpack.c.l.b16 %v3773
    %v4005 = vunpack.c.l.b16 %v3774
    %v4006 = vunpack.c.l.b16 %v3775
    %v4007 = vunpack.c.l.b16 %v3776
    %v4008 = vunpack.c.l.b16 %v3777
    %v4009 = vunpack.c.l.b16 %v3778
    %v4010 = vunpack.c.l.b16 %v3779
    %v4011 = vunpack.c.l.b16 %v3780
    %v4012 = vpack.c.b16 %v3901, %v3900
    %v4013 = vpack.c.b16 %v3903, %v3902
    %v4014 = vpack.c.b16 %v3905, %v3904
    %v4015 = vpack.c.b16 %v3907, %v3906
    %v4016 = vpack.c.b16 %v3909, %v3908
    %v4017 = vpack.c.b16 %v3911, %v3910
    %v4018 = vpack.c.b16 %v3913, %v3912
    %v4019 = vpack.c.b16 %v3915, %v3914
    %v4020 = vpack.c.b16 %v3917, %v3916
    %v4021 = vpack.c.b16 %v3919, %v3918
    %v4022 = vpack.c.b16 %v3921, %v3920
    %v4023 = vpack.c.b16 %v3923, %v3922
    %v4024 = vpack.c.b16 %v3925, %v3924
    %v4025 = vpack.c.b16 %v3927, %v3926
    %v4026 = vpack.c.b16 %v3929, %v3928
    %v4027 = vpack.c.b16 %v3931, %v3930
    %v4028 = vpack.c.b16 %v3933, %v3932
    %v4029 = vpack.c.b16 %v3935, %v3934
    %v4030 = vpack.c.b16 %v3937, %v3936
    %v4031 = vpack.c.b16 %v3939, %v3938
    %v4032 = vpack.c.b16 %v3941, %v3940
    %v4033 = vpack.c.b16 %v3943, %v3942
    %v4034 = vpack.c.b16 %v3945, %v3944
    %v4035 = vpack.c.b16 %v3947, %v3946
    %v4036 = vpack.c.b16 %v3949, %v3948
    %v4037 = vpack.c.b16 %v3951, %v3950
    %v4038 = vpack.c.b16 %v3953, %v3952
    %v4039 = vpack.c.b16 %v3955, %v3954
    %v4040 = vpack.c.b16 %v3957, %v3956
    %v4041 = vpack.c.b16 %v3959, %v3958
    %v4042 = vpack.c.b16 %v3961, %v3960
    %v4043 = vpack.c.b16 %v3963, %v3962
    %v4044 = vpack.c.b16 %v3965, %v3964
    %v4045 = vpack.c.b16 %v3967, %v3966
    %v4046 = vpack.c.b16 %v3969, %v3968
    %v4047 = vpack.c.b16 %v3971, %v3970
    %v4048 = vpack.c.b16 %v3973, %v3972
    %v4049 = vpack.c.b16 %v3975, %v3974
    %v4050 = vpack.c.b16 %v3977, %v3976
    %v4051 = vpack.c.b16 %v3979, %v3978
    %v4052 = vpack.c.b16 %v3981, %v3980
    %v4053 = vpack.c.b16 %v3983, %v3982
    %v4054 = vpack.c.b16 %v3985, %v3984
    %v4055 = vpack.c.b16 %v3987, %v3986
    %v4056 = vpack.c.b16 %v3989, %v3988
    %v4057 = vpack.c.b16 %v3991, %v3990
    %v4058 = vpack.c.b16 %v3993, %v3992
    %v4059 = vpack.c.b16 %v3995, %v3994
    %v4060 = vpack.c.b16 %v3997, %v3996
    %v4061 = vpack.c.b16 %v3999, %v3998
    %v4062 = vpack.c.b16 %v4001, %v4000
    %v4063 = vpack.c.b16 %v4003, %v4002
    %v4064 = vpack.c.b16 %v4005, %v4004
    %v4065 = vpack.c.b16 %v4007, %v4006
    %v4066 = vpack.c.b16 %v4009, %v4008
    %v4067 = vpack.c.b16 %v4011, %v4010
    %4124 = vmatprep.subr.bf16.mxu0 0
    %4125 = vmatpush1.bf16.msra.mxu0 %v4012
    %4126 = vmatprep.subr.bf16.mxu0 0
    %4127 = vmatpush1.bf16.msra.mxu0 %v4013
    %4128 = vmatprep.subr.bf16.mxu0 0
    %4129 = vmatpush1.bf16.msra.mxu0 %v4014
    %4130 = vmatprep.subr.bf16.mxu0 0
    %4131 = vmatpush1.bf16.msra.mxu0 %v4015
    %4132 = vmatprep.subr.bf16.mxu0 0
    %4133 = vmatpush1.bf16.msra.mxu0 %v4016
    %4134 = vmatprep.subr.bf16.mxu0 0
    %4135 = vmatpush1.bf16.msra.mxu0 %v4017
    %4136 = vmatprep.subr.bf16.mxu0 0
    %4137 = vmatpush1.bf16.msra.mxu0 %v4018
    %4138 = vmatprep.subr.bf16.mxu0 0
    %4139 = vmatpush1.bf16.msra.mxu0 %v4019
    %4140 = vmatprep.subr.bf16.mxu0 0
    %4141 = vmatpush1.bf16.msra.mxu0 %v4020
    %4142 = vmatprep.subr.bf16.mxu0 0
    %4143 = vmatpush1.bf16.msra.mxu0 %v4021
    %4144 = vmatprep.subr.bf16.mxu0 0
    %4145 = vmatpush1.bf16.msra.mxu0 %v4022
    %4146 = vmatprep.subr.bf16.mxu0 0
    %4147 = vmatpush1.bf16.msra.mxu0 %v4023
    %4148 = vmatprep.subr.bf16.mxu0 0
    %4149 = vmatpush1.bf16.msra.mxu0 %v4024
    %4150 = vmatprep.subr.bf16.mxu0 0
    %4151 = vmatpush1.bf16.msra.mxu0 %v4025
    %4152 = vmatprep.subr.bf16.mxu0 0
    %4153 = vmatpush1.bf16.msra.mxu0 %v4026
    %4154 = vmatprep.subr.bf16.mxu0 0
    %4155 = vmatpush1.bf16.msra.mxu0 %v4027
    %4156 = vmatprep.mubr.bf16.mxu0 %v3663
    %4157 = vmatmul.mubr.bf16.gmra.mrb[0].mxu0 %v3662
    %v4158 = vpop.f32.mrb[0].mxu0
    %v4159 = vadd.f32 %v3786, %v4158
    %v4160 = vpop.f32.mrb[0].mxu0
    %v4161 = vpop.f32.mrb[0].mxu0
    %v4162 = vpop.f32.mrb[0].mxu0
    %4163 = vdwg.mxu0
    %4164 = vmatprep.subr.bf16.mxu0 0
    %4165 = vmatpush1.bf16.msra.mxu0 %v4028
    %4166 = vmatprep.subr.bf16.mxu0 0
    %4167 = vmatpush1.bf16.msra.mxu0 %v4029
    %4168 = vmatprep.subr.bf16.mxu0 0
    %4169 = vmatpush1.bf16.msra.mxu0 %v4030
    %4170 = vmatprep.subr.bf16.mxu0 0
    %4171 = vmatpush1.bf16.msra.mxu0 %v4031
    %4172 = vmatprep.subr.bf16.mxu0 0
    %4173 = vmatpush1.bf16.msra.mxu0 %v4032
    %4174 = vmatprep.subr.bf16.mxu0 0
    %4175 = vmatpush1.bf16.msra.mxu0 %v4033
    %4176 = vmatprep.subr.bf16.mxu0 0
    %4177 = vmatpush1.bf16.msra.mxu0 %v4034
    %4178 = vmatprep.subr.bf16.mxu0 0
    %4179 = vmatpush1.bf16.msra.mxu0 %v4035
    %4180 = vmatprep.subr.bf16.mxu0 0
    %4181 = vmatpush1.bf16.msra.mxu0 %v4036
    %4182 = vmatprep.subr.bf16.mxu0 0
    %4183 = vmatpush1.bf16.msra.mxu0 %v4037
    %4184 = vmatprep.subr.bf16.mxu0 0
    %4185 = vmatpush1.bf16.msra.mxu0 %v4038
    %4186 = vmatprep.subr.bf16.mxu0 0
    %4187 = vmatpush1.bf16.msra.mxu0 %v4039
    %4188 = vmatprep.subr.bf16.mxu0 0
    %4189 = vmatpush1.bf16.msra.mxu0 %v4040
    %4190 = vmatprep.subr.bf16.mxu0 0
    %4191 = vmatpush1.bf16.msra.mxu0 %v4041
    %4192 = vmatprep.subr.bf16.mxu0 0
    %4193 = vmatpush1.bf16.msra.mxu0 %v4042
    %4194 = vmatprep.subr.bf16.mxu0 0
    %4195 = vmatpush1.bf16.msra.mxu0 %v4043
    %4196 = vmatprep.mubr.bf16.mxu0 %v3665
    %4197 = vmatmul.mubr.bf16.gmra.mrb[0].mxu0 %v3664
    %v4198 = vpop.f32.mrb[0].mxu0
    %v4199 = vadd.f32 %v4159, %v4198
    %v4200 = vpop.f32.mrb[0].mxu0
    %v4201 = vpop.f32.mrb[0].mxu0
    %v4202 = vpop.f32.mrb[0].mxu0
    %4203 = vdwg.mxu0
    %4204 = vmatprep.subr.bf16.mxu0 0
    %4205 = vmatpush1.bf16.msra.mxu0 %v4044
    %4206 = vmatprep.subr.bf16.mxu0 0
    %4207 = vmatpush1.bf16.msra.mxu0 %v4045
    %4208 = vmatprep.subr.bf16.mxu0 0
    %4209 = vmatpush1.bf16.msra.mxu0 %v4046
    %4210 = vmatprep.subr.bf16.mxu0 0
    %4211 = vmatpush1.bf16.msra.mxu0 %v4047
    %4212 = vmatprep.subr.bf16.mxu0 0
    %4213 = vmatpush1.bf16.msra.mxu0 %v4048
    %4214 = vmatprep.subr.bf16.mxu0 0
    %4215 = vmatpush1.bf16.msra.mxu0 %v4049
    %4216 = vmatprep.subr.bf16.mxu0 0
    %4217 = vmatpush1.bf16.msra.mxu0 %v4050
    %4218 = vmatprep.subr.bf16.mxu0 0
    %4219 = vmatpush1.bf16.msra.mxu0 %v4051
    %4220 = vmatprep.subr.bf16.mxu0 0
    %4221 = vmatpush1.bf16.msra.mxu0 %v4052
    %4222 = vmatprep.subr.bf16.mxu0 0
    %4223 = vmatpush1.bf16.msra.mxu0 %v4053
    %4224 = vmatprep.subr.bf16.mxu0 0
    %4225 = vmatpush1.bf16.msra.mxu0 %v4054
    %4226 = vmatprep.subr.bf16.mxu0 0
    %4227 = vmatpush1.bf16.msra.mxu0 %v4055
    %4228 = vmatprep.subr.bf16.mxu0 0
    %4229 = vmatpush1.bf16.msra.mxu0 %v4056
    %4230 = vmatprep.subr.bf16.mxu0 0
    %4231 = vmatpush1.bf16.msra.mxu0 %v4057
    %4232 = vmatprep.subr.bf16.mxu0 0
    %4233 = vmatpush1.bf16.msra.mxu0 %v4058
    %4234 = vmatprep.subr.bf16.mxu0 0
    %4235 = vmatpush1.bf16.msra.mxu0 %v4059
    %4236 = vmatprep.mubr.bf16.mxu0 %v3667
    %4237 = vmatmul.mubr.bf16.gmra.mrb[0].mxu0 %v3666
    %v4238 = vpop.f32.mrb[0].mxu0
    %v4239 = vadd.f32 %v4199, %v4238
    %v4240 = vpop.f32.mrb[0].mxu0
    %v4241 = vpop.f32.mrb[0].mxu0
    %v4242 = vpop.f32.mrb[0].mxu0
    %4243 = vdwg.mxu0
    %4244 = vmatprep.subr.bf16.mxu0 0
    %4245 = vmatpush1.bf16.msra.mxu0 %v4060
    %4246 = vmatprep.subr.bf16.mxu0 0
    %4247 = vmatpush1.bf16.msra.mxu0 %v4061
    %4248 = vmatprep.subr.bf16.mxu0 0
    %4249 = vmatpush1.bf16.msra.mxu0 %v4062
    %4250 = vmatprep.subr.bf16.mxu0 0
    %4251 = vmatpush1.bf16.msra.mxu0 %v4063
    %4252 = vmatprep.subr.bf16.mxu0 0
    %4253 = vmatpush1.bf16.msra.mxu0 %v4064
    %4254 = vmatprep.subr.bf16.mxu0 0
    %4255 = vmatpush1.bf16.msra.mxu0 %v4065
    %4256 = vmatprep.subr.bf16.mxu0 0
    %4257 = vmatpush1.bf16.msra.mxu0 %v4066
    %4258 = vmatprep.subr.bf16.mxu0 0
    %4259 = vmatpush1.bf16.msra.mxu0 %v4067
    %4260 = vmatprep.subr.bf16.mxu0 0
    %4261 = vmatpush1.bf16.msra.mxu0 0
    %4262 = vmatprep.subr.bf16.mxu0 0
    %4263 = vmatpush1.bf16.msra.mxu0 0
    %4264 = vmatprep.subr.bf16.mxu0 0
    %4265 = vmatpush1.bf16.msra.mxu0 0
    %4266 = vmatprep.subr.bf16.mxu0 0
    %4267 = vmatpush1.bf16.msra.mxu0 0
    %4268 = vmatprep.subr.bf16.mxu0 0
    %4269 = vmatpush1.bf16.msra.mxu0 0
    %4270 = vmatprep.subr.bf16.mxu0 0
    %4271 = vmatpush1.bf16.msra.mxu0 0
    %4272 = vmatprep.subr.bf16.mxu0 0
    %4273 = vmatpush1.bf16.msra.mxu0 0
    %4274 = vmatprep.subr.bf16.mxu0 0
    %4275 = vmatpush1.bf16.msra.mxu0 0
    %4276 = vmatprep.mubr.bf16.mxu0 0
    %4277 = vmatmul.mubr.bf16.gmra.mrb[0].mxu0 %v3668
    %v4278 = vpop.f32.mrb[0].mxu0
    %v4279 = vadd.f32 %v4239, %v4278
    %v4280 = vpop.f32.mrb[0].mxu0
    %v4281 = vpop.f32.mrb[0].mxu0
    %v4282 = vpop.f32.mrb[0].mxu0
    %4283 = vdwg.mxu0
    %v4284 = vtanh.pop %v4279
    %v4285 = vpack.c.bf16 %v4284, %v4284
    %v4286 = vld [vmem:[#allocation9] sm:$0xff]
    %v4287 = vld [vmem:[#allocation9 + $0x8] sm:$0xff]
    %v4288 = vld [vmem:[#allocation9 + $0x10] sm:$0xff]
    %v4289 = vld [vmem:[#allocation9 + $0x18] sm:$0xff]
    %v4290 = vld [vmem:[#allocation9 + $0x20] sm:$0xff]
    %v4291 = vld [vmem:[#allocation9 + $0x28] sm:$0xff]
    %v4292 = vld [vmem:[#allocation9 + $0x30] sm:$0xff]
    %v4293 = vld [vmem:[#allocation9 + $0x38] sm:$0xff]
    %v4294 = vld [vmem:[#allocation9 + $0x40] sm:$0xff]
    %v4295 = vld [vmem:[#allocation9 + $0x48] sm:$0xff]
    %v4296 = vld [vmem:[#allocation9 + $0x50] sm:$0xff]
    %v4297 = vld [vmem:[#allocation9 + $0x58] sm:$0xff]
    %v4298 = vld [vmem:[#allocation9 + $0x60] sm:$0xff]
    %v4299 = vld [vmem:[#allocation9 + $0x68] sm:$0xff]
    %v4300 = vld [vmem:[#allocation9 + $0x70] sm:$0xff]
    %v4301 = vld [vmem:[#allocation9 + $0x78] sm:$0xff]
    %v4302 = vld [vmem:[#allocation10] sm:$0x3]
    %v4304 = vlaneseq
    %v4305 = vshrl.u32 %v4304, 7
    %v4306 = vsub.s32 0, %v4305
    %v4307 = vrot.slane %v4302, %v4306
    %v4308 = vlaneseq
    %v4309 = vshrl.u32 %v4308, 7
    %v4310 = vsub.s32 1, %v4309
    %v4311 = vrot.slane %v4302, %v4310
    %v4330 = vunpack.c.l.b16 %v4286
    %v4331 = vunpack.c.h.b16 %v4286
    %v4332 = vunpack.c.l.b16 %v4287
    %v4333 = vunpack.c.h.b16 %v4287
    %v4334 = vunpack.c.l.b16 %v4288
    %v4335 = vunpack.c.h.b16 %v4288
    %v4336 = vunpack.c.l.b16 %v4289
    %v4337 = vunpack.c.h.b16 %v4289
    %v4338 = vunpack.c.l.b16 %v4290
    %v4339 = vunpack.c.h.b16 %v4290
    %v4340 = vunpack.c.l.b16 %v4291
    %v4341 = vunpack.c.h.b16 %v4291
    %v4342 = vunpack.c.l.b16 %v4292
    %v4343 = vunpack.c.h.b16 %v4292
    %v4344 = vunpack.c.l.b16 %v4293
    %v4345 = vunpack.c.h.b16 %v4293
    %v4346 = vunpack.c.l.b16 %v4294
    %v4347 = vunpack.c.h.b16 %v4294
    %v4348 = vunpack.c.l.b16 %v4295
    %v4349 = vunpack.c.h.b16 %v4295
    %v4350 = vunpack.c.l.b16 %v4296
    %v4351 = vunpack.c.h.b16 %v4296
    %v4352 = vunpack.c.l.b16 %v4297
    %v4353 = vunpack.c.h.b16 %v4297
    %v4354 = vunpack.c.l.b16 %v4298
    %v4355 = vunpack.c.h.b16 %v4298
    %v4356 = vunpack.c.l.b16 %v4299
    %v4357 = vunpack.c.h.b16 %v4299
    %v4358 = vunpack.c.l.b16 %v4300
    %v4359 = vunpack.c.h.b16 %v4300
    %v4360 = vunpack.c.l.b16 %v4301
    %v4361 = vunpack.c.h.b16 %v4301
    %v4362 = vpack.c.b16 %v4332, %v4330
    %v4363 = vpack.c.b16 %v4333, %v4331
    %v4364 = vpack.c.b16 %v4336, %v4334
    %v4365 = vpack.c.b16 %v4337, %v4335
    %v4366 = vpack.c.b16 %v4340, %v4338
    %v4367 = vpack.c.b16 %v4341, %v4339
    %v4368 = vpack.c.b16 %v4344, %v4342
    %v4369 = vpack.c.b16 %v4345, %v4343
    %v4370 = vpack.c.b16 %v4348, %v4346
    %v4371 = vpack.c.b16 %v4349, %v4347
    %v4372 = vpack.c.b16 %v4352, %v4350
    %v4373 = vpack.c.b16 %v4353, %v4351
    %v4374 = vpack.c.b16 %v4356, %v4354
    %v4375 = vpack.c.b16 %v4357, %v4355
    %v4376 = vpack.c.b16 %v4360, %v4358
    %v4377 = vpack.c.b16 %v4361, %v4359
    %4394 = vmatprep.subr.bf16.mxu0 %v4363
    %4395 = vmatpush1.bf16.msra.mxu0 %v4362
    %4396 = vmatprep.subr.bf16.mxu0 %v4365
    %4397 = vmatpush1.bf16.msra.mxu0 %v4364
    %4398 = vmatprep.subr.bf16.mxu0 %v4367
    %4399 = vmatpush1.bf16.msra.mxu0 %v4366
    %4400 = vmatprep.subr.bf16.mxu0 %v4369
    %4401 = vmatpush1.bf16.msra.mxu0 %v4368
    %4402 = vmatprep.subr.bf16.mxu0 %v4371
    %4403 = vmatpush1.bf16.msra.mxu0 %v4370
    %4404 = vmatprep.subr.bf16.mxu0 %v4373
    %4405 = vmatpush1.bf16.msra.mxu0 %v4372
    %4406 = vmatprep.subr.bf16.mxu0 %v4375
    %4407 = vmatpush1.bf16.msra.mxu0 %v4374
    %4408 = vmatprep.subr.bf16.mxu0 %v4377
    %4409 = vmatpush1.bf16.msra.mxu0 %v4376
    %4410 = vmatprep.subr.bf16.mxu0 0
    %4411 = vmatpush1.bf16.msra.mxu0 0
    %4412 = vmatprep.subr.bf16.mxu0 0
    %4413 = vmatpush1.bf16.msra.mxu0 0
    %4414 = vmatprep.subr.bf16.mxu0 0
    %4415 = vmatpush1.bf16.msra.mxu0 0
    %4416 = vmatprep.subr.bf16.mxu0 0
    %4417 = vmatpush1.bf16.msra.mxu0 0
    %4418 = vmatprep.subr.bf16.mxu0 0
    %4419 = vmatpush1.bf16.msra.mxu0 0
    %4420 = vmatprep.subr.bf16.mxu0 0
    %4421 = vmatpush1.bf16.msra.mxu0 0
    %4422 = vmatprep.subr.bf16.mxu0 0
    %4423 = vmatpush1.bf16.msra.mxu0 0
    %4424 = vmatprep.subr.bf16.mxu0 0
    %4425 = vmatpush1.bf16.msra.mxu0 0
    %4426 = vmatprep.mubr.bf16.mxu0 0
    %4427 = vmatmul.mubr.bf16.gmra.mrb[0].mxu0 %v4285
    %v4428 = vpop.f32.mrb[0].mxu0
    %v4429 = vadd.f32 %v4307, %v4428
    %v4430 = vpop.f32.mrb[0].mxu0
    %v4431 = vadd.f32 %v4311, %v4430
    %v4432 = vpop.f32.mrb[0].mxu0
    %v4433 = vpop.f32.mrb[0].mxu0
    %4434 = vdwg.mxu0
    %v4435 = vtanh.pop %v4429
    %v4436 = vtanh.pop %v4431
    %v4437 = vpack.c.bf16 %v4435, %v4435
    %v4438 = vpack.c.bf16 %v4436, %v4436
    %v4439 = vld [vmem:[#allocation12] sm:$0xf]
    %v4440 = vld [vmem:[#allocation12 + $0x4] sm:$0xf]
    %v4441 = vld [vmem:[#allocation12 + $0x8] sm:$0xf]
    %v4442 = vld [vmem:[#allocation12 + $0xc] sm:$0xf]
    %v4443 = vld [vmem:[#allocation12 + $0x10] sm:$0xf]
    %v4444 = vld [vmem:[#allocation12 + $0x14] sm:$0xf]
    %v4445 = vld [vmem:[#allocation12 + $0x18] sm:$0xf]
    %v4446 = vld [vmem:[#allocation12 + $0x1c] sm:$0xf]
    %v4447 = vld [vmem:[#allocation12 + $0x20] sm:$0xf]
    %v4448 = vld [vmem:[#allocation12 + $0x24] sm:$0xf]
    %v4449 = vld [vmem:[#allocation12 + $0x28] sm:$0xf]
    %v4450 = vld [vmem:[#allocation12 + $0x2c] sm:$0xf]
    %v4451 = vld [vmem:[#allocation12 + $0x30] sm:$0xf]
    %v4452 = vld [vmem:[#allocation12 + $0x34] sm:$0xf]
    %v4453 = vld [vmem:[#allocation12 + $0x38] sm:$0xf]
    %v4454 = vld [vmem:[#allocation12 + $0x3c] sm:$0xf]
    %v4455 = vld [vmem:[#allocation12 + $0x40] sm:$0xf]
    %v4456 = vld [vmem:[#allocation12 + $0x44] sm:$0xf]
    %v4457 = vld [vmem:[#allocation12 + $0x48] sm:$0xf]
    %v4458 = vld [vmem:[#allocation12 + $0x4c] sm:$0xf]
    %v4459 = vld [vmem:[#allocation12 + $0x50] sm:$0xf]
    %v4460 = vld [vmem:[#allocation12 + $0x54] sm:$0xf]
    %v4461 = vld [vmem:[#allocation12 + $0x58] sm:$0xf]
    %v4462 = vld [vmem:[#allocation12 + $0x5c] sm:$0xf]
    %v4463 = vld [vmem:[#allocation12 + $0x60] sm:$0xf]
    %v4464 = vld [vmem:[#allocation12 + $0x64] sm:$0xf]
    %v4465 = vld [vmem:[#allocation12 + $0x68] sm:$0xf]
    %v4466 = vld [vmem:[#allocation12 + $0x6c] sm:$0xf]
    %v4467 = vld [vmem:[#allocation12 + $0x70] sm:$0xf]
    %v4468 = vld [vmem:[#allocation12 + $0x74] sm:$0xf]
    %v4469 = vld [vmem:[#allocation12 + $0x78] sm:$0xf]
    %v4470 = vld [vmem:[#allocation12 + $0x7c] sm:$0xf]
    %v4471 = vld [vmem:[#allocation13] sm:$0x1]
    %v4473 = vlaneseq
    %v4474 = vshrl.u32 %v4473, 7
    %v4475 = vsub.s32 0, %v4474
    %v4476 = vrot.slane %v4471, %v4475
    %v4510 = vunpack.c.l.b16 %v4439
    %v4511 = vunpack.c.l.b16 %v4440
    %v4512 = vunpack.c.l.b16 %v4441
    %v4513 = vunpack.c.l.b16 %v4442
    %v4514 = vunpack.c.l.b16 %v4443
    %v4515 = vunpack.c.l.b16 %v4444
    %v4516 = vunpack.c.l.b16 %v4445
    %v4517 = vunpack.c.l.b16 %v4446
    %v4518 = vunpack.c.l.b16 %v4447
    %v4519 = vunpack.c.l.b16 %v4448
    %v4520 = vunpack.c.l.b16 %v4449
    %v4521 = vunpack.c.l.b16 %v4450
    %v4522 = vunpack.c.l.b16 %v4451
    %v4523 = vunpack.c.l.b16 %v4452
    %v4524 = vunpack.c.l.b16 %v4453
    %v4525 = vunpack.c.l.b16 %v4454
    %v4526 = vunpack.c.l.b16 %v4455
    %v4527 = vunpack.c.l.b16 %v4456
    %v4528 = vunpack.c.l.b16 %v4457
    %v4529 = vunpack.c.l.b16 %v4458
    %v4530 = vunpack.c.l.b16 %v4459
    %v4531 = vunpack.c.l.b16 %v4460
    %v4532 = vunpack.c.l.b16 %v4461
    %v4533 = vunpack.c.l.b16 %v4462
    %v4534 = vunpack.c.l.b16 %v4463
    %v4535 = vunpack.c.l.b16 %v4464
    %v4536 = vunpack.c.l.b16 %v4465
    %v4537 = vunpack.c.l.b16 %v4466
    %v4538 = vunpack.c.l.b16 %v4467
    %v4539 = vunpack.c.l.b16 %v4468
    %v4540 = vunpack.c.l.b16 %v4469
    %v4541 = vunpack.c.l.b16 %v4470
    %v4542 = vpack.c.b16 %v4511, %v4510
    %v4543 = vpack.c.b16 %v4513, %v4512
    %v4544 = vpack.c.b16 %v4515, %v4514
    %v4545 = vpack.c.b16 %v4517, %v4516
    %v4546 = vpack.c.b16 %v4519, %v4518
    %v4547 = vpack.c.b16 %v4521, %v4520
    %v4548 = vpack.c.b16 %v4523, %v4522
    %v4549 = vpack.c.b16 %v4525, %v4524
    %v4550 = vpack.c.b16 %v4527, %v4526
    %v4551 = vpack.c.b16 %v4529, %v4528
    %v4552 = vpack.c.b16 %v4531, %v4530
    %v4553 = vpack.c.b16 %v4533, %v4532
    %v4554 = vpack.c.b16 %v4535, %v4534
    %v4555 = vpack.c.b16 %v4537, %v4536
    %v4556 = vpack.c.b16 %v4539, %v4538
    %v4557 = vpack.c.b16 %v4541, %v4540
    %4574 = vmatprep.subr.bf16.mxu0 0
    %4575 = vmatpush1.bf16.msra.mxu0 %v4542
    %4576 = vmatprep.subr.bf16.mxu0 0
    %4577 = vmatpush1.bf16.msra.mxu0 %v4543
    %4578 = vmatprep.subr.bf16.mxu0 0
    %4579 = vmatpush1.bf16.msra.mxu0 %v4544
    %4580 = vmatprep.subr.bf16.mxu0 0
    %4581 = vmatpush1.bf16.msra.mxu0 %v4545
    %4582 = vmatprep.subr.bf16.mxu0 0
    %4583 = vmatpush1.bf16.msra.mxu0 %v4546
    %4584 = vmatprep.subr.bf16.mxu0 0
    %4585 = vmatpush1.bf16.msra.mxu0 %v4547
    %4586 = vmatprep.subr.bf16.mxu0 0
    %4587 = vmatpush1.bf16.msra.mxu0 %v4548
    %4588 = vmatprep.subr.bf16.mxu0 0
    %4589 = vmatpush1.bf16.msra.mxu0 %v4549
    %4590 = vmatprep.subr.bf16.mxu0 0
    %4591 = vmatpush1.bf16.msra.mxu0 %v4550
    %4592 = vmatprep.subr.bf16.mxu0 0
    %4593 = vmatpush1.bf16.msra.mxu0 %v4551
    %4594 = vmatprep.subr.bf16.mxu0 0
    %4595 = vmatpush1.bf16.msra.mxu0 %v4552
    %4596 = vmatprep.subr.bf16.mxu0 0
    %4597 = vmatpush1.bf16.msra.mxu0 %v4553
    %4598 = vmatprep.subr.bf16.mxu0 0
    %4599 = vmatpush1.bf16.msra.mxu0 %v4554
    %4600 = vmatprep.subr.bf16.mxu0 0
    %4601 = vmatpush1.bf16.msra.mxu0 %v4555
    %4602 = vmatprep.subr.bf16.mxu0 0
    %4603 = vmatpush1.bf16.msra.mxu0 %v4556
    %4604 = vmatprep.subr.bf16.mxu0 0
    %4605 = vmatpush1.bf16.msra.mxu0 %v4557
    %4606 = vmatprep.mubr.bf16.mxu0 %v4438
    %4607 = vmatmul.mubr.bf16.gmra.mrb[0].mxu0 %v4437
    %v4608 = vpop.f32.mrb[0].mxu0
    %v4609 = vadd.f32 %v4476, %v4608
    %v4610 = vpop.f32.mrb[0].mxu0
    %v4611 = vpop.f32.mrb[0].mxu0
    %v4612 = vpop.f32.mrb[0].mxu0
    %4613 = vdwg.mxu0
    %4614 = vst [vmem:[%s9] sm:$0xff] %v4609
    // Predicated region
    $region70: #{convolutional_nn_forward.1} parent=1 // pred_check
      _
    $region71: #{convolutional_nn_forward.1} parent=1 // pred_check_branch
      %4616 = sbr.rel (0) target = $region73
    $region72: #{convolutional_nn_forward.1} parent=1 // pred_region
      _
    $region73: #{convolutional_nn_forward.1} parent=1 // pred_fallthru
      _
    // Predicated region
    $region74: #{convolutional_nn_forward.1} parent=1 // pred_check
      _
    $region75: #{convolutional_nn_forward.1} parent=1 // pred_check_branch
      %4618 = sbr.rel (0) target = $region77
    $region76: #{convolutional_nn_forward.1} parent=1 // pred_region
      _
    $region77: #{convolutional_nn_forward.1} parent=1 // pred_fallthru
      _
    %4619 = vsyncpa [#allocation3], 1
    %4620 = vsyncpa [#allocation5], 1
    %4621 = vsyncpa [#allocation8], 1
    %4622 = vsyncpa [#allocation11], 1
    %4623 = vsyncpa [#allocation14], 1

</llo_original>
